<compile_context>
chip_gen: v6e
topology: v6e:2x2x1
jax: 0.10.0
libtpu: 0.0.40
codegen_flags: <defaults>
</compile_context>

<pallas_src>
import functools

import jax
import jax.numpy as jnp
from jax.experimental import pallas as pl
from jax.experimental.pallas import tpu as pltpu


# ----------------------------------------------------------------------------
# Pallas kernel: one grid step == Gb point groups (R = Gb*N rows).
# ----------------------------------------------------------------------------
def _encoder_kernel(x_ref,
                    w1r0_ref, w1r1_ref, w1r2_ref, b1_ref,
                    w2_ref, b2_ref,
                    w3g_ref, w3l_ref, b3_ref,
                    w4_ref, b4_ref,
                    out_ref, *, gb, n):
    f32 = jnp.float32
    bf16 = jnp.bfloat16

    # ---- first_conv[0]: Conv1d(3,128,1) + folded BN + ReLU, on the VPU ------
    # K=3 contraction as three broadcast FMAs ([R,1] x [1,128]); frees the MXU.
    # The column selects are cheap lane slices (XLU has slack here).
    x = x_ref[...]                                                 # [R,3]   f32
    h1 = (x[:, 0:1] * w1r0_ref[...]
          + x[:, 1:2] * w1r1_ref[...]
          + x[:, 2:3] * w1r2_ref[...]
          + b1_ref[...])
    h1 = jnp.maximum(h1, 0.0)                                      # [R,128] f32

    # ---- first_conv[3]: Conv1d(128,256,1) — bf16 MXU, f32 accumulate --------
    h = jnp.dot(h1.astype(bf16), w2_ref[...],
                preferred_element_type=f32) + b2_ref[...]          # [R,256] f32

    # ---- per-group global max over the N points of each group ---------------
    g = jnp.max(h.reshape(gb, n, 256), axis=1)                     # [Gb,256] f32

    # ---- second_conv[0]: Conv1d(512,512,1)+BN+ReLU with split weights -------
    # concat([g_bcast, h], ch) @ w3  ==  g @ w3[:256]  +  h @ w3[256:]
    gg = jnp.dot(g.astype(bf16), w3g_ref[...],
                 preferred_element_type=f32)                       # [Gb,512] f32
    hl = jnp.dot(h.astype(bf16), w3l_ref[...],
                 preferred_element_type=f32) + b3_ref[...]         # [R,512]  f32
    # TODO(synk): on v6e/v7x this add+ReLU epilogue could run in bf16 (bf16
    #             VPU) for a small win; kept f32 so the same kernel runs on v5e.
    h2 = jnp.maximum(hl.reshape(gb, n, 512) + gg[:, None, :], 0.0)
    h2 = h2.reshape(gb * n, 512)                                   # [R,512]  f32

    # ---- second_conv[3]: Conv1d(512,C,1), then max over the N points --------
    y = jnp.dot(h2.astype(bf16), w4_ref[...],
                preferred_element_type=f32) + b4_ref[...]          # [R,C]    f32
    out_ref[...] = jnp.max(y.reshape(gb, n, -1), axis=1)           # [Gb,C]   f32


# ----------------------------------------------------------------------------
# Blocking / VMEM helpers.
# ----------------------------------------------------------------------------
def _vmem_capacity_bytes():
    """Per-core VMEM capacity; conservative 64 MiB (v7x) if the query fails."""
    try:
        info = pltpu.get_tpu_info()
        for attr in ("vmem_capacity_bytes", "vmem_size_bytes", "vmem_bytes"):
            v = getattr(info, attr, None)
            if v:
                return int(v)
    except Exception:
        pass
    return 64 * 1024 * 1024


def _choose_blocking(bg, n, target_rows, min_grid=2):
    """Groups per grid step Gb: multiple of 8 (sublane-aligned output stores),
    Gb*N <= target_rows (VMEM budget), and — when the problem is big enough —
    at least `min_grid` grid steps so v7x's two TensorCores both get work.
    BG is padded up to a multiple of Gb (padded groups are sliced off)."""
    gb = max(8, (target_rows // max(n, 1)) // 8 * 8)
    while gb > 8 and -(-bg // gb) < min_grid:
        gb -= 8
    bg_padded = -(-bg // gb) * gb
    return gb, bg_padded


def _build_encoder_call(R, gb, n, C, num_steps, bg_padded, vmem_limit,
                        single_buffer_weights):
    # Constant-index weight/bias blocks stay VMEM-resident across grid steps;
    # single-buffering them (pl.Buffered(1)) frees ~0.85 MB of VMEM.
    extra = {"pipeline_mode": pl.Buffered(1)} if single_buffer_weights else {}
    full = lambda shape: pl.BlockSpec(shape, lambda i: (0,) * len(shape), **extra)

    kernel = functools.partial(_encoder_kernel, gb=gb, n=n)
    return pl.pallas_call(
        kernel,
        out_shape=jax.ShapeDtypeStruct((bg_padded, C), jnp.float32),
        grid=(num_steps,),
        in_specs=[
            pl.BlockSpec((R, 3), lambda i: (i, 0)),             # xyz rows
            full((1, 128)), full((1, 128)), full((1, 128)),     # w1 rows (BN-folded)
            full((1, 128)),                                     # b1
            full((128, 256)), full((1, 256)),                   # w2 (bf16), b2
            full((256, 512)), full((256, 512)),                 # w3 split (bf16, BN-folded)
            full((1, 512)),                                     # b3
            full((512, C)), full((1, C)),                       # w4 (bf16), b4
        ],
        out_specs=pl.BlockSpec((gb, C), lambda i: (i, 0)),
        compiler_params=pltpu.CompilerParams(
            dimension_semantics=("parallel",),
            vmem_limit_bytes=vmem_limit),
    )


def encoder_forward(point_groups, params, encoder_channel):
    """point_groups: [B, G, N, 3] float32  ->  [B, G, encoder_channel] float32."""
    B, G, N, three = point_groups.shape
    assert three == 3
    assert N % 8 == 0, "N must be a multiple of 8 (f32 sublane tile)"
    BG = B * G
    C = encoder_channel

    vmem_cap = _vmem_capacity_bytes()
    # Explicit scoped-VMEM limit: ~25% headroom below the per-core capacity.
    vmem_limit = min(vmem_cap * 3 // 4, 100 * 1024 * 1024)
    # Per-step row count: big enough to amortize the ~0.35us/step pipeline
    # overhead, small enough for the live set to fit the VMEM budget
    # (4096 rows on 128 MiB parts, 2048 on v7x's 64 MiB).
    target_rows = 4096 if vmem_cap >= 100 * 1024 * 1024 else 2048

    Gb, BG_padded = _choose_blocking(BG, N, target_rows)
    R = Gb * N
    num_steps = BG_padded // Gb

    x = point_groups.reshape(BG * N, 3).astype(jnp.float32)
    if BG_padded != BG:
        x = jnp.pad(x, ((0, (BG_padded - BG) * N), (0, 0)))

    args = (x,
            params["w1r0"], params["w1r1"], params["w1r2"], params["b1"],
            params["w2"], params["b2"],
            params["w3g"], params["w3l"], params["b3"],
            params["w4"], params["b4"])

    try:
        call = _build_encoder_call(R, Gb, N, C, num_steps, BG_padded,
                                   vmem_limit, single_buffer_weights=True)
        out = jax.block_until_ready(call(*args))
    except Exception:
        # pl.Buffered(1) not supported by this jax/Mosaic version: fall back to
        # default double-buffered weights (~0.85 MB more VMEM, otherwise identical).
        call = _build_encoder_call(R, Gb, N, C, num_steps, BG_padded,
                                   vmem_limit, single_buffer_weights=False)
        out = jax.block_until_ready(call(*args))

    return out[:BG].reshape(B, G, C)


# ----------------------------------------------------------------------------
# Deterministic parameter construction (PyTorch Conv1d weight [Cout, Cin, 1]
# is stored here pre-transposed as [Cin, Cout]); BN folded in; matmul weights
# stored in bf16, first-layer rows and all biases kept in f32.
# ----------------------------------------------------------------------------
def make_params(encoder_channel, key):
    ks = jax.random.split(key, 16)
    eps = 1e-5

    def conv_w(k, cin, cout, scale=0.1):
        return scale * jax.random.normal(k, (cin, cout), jnp.float32)

    # raw conv params
    w1 = conv_w(ks[0], 3, 128);      b1 = 0.1 * jax.random.normal(ks[1], (128,), jnp.float32)
    w2 = conv_w(ks[2], 128, 256);    b2 = 0.1 * jax.random.normal(ks[3], (256,), jnp.float32)
    w3 = conv_w(ks[4], 512, 512, 0.05); b3 = 0.1 * jax.random.normal(ks[5], (512,), jnp.float32)
    w4 = conv_w(ks[6], 512, encoder_channel, 0.05)
    b4 = 0.1 * jax.random.normal(ks[7], (encoder_channel,), jnp.float32)

    # BN1 / BN2 (eval-mode running stats)
    g1 = 1.0 + 0.1 * jax.random.normal(ks[8], (128,), jnp.float32)
    be1 = 0.1 * jax.random.normal(ks[9], (128,), jnp.float32)
    m1 = 0.1 * jax.random.normal(ks[10], (128,), jnp.float32)
    v1 = jnp.abs(jax.random.normal(ks[11], (128,), jnp.float32)) + 0.5

    g2 = 1.0 + 0.1 * jax.random.normal(ks[12], (512,), jnp.float32)
    be2 = 0.1 * jax.random.normal(ks[13], (512,), jnp.float32)
    m2 = 0.1 * jax.random.normal(ks[14], (512,), jnp.float32)
    v2 = jnp.abs(jax.random.normal(ks[15], (512,), jnp.float32)) + 0.5

    # fold BN into the preceding 1x1 conv:  bn(conv(x)) = x @ (W*s) + (b*s + beta - m*s)
    s1 = g1 / jnp.sqrt(v1 + eps)
    w1f = w1 * s1[None, :]
    b1f = b1 * s1 + be1 - m1 * s1

    s2 = g2 / jnp.sqrt(v2 + eps)
    w3f = w3 * s2[None, :]
    b3f = b3 * s2 + be2 - m2 * s2

    bf16 = jnp.bfloat16
    return {
        # first layer: per-coordinate rows, kept f32 (VPU path)
        "w1r0": w1f[0:1, :], "w1r1": w1f[1:2, :], "w1r2": w1f[2:3, :],
        "b1": b1f.reshape(1, 128),
        # MXU layers: bf16 weights, f32 biases
        "w2": w2.astype(bf16), "b2": b2.reshape(1, 256),
        "w3g": w3f[:256, :].astype(bf16),   # acts on the broadcast global feature
        "w3l": w3f[256:, :].astype(bf16),   # acts on the per-point feature
        "b3": b3f.reshape(1, 512),
        "w4": w4.astype(bf16), "b4": b4.reshape(1, encoder_channel),
    }


def encoder_reference(point_groups, params, encoder_channel):
    """Pure-JAX reference of the same (eval-mode-BN folded, bf16-matmul) forward."""
    B, G, N, _ = point_groups.shape
    x = point_groups.reshape(B * G, N, 3).astype(jnp.float32)
    bf16 = jnp.bfloat16
    f32 = jnp.float32

    h1 = jnp.maximum(
        x[..., 0:1] * params["w1r0"] + x[..., 1:2] * params["w1r1"]
        + x[..., 2:3] * params["w1r2"] + params["b1"], 0.0)                 # [BG,N,128]
    h = jnp.einsum("bnk,kc->bnc", h1.astype(bf16), params["w2"],
                   preferred_element_type=f32) + params["b2"]               # [BG,N,256]
    g = jnp.max(h, axis=1, keepdims=True)                                   # [BG,1,256]
    gg = jnp.einsum("bnk,kc->bnc", g.astype(bf16), params["w3g"],
                    preferred_element_type=f32)                             # [BG,1,512]
    hl = jnp.einsum("bnk,kc->bnc", h.astype(bf16), params["w3l"],
                    preferred_element_type=f32) + params["b3"]              # [BG,N,512]
    h2 = jnp.maximum(hl + gg, 0.0)
    y = jnp.einsum("bnk,kc->bnc", h2.astype(bf16), params["w4"],
                   preferred_element_type=f32) + params["b4"]               # [BG,N,C]
    return jnp.max(y, axis=1).reshape(B, G, encoder_channel)


if __name__ == "__main__":
    ENCODER_CHANNEL = 256
    key = jax.random.PRNGKey(0)
    k_x, k_p, k_x2 = jax.random.split(key, 3)
    params = make_params(ENCODER_CHANNEL, k_p)

    # Case 1: small canonical shape.
    B, G, N = 2, 4, 8
    point_groups = jax.random.normal(k_x, (B, G, N, 3), jnp.float32)
    out = jax.block_until_ready(encoder_forward(point_groups, params, ENCODER_CHANNEL))
    ref = encoder_reference(point_groups, params, ENCODER_CHANNEL)
    assert out.shape == (B, G, ENCODER_CHANNEL), out.shape
    err = float(jnp.max(jnp.abs(out - ref)))
    assert jnp.allclose(out, ref, atol=2e-2, rtol=2e-2), err

    # Case 2: BG not a multiple of 8 — exercises the sublane-safe group padding.
    B2, G2, N2 = 3, 4, 8
    pg2 = jax.random.normal(k_x2, (B2, G2, N2, 3), jnp.float32)
    out2 = jax.block_until_ready(encoder_forward(pg2, params, ENCODER_CHANNEL))
    ref2 = encoder_reference(pg2, params, ENCODER_CHANNEL)
    err2 = float(jnp.max(jnp.abs(out2 - ref2)))
    assert out2.shape == (B2, G2, ENCODER_CHANNEL), out2.shape
    assert jnp.allclose(out2, ref2, atol=2e-2, rtol=2e-2), err2

    print("KERNEL_OK")
</pallas_src>

<mosaic_0001>
module attributes {stable_mosaic.version = 11 : i64} {
  func.func @_encoder_kernel(%arg0: i32, %arg1: memref<64x3xf32, #tpu.memory_space<vmem>>, %arg2: memref<1x128xf32, #tpu.memory_space<vmem>>, %arg3: memref<1x128xf32, #tpu.memory_space<vmem>>, %arg4: memref<1x128xf32, #tpu.memory_space<vmem>>, %arg5: memref<1x128xf32, #tpu.memory_space<vmem>>, %arg6: memref<128x256xbf16, #tpu.memory_space<vmem>>, %arg7: memref<1x256xf32, #tpu.memory_space<vmem>>, %arg8: memref<256x512xbf16, #tpu.memory_space<vmem>>, %arg9: memref<256x512xbf16, #tpu.memory_space<vmem>>, %arg10: memref<1x512xf32, #tpu.memory_space<vmem>>, %arg11: memref<512x256xbf16, #tpu.memory_space<vmem>>, %arg12: memref<1x256xf32, #tpu.memory_space<vmem>>, %arg13: memref<8x256xf32, #tpu.memory_space<vmem>>) attributes {dimension_semantics = [#tpu.dimension_semantics<parallel>], iteration_bounds = array<i64: 1>, scalar_prefetch = 0 : i64, scratch_operands = 0 : i64, tpu.core_type = #tpu.core_type<tc>, window_params = [{transform_indices = @transform_0, window_bounds = array<i64: 64, 3>}, {pipeline_mode = #tpu.pipeline_mode<synchronous>, transform_indices = @transform_1, window_bounds = array<i64: 1, 128>}, {pipeline_mode = #tpu.pipeline_mode<synchronous>, transform_indices = @transform_2, window_bounds = array<i64: 1, 128>}, {pipeline_mode = #tpu.pipeline_mode<synchronous>, transform_indices = @transform_3, window_bounds = array<i64: 1, 128>}, {pipeline_mode = #tpu.pipeline_mode<synchronous>, transform_indices = @transform_4, window_bounds = array<i64: 1, 128>}, {pipeline_mode = #tpu.pipeline_mode<synchronous>, transform_indices = @transform_5, window_bounds = array<i64: 128, 256>}, {pipeline_mode = #tpu.pipeline_mode<synchronous>, transform_indices = @transform_6, window_bounds = array<i64: 1, 256>}, {pipeline_mode = #tpu.pipeline_mode<synchronous>, transform_indices = @transform_7, window_bounds = array<i64: 256, 512>}, {pipeline_mode = #tpu.pipeline_mode<synchronous>, transform_indices = @transform_8, window_bounds = array<i64: 256, 512>}, {pipeline_mode = #tpu.pipeline_mode<synchronous>, transform_indices = @transform_9, window_bounds = array<i64: 1, 512>}, {pipeline_mode = #tpu.pipeline_mode<synchronous>, transform_indices = @transform_10, window_bounds = array<i64: 512, 256>}, {pipeline_mode = #tpu.pipeline_mode<synchronous>, transform_indices = @transform_11, window_bounds = array<i64: 1, 256>}, {transform_indices = @transform_12, window_bounds = array<i64: 8, 256>}]} {
    %c0 = arith.constant 0 : index
    %c0_0 = arith.constant 0 : index
    %0 = vector.load %arg1[%c0, %c0_0] : memref<64x3xf32, #tpu.memory_space<vmem>>, vector<64x3xf32>
    %1 = vector.extract_strided_slice %0 {offsets = [0, 0], sizes = [64, 1], strides = [1, 1]} : vector<64x3xf32> to vector<64x1xf32>
    %c0_1 = arith.constant 0 : index
    %c0_2 = arith.constant 0 : index
    %2 = vector.load %arg2[%c0_1, %c0_2] : memref<1x128xf32, #tpu.memory_space<vmem>>, vector<1x128xf32>
    %3 = vector.broadcast %1 : vector<64x1xf32> to vector<64x128xf32>
    %4 = vector.broadcast %2 : vector<1x128xf32> to vector<64x128xf32>
    %5 = arith.mulf %3, %4 : vector<64x128xf32>
    %6 = vector.extract_strided_slice %0 {offsets = [0, 1], sizes = [64, 1], strides = [1, 1]} : vector<64x3xf32> to vector<64x1xf32>
    %c0_3 = arith.constant 0 : index
    %c0_4 = arith.constant 0 : index
    %7 = vector.load %arg3[%c0_3, %c0_4] : memref<1x128xf32, #tpu.memory_space<vmem>>, vector<1x128xf32>
    %8 = vector.broadcast %6 : vector<64x1xf32> to vector<64x128xf32>
    %9 = vector.broadcast %7 : vector<1x128xf32> to vector<64x128xf32>
    %10 = arith.mulf %8, %9 : vector<64x128xf32>
    %11 = arith.addf %5, %10 : vector<64x128xf32>
    %12 = vector.extract_strided_slice %0 {offsets = [0, 2], sizes = [64, 1], strides = [1, 1]} : vector<64x3xf32> to vector<64x1xf32>
    %c0_5 = arith.constant 0 : index
    %c0_6 = arith.constant 0 : index
    %13 = vector.load %arg4[%c0_5, %c0_6] : memref<1x128xf32, #tpu.memory_space<vmem>>, vector<1x128xf32>
    %14 = vector.broadcast %12 : vector<64x1xf32> to vector<64x128xf32>
    %15 = vector.broadcast %13 : vector<1x128xf32> to vector<64x128xf32>
    %16 = arith.mulf %14, %15 : vector<64x128xf32>
    %17 = arith.addf %11, %16 : vector<64x128xf32>
    %c0_7 = arith.constant 0 : index
    %c0_8 = arith.constant 0 : index
    %18 = vector.load %arg5[%c0_7, %c0_8] : memref<1x128xf32, #tpu.memory_space<vmem>>, vector<1x128xf32>
    %19 = vector.broadcast %18 : vector<1x128xf32> to vector<64x128xf32>
    %20 = arith.addf %17, %19 : vector<64x128xf32>
    %cst = arith.constant 0.000000e+00 : f32
    %21 = vector.broadcast %cst : f32 to vector<64x128xf32>
    %22 = arith.maximumf %20, %21 : vector<64x128xf32>
    %23 = arith.truncf %22 : vector<64x128xf32> to vector<64x128xbf16>
    %c0_9 = arith.constant 0 : index
    %c0_10 = arith.constant 0 : index
    %24 = vector.load %arg6[%c0_9, %c0_10] : memref<128x256xbf16, #tpu.memory_space<vmem>>, vector<128x256xbf16>
    %cst_11 = arith.constant dense<0.000000e+00> : vector<64x256xf32>
    %25 = tpu.matmul %23, %24, %cst_11 {dimension_numbers = #tpu.dot_dimension_numbers<[1], [0], [0], [1], [0, 0, 1, 1], [], []>} : vector<64x128xbf16>, vector<128x256xbf16>, vector<64x256xf32> -> vector<64x256xf32>
    %c0_12 = arith.constant 0 : index
    %c0_13 = arith.constant 0 : index
    %26 = vector.load %arg7[%c0_12, %c0_13] : memref<1x256xf32, #tpu.memory_space<vmem>>, vector<1x256xf32>
    %27 = vector.broadcast %26 : vector<1x256xf32> to vector<64x256xf32>
    %28 = arith.addf %25, %27 : vector<64x256xf32>
    %29 = vector.shape_cast %28 : vector<64x256xf32> to vector<8x8x256xf32>
    %cst_14 = arith.constant dense<0xFF800000> : vector<8x256xf32>
    %30 = vector.multi_reduction <maximumf>, %29, %cst_14 [1] : vector<8x8x256xf32> to vector<8x256xf32>
    %31 = arith.truncf %30 : vector<8x256xf32> to vector<8x256xbf16>
    %c0_15 = arith.constant 0 : index
    %c0_16 = arith.constant 0 : index
    %32 = vector.load %arg8[%c0_15, %c0_16] : memref<256x512xbf16, #tpu.memory_space<vmem>>, vector<256x512xbf16>
    %cst_17 = arith.constant dense<0.000000e+00> : vector<8x512xf32>
    %33 = tpu.matmul %31, %32, %cst_17 {dimension_numbers = #tpu.dot_dimension_numbers<[1], [0], [0], [1], [0, 0, 1, 1], [], []>} : vector<8x256xbf16>, vector<256x512xbf16>, vector<8x512xf32> -> vector<8x512xf32>
    %34 = arith.truncf %28 : vector<64x256xf32> to vector<64x256xbf16>
    %c0_18 = arith.constant 0 : index
    %c0_19 = arith.constant 0 : index
    %35 = vector.load %arg9[%c0_18, %c0_19] : memref<256x512xbf16, #tpu.memory_space<vmem>>, vector<256x512xbf16>
    %cst_20 = arith.constant dense<0.000000e+00> : vector<64x512xf32>
    %36 = tpu.matmul %34, %35, %cst_20 {dimension_numbers = #tpu.dot_dimension_numbers<[1], [0], [0], [1], [0, 0, 1, 1], [], []>} : vector<64x256xbf16>, vector<256x512xbf16>, vector<64x512xf32> -> vector<64x512xf32>
    %c0_21 = arith.constant 0 : index
    %c0_22 = arith.constant 0 : index
    %37 = vector.load %arg10[%c0_21, %c0_22] : memref<1x512xf32, #tpu.memory_space<vmem>>, vector<1x512xf32>
    %38 = vector.broadcast %37 : vector<1x512xf32> to vector<64x512xf32>
    %39 = arith.addf %36, %38 : vector<64x512xf32>
    %40 = vector.shape_cast %39 : vector<64x512xf32> to vector<8x8x512xf32>
    %41 = vector.shape_cast %33 : vector<8x512xf32> to vector<8x1x512xf32>
    %42 = vector.broadcast %41 : vector<8x1x512xf32> to vector<8x8x512xf32>
    %43 = arith.addf %40, %42 : vector<8x8x512xf32>
    %cst_23 = arith.constant 0.000000e+00 : f32
    %44 = vector.broadcast %cst_23 : f32 to vector<8x8x512xf32>
    %45 = arith.maximumf %43, %44 : vector<8x8x512xf32>
    %46 = vector.shape_cast %45 : vector<8x8x512xf32> to vector<64x512xf32>
    %47 = arith.truncf %46 : vector<64x512xf32> to vector<64x512xbf16>
    %c0_24 = arith.constant 0 : index
    %c0_25 = arith.constant 0 : index
    %48 = vector.load %arg11[%c0_24, %c0_25] : memref<512x256xbf16, #tpu.memory_space<vmem>>, vector<512x256xbf16>
    %cst_26 = arith.constant dense<0.000000e+00> : vector<64x256xf32>
    %49 = tpu.matmul %47, %48, %cst_26 {dimension_numbers = #tpu.dot_dimension_numbers<[1], [0], [0], [1], [0, 0, 1, 1], [], []>} : vector<64x512xbf16>, vector<512x256xbf16>, vector<64x256xf32> -> vector<64x256xf32>
    %c0_27 = arith.constant 0 : index
    %c0_28 = arith.constant 0 : index
    %50 = vector.load %arg12[%c0_27, %c0_28] : memref<1x256xf32, #tpu.memory_space<vmem>>, vector<1x256xf32>
    %51 = vector.broadcast %50 : vector<1x256xf32> to vector<64x256xf32>
    %52 = arith.addf %49, %51 : vector<64x256xf32>
    %53 = vector.shape_cast %52 : vector<64x256xf32> to vector<8x8x256xf32>
    %cst_29 = arith.constant dense<0xFF800000> : vector<8x256xf32>
    %54 = vector.multi_reduction <maximumf>, %53, %cst_29 [1] : vector<8x8x256xf32> to vector<8x256xf32>
    %c0_30 = arith.constant 0 : index
    %c0_31 = arith.constant 0 : index
    %55 = vector.load %arg13[%c0_30, %c0_31] : memref<8x256xf32, #tpu.memory_space<vmem>>, vector<8x256xf32>
    tpu.vector_store %arg13[%c0_30, %c0_31], %54 {strides = array<i32>} : memref<8x256xf32, #tpu.memory_space<vmem>>, vector<8x256xf32>,
    return
  }
  func.func @transform_0(%arg0: i32) -> (i32, i32) {
    %c0_i32 = arith.constant 0 : i32
    %c0_i32_0 = arith.constant 0 : i32
    return %arg0, %c0_i32 : i32, i32
  }
  func.func @transform_1(%arg0: i32) -> (i32, i32) {
    %c0_i32 = arith.constant 0 : i32
    %c0_i32_0 = arith.constant 0 : i32
    %c0_i32_1 = arith.constant 0 : i32
    return %c0_i32, %c0_i32_0 : i32, i32
  }
  func.func @transform_2(%arg0: i32) -> (i32, i32) {
    %c0_i32 = arith.constant 0 : i32
    %c0_i32_0 = arith.constant 0 : i32
    %c0_i32_1 = arith.constant 0 : i32
    return %c0_i32, %c0_i32_0 : i32, i32
  }
  func.func @transform_3(%arg0: i32) -> (i32, i32) {
    %c0_i32 = arith.constant 0 : i32
    %c0_i32_0 = arith.constant 0 : i32
    %c0_i32_1 = arith.constant 0 : i32
    return %c0_i32, %c0_i32_0 : i32, i32
  }
  func.func @transform_4(%arg0: i32) -> (i32, i32) {
    %c0_i32 = arith.constant 0 : i32
    %c0_i32_0 = arith.constant 0 : i32
    %c0_i32_1 = arith.constant 0 : i32
    return %c0_i32, %c0_i32_0 : i32, i32
  }
  func.func @transform_5(%arg0: i32) -> (i32, i32) {
    %c0_i32 = arith.constant 0 : i32
    %c0_i32_0 = arith.constant 0 : i32
    %c0_i32_1 = arith.constant 0 : i32
    return %c0_i32, %c0_i32_0 : i32, i32
  }
  func.func @transform_6(%arg0: i32) -> (i32, i32) {
    %c0_i32 = arith.constant 0 : i32
    %c0_i32_0 = arith.constant 0 : i32
    %c0_i32_1 = arith.constant 0 : i32
    return %c0_i32, %c0_i32_0 : i32, i32
  }
  func.func @transform_7(%arg0: i32) -> (i32, i32) {
    %c0_i32 = arith.constant 0 : i32
    %c0_i32_0 = arith.constant 0 : i32
    %c0_i32_1 = arith.constant 0 : i32
    return %c0_i32, %c0_i32_0 : i32, i32
  }
  func.func @transform_8(%arg0: i32) -> (i32, i32) {
    %c0_i32 = arith.constant 0 : i32
    %c0_i32_0 = arith.constant 0 : i32
    %c0_i32_1 = arith.constant 0 : i32
    return %c0_i32, %c0_i32_0 : i32, i32
  }
  func.func @transform_9(%arg0: i32) -> (i32, i32) {
    %c0_i32 = arith.constant 0 : i32
    %c0_i32_0 = arith.constant 0 : i32
    %c0_i32_1 = arith.constant 0 : i32
    return %c0_i32, %c0_i32_0 : i32, i32
  }
  func.func @transform_10(%arg0: i32) -> (i32, i32) {
    %c0_i32 = arith.constant 0 : i32
    %c0_i32_0 = arith.constant 0 : i32
    %c0_i32_1 = arith.constant 0 : i32
    return %c0_i32, %c0_i32_0 : i32, i32
  }
  func.func @transform_11(%arg0: i32) -> (i32, i32) {
    %c0_i32 = arith.constant 0 : i32
    %c0_i32_0 = arith.constant 0 : i32
    %c0_i32_1 = arith.constant 0 : i32
    return %c0_i32, %c0_i32_0 : i32, i32
  }
  func.func @transform_12(%arg0: i32) -> (i32, i32) {
    %c0_i32 = arith.constant 0 : i32
    %c0_i32_0 = arith.constant 0 : i32
    return %arg0, %c0_i32 : i32, i32
  }
}

module attributes {stable_mosaic.version = 11 : i64} {
  func.func @_encoder_kernel(%arg0: i32, %arg1: memref<64x3xf32, #tpu.memory_space<vmem>>, %arg2: memref<1x128xf32, #tpu.memory_space<vmem>>, %arg3: memref<1x128xf32, #tpu.memory_space<vmem>>, %arg4: memref<1x128xf32, #tpu.memory_space<vmem>>, %arg5: memref<1x128xf32, #tpu.memory_space<vmem>>, %arg6: memref<128x256xbf16, #tpu.memory_space<vmem>>, %arg7: memref<1x256xf32, #tpu.memory_space<vmem>>, %arg8: memref<256x512xbf16, #tpu.memory_space<vmem>>, %arg9: memref<256x512xbf16, #tpu.memory_space<vmem>>, %arg10: memref<1x512xf32, #tpu.memory_space<vmem>>, %arg11: memref<512x256xbf16, #tpu.memory_space<vmem>>, %arg12: memref<1x256xf32, #tpu.memory_space<vmem>>, %arg13: memref<8x256xf32, #tpu.memory_space<vmem>>) attributes {dimension_semantics = [#tpu.dimension_semantics<parallel>], iteration_bounds = array<i64: 1>, scalar_prefetch = 0 : i64, scratch_operands = 0 : i64, tpu.core_type = #tpu.core_type<tc>, window_params = [{transform_indices = @transform_0, window_bounds = array<i64: 64, 3>}, {pipeline_mode = #tpu.pipeline_mode<synchronous>, transform_indices = @transform_1, window_bounds = array<i64: 1, 128>}, {pipeline_mode = #tpu.pipeline_mode<synchronous>, transform_indices = @transform_2, window_bounds = array<i64: 1, 128>}, {pipeline_mode = #tpu.pipeline_mode<synchronous>, transform_indices = @transform_3, window_bounds = array<i64: 1, 128>}, {pipeline_mode = #tpu.pipeline_mode<synchronous>, transform_indices = @transform_4, window_bounds = array<i64: 1, 128>}, {pipeline_mode = #tpu.pipeline_mode<synchronous>, transform_indices = @transform_5, window_bounds = array<i64: 128, 256>}, {pipeline_mode = #tpu.pipeline_mode<synchronous>, transform_indices = @transform_6, window_bounds = array<i64: 1, 256>}, {pipeline_mode = #tpu.pipeline_mode<synchronous>, transform_indices = @transform_7, window_bounds = array<i64: 256, 512>}, {pipeline_mode = #tpu.pipeline_mode<synchronous>, transform_indices = @transform_8, window_bounds = array<i64: 256, 512>}, {pipeline_mode = #tpu.pipeline_mode<synchronous>, transform_indices = @transform_9, window_bounds = array<i64: 1, 512>}, {pipeline_mode = #tpu.pipeline_mode<synchronous>, transform_indices = @transform_10, window_bounds = array<i64: 512, 256>}, {pipeline_mode = #tpu.pipeline_mode<synchronous>, transform_indices = @transform_11, window_bounds = array<i64: 1, 256>}, {transform_indices = @transform_12, window_bounds = array<i64: 8, 256>}]} {
    %c0 = arith.constant 0 : index
    %c0_0 = arith.constant 0 : index
    %0 = vector.load %arg1[%c0, %c0_0] : memref<64x3xf32, #tpu.memory_space<vmem>>, vector<64x3xf32>
    %1 = vector.extract_strided_slice %0 {offsets = [0, 0], sizes = [64, 1], strides = [1, 1]} : vector<64x3xf32> to vector<64x1xf32>
    %c0_1 = arith.constant 0 : index
    %c0_2 = arith.constant 0 : index
    %2 = vector.load %arg2[%c0_1, %c0_2] : memref<1x128xf32, #tpu.memory_space<vmem>>, vector<1x128xf32>
    %3 = vector.broadcast %1 : vector<64x1xf32> to vector<64x128xf32>
    %4 = vector.broadcast %2 : vector<1x128xf32> to vector<64x128xf32>
    %5 = arith.mulf %3, %4 : vector<64x128xf32>
    %6 = vector.extract_strided_slice %0 {offsets = [0, 1], sizes = [64, 1], strides = [1, 1]} : vector<64x3xf32> to vector<64x1xf32>
    %c0_3 = arith.constant 0 : index
    %c0_4 = arith.constant 0 : index
    %7 = vector.load %arg3[%c0_3, %c0_4] : memref<1x128xf32, #tpu.memory_space<vmem>>, vector<1x128xf32>
    %8 = vector.broadcast %6 : vector<64x1xf32> to vector<64x128xf32>
    %9 = vector.broadcast %7 : vector<1x128xf32> to vector<64x128xf32>
    %10 = arith.mulf %8, %9 : vector<64x128xf32>
    %11 = arith.addf %5, %10 : vector<64x128xf32>
    %12 = vector.extract_strided_slice %0 {offsets = [0, 2], sizes = [64, 1], strides = [1, 1]} : vector<64x3xf32> to vector<64x1xf32>
    %c0_5 = arith.constant 0 : index
    %c0_6 = arith.constant 0 : index
    %13 = vector.load %arg4[%c0_5, %c0_6] : memref<1x128xf32, #tpu.memory_space<vmem>>, vector<1x128xf32>
    %14 = vector.broadcast %12 : vector<64x1xf32> to vector<64x128xf32>
    %15 = vector.broadcast %13 : vector<1x128xf32> to vector<64x128xf32>
    %16 = arith.mulf %14, %15 : vector<64x128xf32>
    %17 = arith.addf %11, %16 : vector<64x128xf32>
    %c0_7 = arith.constant 0 : index
    %c0_8 = arith.constant 0 : index
    %18 = vector.load %arg5[%c0_7, %c0_8] : memref<1x128xf32, #tpu.memory_space<vmem>>, vector<1x128xf32>
    %19 = vector.broadcast %18 : vector<1x128xf32> to vector<64x128xf32>
    %20 = arith.addf %17, %19 : vector<64x128xf32>
    %cst = arith.constant 0.000000e+00 : f32
    %21 = vector.broadcast %cst : f32 to vector<64x128xf32>
    %22 = arith.maximumf %20, %21 : vector<64x128xf32>
    %23 = arith.truncf %22 : vector<64x128xf32> to vector<64x128xbf16>
    %c0_9 = arith.constant 0 : index
    %c0_10 = arith.constant 0 : index
    %24 = vector.load %arg6[%c0_9, %c0_10] : memref<128x256xbf16, #tpu.memory_space<vmem>>, vector<128x256xbf16>
    %cst_11 = arith.constant dense<0.000000e+00> : vector<64x256xf32>
    %25 = tpu.matmul %23, %24, %cst_11 {dimension_numbers = #tpu.dot_dimension_numbers<[1], [0], [0], [1], [0, 0, 1, 1], [], []>} : vector<64x128xbf16>, vector<128x256xbf16>, vector<64x256xf32> -> vector<64x256xf32>
    %c0_12 = arith.constant 0 : index
    %c0_13 = arith.constant 0 : index
    %26 = vector.load %arg7[%c0_12, %c0_13] : memref<1x256xf32, #tpu.memory_space<vmem>>, vector<1x256xf32>
    %27 = vector.broadcast %26 : vector<1x256xf32> to vector<64x256xf32>
    %28 = arith.addf %25, %27 : vector<64x256xf32>
    %29 = vector.shape_cast %28 : vector<64x256xf32> to vector<8x8x256xf32>
    %cst_14 = arith.constant dense<0xFF800000> : vector<8x256xf32>
    %30 = vector.multi_reduction <maximumf>, %29, %cst_14 [1] : vector<8x8x256xf32> to vector<8x256xf32>
    %31 = arith.truncf %30 : vector<8x256xf32> to vector<8x256xbf16>
    %c0_15 = arith.constant 0 : index
    %c0_16 = arith.constant 0 : index
    %32 = vector.load %arg8[%c0_15, %c0_16] : memref<256x512xbf16, #tpu.memory_space<vmem>>, vector<256x512xbf16>
    %cst_17 = arith.constant dense<0.000000e+00> : vector<8x512xf32>
    %33 = tpu.matmul %31, %32, %cst_17 {dimension_numbers = #tpu.dot_dimension_numbers<[1], [0], [0], [1], [0, 0, 1, 1], [], []>} : vector<8x256xbf16>, vector<256x512xbf16>, vector<8x512xf32> -> vector<8x512xf32>
    %34 = arith.truncf %28 : vector<64x256xf32> to vector<64x256xbf16>
    %c0_18 = arith.constant 0 : index
    %c0_19 = arith.constant 0 : index
    %35 = vector.load %arg9[%c0_18, %c0_19] : memref<256x512xbf16, #tpu.memory_space<vmem>>, vector<256x512xbf16>
    %cst_20 = arith.constant dense<0.000000e+00> : vector<64x512xf32>
    %36 = tpu.matmul %34, %35, %cst_20 {dimension_numbers = #tpu.dot_dimension_numbers<[1], [0], [0], [1], [0, 0, 1, 1], [], []>} : vector<64x256xbf16>, vector<256x512xbf16>, vector<64x512xf32> -> vector<64x512xf32>
    %c0_21 = arith.constant 0 : index
    %c0_22 = arith.constant 0 : index
    %37 = vector.load %arg10[%c0_21, %c0_22] : memref<1x512xf32, #tpu.memory_space<vmem>>, vector<1x512xf32>
    %38 = vector.broadcast %37 : vector<1x512xf32> to vector<64x512xf32>
    %39 = arith.addf %36, %38 : vector<64x512xf32>
    %40 = vector.shape_cast %39 : vector<64x512xf32> to vector<8x8x512xf32>
    %41 = vector.shape_cast %33 : vector<8x512xf32> to vector<8x1x512xf32>
    %42 = vector.broadcast %41 : vector<8x1x512xf32> to vector<8x8x512xf32>
    %43 = arith.addf %40, %42 : vector<8x8x512xf32>
    %cst_23 = arith.constant 0.000000e+00 : f32
    %44 = vector.broadcast %cst_23 : f32 to vector<8x8x512xf32>
    %45 = arith.maximumf %43, %44 : vector<8x8x512xf32>
    %46 = vector.shape_cast %45 : vector<8x8x512xf32> to vector<64x512xf32>
    %47 = arith.truncf %46 : vector<64x512xf32> to vector<64x512xbf16>
    %c0_24 = arith.constant 0 : index
    %c0_25 = arith.constant 0 : index
    %48 = vector.load %arg11[%c0_24, %c0_25] : memref<512x256xbf16, #tpu.memory_space<vmem>>, vector<512x256xbf16>
    %cst_26 = arith.constant dense<0.000000e+00> : vector<64x256xf32>
    %49 = tpu.matmul %47, %48, %cst_26 {dimension_numbers = #tpu.dot_dimension_numbers<[1], [0], [0], [1], [0, 0, 1, 1], [], []>} : vector<64x512xbf16>, vector<512x256xbf16>, vector<64x256xf32> -> vector<64x256xf32>
    %c0_27 = arith.constant 0 : index
    %c0_28 = arith.constant 0 : index
    %50 = vector.load %arg12[%c0_27, %c0_28] : memref<1x256xf32, #tpu.memory_space<vmem>>, vector<1x256xf32>
    %51 = vector.broadcast %50 : vector<1x256xf32> to vector<64x256xf32>
    %52 = arith.addf %49, %51 : vector<64x256xf32>
    %53 = vector.shape_cast %52 : vector<64x256xf32> to vector<8x8x256xf32>
    %cst_29 = arith.constant dense<0xFF800000> : vector<8x256xf32>
    %54 = vector.multi_reduction <maximumf>, %53, %cst_29 [1] : vector<8x8x256xf32> to vector<8x256xf32>
    %c0_30 = arith.constant 0 : index
    %c0_31 = arith.constant 0 : index
    %55 = vector.load %arg13[%c0_30, %c0_31] : memref<8x256xf32, #tpu.memory_space<vmem>>, vector<8x256xf32>
    tpu.vector_store %arg13[%c0_30, %c0_31], %54 {strides = array<i32>} : memref<8x256xf32, #tpu.memory_space<vmem>>, vector<8x256xf32>,
    return
  }
  func.func @transform_0(%arg0: i32) -> (i32, i32) {
    %c0_i32 = arith.constant 0 : i32
    %c0_i32_0 = arith.constant 0 : i32
    return %arg0, %c0_i32 : i32, i32
  }
  func.func @transform_1(%arg0: i32) -> (i32, i32) {
    %c0_i32 = arith.constant 0 : i32
    %c0_i32_0 = arith.constant 0 : i32
    %c0_i32_1 = arith.constant 0 : i32
    return %c0_i32, %c0_i32_0 : i32, i32
  }
  func.func @transform_2(%arg0: i32) -> (i32, i32) {
    %c0_i32 = arith.constant 0 : i32
    %c0_i32_0 = arith.constant 0 : i32
    %c0_i32_1 = arith.constant 0 : i32
    return %c0_i32, %c0_i32_0 : i32, i32
  }
  func.func @transform_3(%arg0: i32) -> (i32, i32) {
    %c0_i32 = arith.constant 0 : i32
    %c0_i32_0 = arith.constant 0 : i32
    %c0_i32_1 = arith.constant 0 : i32
    return %c0_i32, %c0_i32_0 : i32, i32
  }
  func.func @transform_4(%arg0: i32) -> (i32, i32) {
    %c0_i32 = arith.constant 0 : i32
    %c0_i32_0 = arith.constant 0 : i32
    %c0_i32_1 = arith.constant 0 : i32
    return %c0_i32, %c0_i32_0 : i32, i32
  }
  func.func @transform_5(%arg0: i32) -> (i32, i32) {
    %c0_i32 = arith.constant 0 : i32
    %c0_i32_0 = arith.constant 0 : i32
    %c0_i32_1 = arith.constant 0 : i32
    return %c0_i32, %c0_i32_0 : i32, i32
  }
  func.func @transform_6(%arg0: i32) -> (i32, i32) {
    %c0_i32 = arith.constant 0 : i32
    %c0_i32_0 = arith.constant 0 : i32
    %c0_i32_1 = arith.constant 0 : i32
    return %c0_i32, %c0_i32_0 : i32, i32
  }
  func.func @transform_7(%arg0: i32) -> (i32, i32) {
    %c0_i32 = arith.constant 0 : i32
    %c0_i32_0 = arith.constant 0 : i32
    %c0_i32_1 = arith.constant 0 : i32
    return %c0_i32, %c0_i32_0 : i32, i32
  }
  func.func @transform_8(%arg0: i32) -> (i32, i32) {
    %c0_i32 = arith.constant 0 : i32
    %c0_i32_0 = arith.constant 0 : i32
    %c0_i32_1 = arith.constant 0 : i32
    return %c0_i32, %c0_i32_0 : i32, i32
  }
  func.func @transform_9(%arg0: i32) -> (i32, i32) {
    %c0_i32 = arith.constant 0 : i32
    %c0_i32_0 = arith.constant 0 : i32
    %c0_i32_1 = arith.constant 0 : i32
    return %c0_i32, %c0_i32_0 : i32, i32
  }
  func.func @transform_10(%arg0: i32) -> (i32, i32) {
    %c0_i32 = arith.constant 0 : i32
    %c0_i32_0 = arith.constant 0 : i32
    %c0_i32_1 = arith.constant 0 : i32
    return %c0_i32, %c0_i32_0 : i32, i32
  }
  func.func @transform_11(%arg0: i32) -> (i32, i32) {
    %c0_i32 = arith.constant 0 : i32
    %c0_i32_0 = arith.constant 0 : i32
    %c0_i32_1 = arith.constant 0 : i32
    return %c0_i32, %c0_i32_0 : i32, i32
  }
  func.func @transform_12(%arg0: i32) -> (i32, i32) {
    %c0_i32 = arith.constant 0 : i32
    %c0_i32_0 = arith.constant 0 : i32
    return %arg0, %c0_i32 : i32, i32
  }
}

</mosaic_0001>

<llo_original>
// kernel: tpu_custom_call.1
$region0: #{tpu_custom_call.1}
  #allocation0 [shape = 'u32[]', space=smem, size = 0x4, offset = 0x4, fixed_abs, tag = 'smem constant byte address 0x4 - core index']
  #allocation1 [shape = 'u32[144,128]{1,0:T(1,128)}', space=vmem, size = 0x12000, scoped, tag = 'internal scratch']
  %s0 = inlined_call_operand.vmem [shape: f32[64,3], index: 0, kind: input, shape index: {}]
  %s1 = inlined_call_operand.vmem [shape: f32[1,128], index: 1, kind: input, shape index: {}]
  %s2 = inlined_call_operand.vmem [shape: f32[1,128], index: 2, kind: input, shape index: {}]
  %s3 = inlined_call_operand.vmem [shape: f32[1,128], index: 3, kind: input, shape index: {}]
  %s4 = inlined_call_operand.vmem [shape: f32[1,128], index: 4, kind: input, shape index: {}]
  %s5 = inlined_call_operand.hbm [shape: bf16[128,256], index: 5, kind: input, shape index: {}]
  %s6 = inlined_call_operand.vmem [shape: f32[1,256], index: 6, kind: input, shape index: {}]
  %s7 = inlined_call_operand.hbm [shape: bf16[256,512], index: 7, kind: input, shape index: {}]
  %s8 = inlined_call_operand.hbm [shape: bf16[256,512], index: 8, kind: input, shape index: {}]
  %s9 = inlined_call_operand.vmem [shape: f32[1,512], index: 9, kind: input, shape index: {}]
  %s10 = inlined_call_operand.hbm [shape: bf16[512,256], index: 10, kind: input, shape index: {}]
  %s11 = inlined_call_operand.vmem [shape: f32[1,256], index: 11, kind: input, shape index: {}]
  %s12 = inlined_call_operand.hbm [shape: f32[8,256], index: 12, kind: output, shape index: {}]
  %s13 = sld [smem:[#allocation0]]
  $region74: #{tpu_custom_call.1} parent=0
    _
  %s15 = ssub.s32 1, %s13
  %s16 = scalar_select 0, %s15, %s13
  $region1: #{tpu_custom_call.1} parent=0
    #allocation2 [shape = 'u8[65536]{0}', space=vmem, size = 0x10000, scoped, tag = 'input window, operand 5, single buffered']
    #allocation3 [shape = 's32[1]{0}', space=sflag, size = 0x4, scoped, tag = 'scoped memory for tpu_custom_call.1']
    #allocation4 [shape = 's32[1]{0}', space=sflag, size = 0x4, scoped, tag = 'scoped memory for tpu_custom_call.1']
    #allocation5 [shape = 'u8[262144]{0}', space=vmem, size = 0x40000, scoped, tag = 'input window, operand 7, single buffered']
    #allocation6 [shape = 's32[1]{0}', space=sflag, size = 0x4, scoped, tag = 'scoped memory for tpu_custom_call.1']
    #allocation7 [shape = 'u8[262144]{0}', space=vmem, size = 0x40000, scoped, tag = 'input window, operand 8, single buffered']
    #allocation8 [shape = 'u8[262144]{0}', space=vmem, size = 0x40000, scoped, tag = 'input window, operand 10, single buffered']
    #allocation9 [shape = 's32[1]{0}', space=sflag, size = 0x4, scoped, tag = 'scoped memory for tpu_custom_call.1']
    #allocation10 [shape = 'u8[8192]{0}', space=vmem, size = 0x2000, scoped, tag = 'output window, operand 0, single buffered']
    %17 = vsyncpa [#allocation3], 0
    %18 = vsyncpa [#allocation6], 0
    %19 = vsyncpa [#allocation9], 0
    %20 = vsyncpa [#allocation4], 0
    // Predicated region
    $region2: #{tpu_custom_call.1} parent=1 // pred_check
      _
    $region3: #{tpu_custom_call.1} parent=1 // pred_check_branch
      %22 = sbr.rel (0) target = $region5
    $region4: #{tpu_custom_call.1} parent=1 // pred_region
      _
    $region5: #{tpu_custom_call.1} parent=1 // pred_fallthru
      _
    // Predicated region
    $region6: #{tpu_custom_call.1} parent=1 // pred_check
      _
    $region7: #{tpu_custom_call.1} parent=1 // pred_check_branch
      %24 = sbr.rel (0) target = $region9
    $region8: #{tpu_custom_call.1} parent=1 // pred_region
      _
    $region9: #{tpu_custom_call.1} parent=1 // pred_fallthru
      _
    // Predicated region
    $region10: #{tpu_custom_call.1} parent=1 // pred_check
      _
    $region11: #{tpu_custom_call.1} parent=1 // pred_check_branch
      %26 = sbr.rel (0) target = $region13
    $region12: #{tpu_custom_call.1} parent=1 // pred_region
      _
    $region13: #{tpu_custom_call.1} parent=1 // pred_fallthru
      _
    // Predicated region
    $region14: #{tpu_custom_call.1} parent=1 // pred_check
      _
    $region15: #{tpu_custom_call.1} parent=1 // pred_check_branch
      %28 = sbr.rel (0) target = $region17
    $region16: #{tpu_custom_call.1} parent=1 // pred_region
      _
    $region17: #{tpu_custom_call.1} parent=1 // pred_fallthru
      _
    // Predicated region
    $region18: #{tpu_custom_call.1} parent=1 // pred_check
      _
    $region19: #{tpu_custom_call.1} parent=1 // pred_check_branch
      %30 = sbr.rel (0) target = $region21
    $region20: #{tpu_custom_call.1} parent=1 // pred_region
      _
    $region21: #{tpu_custom_call.1} parent=1 // pred_fallthru
      _
    // Predicated region
    $region22: #{tpu_custom_call.1} parent=1 // pred_check
      _
    $region23: #{tpu_custom_call.1} parent=1 // pred_check_branch
      %32 = sbr.rel (0) target = $region25
    $region24: #{tpu_custom_call.1} parent=1 // pred_region
      %s34 = ssub.s32 2048, 2048
      %35 = vsyncadd [#allocation3], %s34
      %s36 = sshll.u32 [#allocation2], 4
      %s37 = int_to_ptr.vmem [resolvable:$true] %s36
      %42 = dma.hbm_to_vmem [thread:$0]  %s5, 2048, %s37, [#allocation3], 128, 128, 8
    $region25: #{tpu_custom_call.1} parent=1 // pred_fallthru
      _
    // Predicated region
    $region26: #{tpu_custom_call.1} parent=1 // pred_check
      _
    $region27: #{tpu_custom_call.1} parent=1 // pred_check_branch
      %44 = sbr.rel (0) target = $region29
    $region28: #{tpu_custom_call.1} parent=1 // pred_region
      _
    $region29: #{tpu_custom_call.1} parent=1 // pred_fallthru
      _
    // Predicated region
    $region30: #{tpu_custom_call.1} parent=1 // pred_check
      _
    $region31: #{tpu_custom_call.1} parent=1 // pred_check_branch
      %46 = sbr.rel (0) target = $region33
    $region32: #{tpu_custom_call.1} parent=1 // pred_region
      %s48 = ssub.s32 8192, 8192
      %49 = vsyncadd [#allocation6], %s48
      %s50 = sshll.u32 [#allocation5], 4
      %s51 = int_to_ptr.vmem [resolvable:$true] %s50
      %56 = dma.hbm_to_vmem [thread:$0]  %s7, 8192, %s51, [#allocation6], 256, 256, 16
    $region33: #{tpu_custom_call.1} parent=1 // pred_fallthru
      _
    // Predicated region
    $region34: #{tpu_custom_call.1} parent=1 // pred_check
      _
    $region35: #{tpu_custom_call.1} parent=1 // pred_check_branch
      %58 = sbr.rel (0) target = $region37
    $region36: #{tpu_custom_call.1} parent=1 // pred_region
      %s60 = ssub.s32 8192, 8192
      %61 = vsyncadd [#allocation6], %s60
      %s62 = sshll.u32 [#allocation7], 4
      %s63 = int_to_ptr.vmem [resolvable:$true] %s62
      %68 = dma.hbm_to_vmem [thread:$0]  %s8, 8192, %s63, [#allocation6], 256, 256, 16
    $region37: #{tpu_custom_call.1} parent=1 // pred_fallthru
      _
    // Predicated region
    $region38: #{tpu_custom_call.1} parent=1 // pred_check
      _
    $region39: #{tpu_custom_call.1} parent=1 // pred_check_branch
      %70 = sbr.rel (0) target = $region41
    $region40: #{tpu_custom_call.1} parent=1 // pred_region
      _
    $region41: #{tpu_custom_call.1} parent=1 // pred_fallthru
      _
    // Predicated region
    $region42: #{tpu_custom_call.1} parent=1 // pred_check
      _
    $region43: #{tpu_custom_call.1} parent=1 // pred_check_branch
      %72 = sbr.rel (0) target = $region45
    $region44: #{tpu_custom_call.1} parent=1 // pred_region
      %s74 = ssub.s32 8192, 8192
      %75 = vsyncadd [#allocation9], %s74
      %s76 = sshll.u32 [#allocation8], 4
      %s77 = int_to_ptr.vmem [resolvable:$true] %s76
      %82 = dma.hbm_to_vmem [thread:$0]  %s10, 8192, %s77, [#allocation9], 128, 128, 8
    $region45: #{tpu_custom_call.1} parent=1 // pred_fallthru
      _
    // Predicated region
    $region46: #{tpu_custom_call.1} parent=1 // pred_check
      _
    $region47: #{tpu_custom_call.1} parent=1 // pred_check_branch
      %84 = sbr.rel (0) target = $region49
    $region48: #{tpu_custom_call.1} parent=1 // pred_region
      _
    $region49: #{tpu_custom_call.1} parent=1 // pred_fallthru
      _
    // Predicated region
    $region50: #{tpu_custom_call.1} parent=1 // pred_check
      _
    $region51: #{tpu_custom_call.1} parent=1 // pred_check_branch
      %86 = sbr.rel (0) target = $region53
    $region52: #{tpu_custom_call.1} parent=1 // pred_region
      %87 = dma.done [#allocation3], 2048
    $region53: #{tpu_custom_call.1} parent=1 // pred_fallthru
      _
    // Predicated region
    $region54: #{tpu_custom_call.1} parent=1 // pred_check
      _
    $region55: #{tpu_custom_call.1} parent=1 // pred_check_branch
      %89 = sbr.rel (0) target = $region57
    $region56: #{tpu_custom_call.1} parent=1 // pred_region
      %90 = dma.done [#allocation6], 8192
    $region57: #{tpu_custom_call.1} parent=1 // pred_fallthru
      _
    // Predicated region
    $region58: #{tpu_custom_call.1} parent=1 // pred_check
      _
    $region59: #{tpu_custom_call.1} parent=1 // pred_check_branch
      %92 = sbr.rel (0) target = $region61
    $region60: #{tpu_custom_call.1} parent=1 // pred_region
      %93 = dma.done [#allocation6], 8192
    $region61: #{tpu_custom_call.1} parent=1 // pred_fallthru
      _
    // Predicated region
    $region62: #{tpu_custom_call.1} parent=1 // pred_check
      _
    $region63: #{tpu_custom_call.1} parent=1 // pred_check_branch
      %95 = sbr.rel (0) target = $region65
    $region64: #{tpu_custom_call.1} parent=1 // pred_region
      %96 = dma.done [#allocation9], 8192
    $region65: #{tpu_custom_call.1} parent=1 // pred_fallthru
      _
    %v98 = vld [vmem:[%s0] sm:$0xff]
    %v99 = vld [vmem:[%s0 + $0x8] sm:$0xff]
    %v100 = vld [vmem:[%s0 + $0x10] sm:$0xff]
    %v101 = vld [vmem:[%s0 + $0x18] sm:$0xff]
    %v102 = vld [vmem:[%s0 + $0x20] sm:$0xff]
    %v103 = vld [vmem:[%s0 + $0x28] sm:$0xff]
    %v104 = vld [vmem:[%s0 + $0x30] sm:$0xff]
    %v105 = vld [vmem:[%s0 + $0x38] sm:$0xff]
    %v106 = vld [vmem:[%s1] sm:$0x1]
    %108 = vset.pattern.permute.xlu0 0
    %109 = vperm.xlu0 %108, %v98
    %v110 = vpop.permute.xlu0 %109
    %113 = vset.pattern.permute.xlu0 0
    %114 = vperm.xlu0 %113, %v99
    %v115 = vpop.permute.xlu0 %114
    %118 = vset.pattern.permute.xlu0 0
    %119 = vperm.xlu0 %118, %v100
    %v120 = vpop.permute.xlu0 %119
    %123 = vset.pattern.permute.xlu0 0
    %124 = vperm.xlu0 %123, %v101
    %v125 = vpop.permute.xlu0 %124
    %128 = vset.pattern.permute.xlu0 0
    %129 = vperm.xlu0 %128, %v102
    %v130 = vpop.permute.xlu0 %129
    %133 = vset.pattern.permute.xlu0 0
    %134 = vperm.xlu0 %133, %v103
    %v135 = vpop.permute.xlu0 %134
    %138 = vset.pattern.permute.xlu0 0
    %139 = vperm.xlu0 %138, %v104
    %v140 = vpop.permute.xlu0 %139
    %143 = vset.pattern.permute.xlu0 0
    %144 = vperm.xlu0 %143, %v105
    %v145 = vpop.permute.xlu0 %144
    %v148 = vlaneseq
    %v149 = vshrl.u32 %v148, 7
    %v150 = vsub.s32 0, %v149
    %v151 = vrot.slane %v106, %v150
    %v153 = vmul.f32 %v110, %v151
    %v154 = vmul.f32 %v115, %v151
    %v155 = vmul.f32 %v120, %v151
    %v156 = vmul.f32 %v125, %v151
    %v157 = vmul.f32 %v130, %v151
    %v158 = vmul.f32 %v135, %v151
    %v159 = vmul.f32 %v140, %v151
    %v160 = vmul.f32 %v145, %v151
    %v161 = vld [vmem:[%s2] sm:$0x1]
    %162 = vset.pattern.permute.xlu0 1
    %163 = vperm.xlu0 %162, %v98
    %v164 = vpop.permute.xlu0 %163
    %166 = vset.pattern.permute.xlu0 1
    %167 = vperm.xlu0 %166, %v99
    %v168 = vpop.permute.xlu0 %167
    %170 = vset.pattern.permute.xlu0 1
    %171 = vperm.xlu0 %170, %v100
    %v172 = vpop.permute.xlu0 %171
    %174 = vset.pattern.permute.xlu0 1
    %175 = vperm.xlu0 %174, %v101
    %v176 = vpop.permute.xlu0 %175
    %178 = vset.pattern.permute.xlu0 1
    %179 = vperm.xlu0 %178, %v102
    %v180 = vpop.permute.xlu0 %179
    %182 = vset.pattern.permute.xlu0 1
    %183 = vperm.xlu0 %182, %v103
    %v184 = vpop.permute.xlu0 %183
    %186 = vset.pattern.permute.xlu0 1
    %187 = vperm.xlu0 %186, %v104
    %v188 = vpop.permute.xlu0 %187
    %190 = vset.pattern.permute.xlu0 1
    %191 = vperm.xlu0 %190, %v105
    %v192 = vpop.permute.xlu0 %191
    %v195 = vlaneseq
    %v196 = vshrl.u32 %v195, 7
    %v197 = vsub.s32 0, %v196
    %v198 = vrot.slane %v161, %v197
    %v200 = vmul.f32 %v164, %v198
    %v201 = vmul.f32 %v168, %v198
    %v202 = vmul.f32 %v172, %v198
    %v203 = vmul.f32 %v176, %v198
    %v204 = vmul.f32 %v180, %v198
    %v205 = vmul.f32 %v184, %v198
    %v206 = vmul.f32 %v188, %v198
    %v207 = vmul.f32 %v192, %v198
    %v208 = vadd.f32 %v153, %v200
    %v209 = vadd.f32 %v154, %v201
    %v210 = vadd.f32 %v155, %v202
    %v211 = vadd.f32 %v156, %v203
    %v212 = vadd.f32 %v157, %v204
    %v213 = vadd.f32 %v158, %v205
    %v214 = vadd.f32 %v159, %v206
    %v215 = vadd.f32 %v160, %v207
    %v216 = vld [vmem:[%s3] sm:$0x1]
    %217 = vset.pattern.permute.xlu0 2
    %218 = vperm.xlu0 %217, %v98
    %v219 = vpop.permute.xlu0 %218
    %221 = vset.pattern.permute.xlu0 2
    %222 = vperm.xlu0 %221, %v99
    %v223 = vpop.permute.xlu0 %222
    %225 = vset.pattern.permute.xlu0 2
    %226 = vperm.xlu0 %225, %v100
    %v227 = vpop.permute.xlu0 %226
    %229 = vset.pattern.permute.xlu0 2
    %230 = vperm.xlu0 %229, %v101
    %v231 = vpop.permute.xlu0 %230
    %233 = vset.pattern.permute.xlu0 2
    %234 = vperm.xlu0 %233, %v102
    %v235 = vpop.permute.xlu0 %234
    %237 = vset.pattern.permute.xlu0 2
    %238 = vperm.xlu0 %237, %v103
    %v239 = vpop.permute.xlu0 %238
    %241 = vset.pattern.permute.xlu0 2
    %242 = vperm.xlu0 %241, %v104
    %v243 = vpop.permute.xlu0 %242
    %245 = vset.pattern.permute.xlu0 2
    %246 = vperm.xlu0 %245, %v105
    %v247 = vpop.permute.xlu0 %246
    %v250 = vlaneseq
    %v251 = vshrl.u32 %v250, 7
    %v252 = vsub.s32 0, %v251
    %v253 = vrot.slane %v216, %v252
    %v255 = vmul.f32 %v219, %v253
    %v256 = vmul.f32 %v223, %v253
    %v257 = vmul.f32 %v227, %v253
    %v258 = vmul.f32 %v231, %v253
    %v259 = vmul.f32 %v235, %v253
    %v260 = vmul.f32 %v239, %v253
    %v261 = vmul.f32 %v243, %v253
    %v262 = vmul.f32 %v247, %v253
    %v263 = vadd.f32 %v208, %v255
    %v264 = vadd.f32 %v209, %v256
    %v265 = vadd.f32 %v210, %v257
    %v266 = vadd.f32 %v211, %v258
    %v267 = vadd.f32 %v212, %v259
    %v268 = vadd.f32 %v213, %v260
    %v269 = vadd.f32 %v214, %v261
    %v270 = vadd.f32 %v215, %v262
    %v271 = vld [vmem:[%s4] sm:$0x1]
    %v273 = vlaneseq
    %v274 = vshrl.u32 %v273, 7
    %v275 = vsub.s32 0, %v274
    %v276 = vrot.slane %v271, %v275
    %v278 = vadd.f32 %v263, %v276
    %v279 = vadd.f32 %v264, %v276
    %v280 = vadd.f32 %v265, %v276
    %v281 = vadd.f32 %v266, %v276
    %v282 = vadd.f32 %v267, %v276
    %v283 = vadd.f32 %v268, %v276
    %v284 = vadd.f32 %v269, %v276
    %v285 = vadd.f32 %v270, %v276
    %v286 = vmax.f32 %v278, 0.0
    %v287 = vmax.f32 %v279, 0.0
    %v288 = vmax.f32 %v280, 0.0
    %v289 = vmax.f32 %v281, 0.0
    %v290 = vmax.f32 %v282, 0.0
    %v291 = vmax.f32 %v283, 0.0
    %v292 = vmax.f32 %v284, 0.0
    %v293 = vmax.f32 %v285, 0.0
    %v294 = vpack.c.bf16 %v287, %v286
    %v295 = vpack.c.bf16 %v289, %v288
    %v296 = vpack.c.bf16 %v291, %v290
    %v297 = vpack.c.bf16 %v293, %v292
    %v298 = vld [vmem:[#allocation2] sm:$0xff]
    %v299 = vld [vmem:[#allocation2 + $0x8] sm:$0xff]
    %v300 = vld [vmem:[#allocation2 + $0x10] sm:$0xff]
    %v301 = vld [vmem:[#allocation2 + $0x18] sm:$0xff]
    %v302 = vld [vmem:[#allocation2 + $0x20] sm:$0xff]
    %v303 = vld [vmem:[#allocation2 + $0x28] sm:$0xff]
    %v304 = vld [vmem:[#allocation2 + $0x30] sm:$0xff]
    %v305 = vld [vmem:[#allocation2 + $0x38] sm:$0xff]
    %v306 = vld [vmem:[#allocation2 + $0x40] sm:$0xff]
    %v307 = vld [vmem:[#allocation2 + $0x48] sm:$0xff]
    %v308 = vld [vmem:[#allocation2 + $0x50] sm:$0xff]
    %v309 = vld [vmem:[#allocation2 + $0x58] sm:$0xff]
    %v310 = vld [vmem:[#allocation2 + $0x60] sm:$0xff]
    %v311 = vld [vmem:[#allocation2 + $0x68] sm:$0xff]
    %v312 = vld [vmem:[#allocation2 + $0x70] sm:$0xff]
    %v313 = vld [vmem:[#allocation2 + $0x78] sm:$0xff]
    %v314 = vld [vmem:[%s6] sm:$0x3]
    %v316 = vlaneseq
    %v317 = vshrl.u32 %v316, 7
    %v318 = vsub.s32 0, %v317
    %v319 = vrot.slane %v314, %v318
    %v320 = vlaneseq
    %v321 = vshrl.u32 %v320, 7
    %v322 = vsub.s32 1, %v321
    %v323 = vrot.slane %v314, %v322
    %v342 = vunpack.c.l.b16 %v298
    %v343 = vunpack.c.h.b16 %v298
    %v344 = vunpack.c.l.b16 %v299
    %v345 = vunpack.c.h.b16 %v299
    %v346 = vunpack.c.l.b16 %v300
    %v347 = vunpack.c.h.b16 %v300
    %v348 = vunpack.c.l.b16 %v301
    %v349 = vunpack.c.h.b16 %v301
    %v350 = vunpack.c.l.b16 %v302
    %v351 = vunpack.c.h.b16 %v302
    %v352 = vunpack.c.l.b16 %v303
    %v353 = vunpack.c.h.b16 %v303
    %v354 = vunpack.c.l.b16 %v304
    %v355 = vunpack.c.h.b16 %v304
    %v356 = vunpack.c.l.b16 %v305
    %v357 = vunpack.c.h.b16 %v305
    %v358 = vunpack.c.l.b16 %v306
    %v359 = vunpack.c.h.b16 %v306
    %v360 = vunpack.c.l.b16 %v307
    %v361 = vunpack.c.h.b16 %v307
    %v362 = vunpack.c.l.b16 %v308
    %v363 = vunpack.c.h.b16 %v308
    %v364 = vunpack.c.l.b16 %v309
    %v365 = vunpack.c.h.b16 %v309
    %v366 = vunpack.c.l.b16 %v310
    %v367 = vunpack.c.h.b16 %v310
    %v368 = vunpack.c.l.b16 %v311
    %v369 = vunpack.c.h.b16 %v311
    %v370 = vunpack.c.l.b16 %v312
    %v371 = vunpack.c.h.b16 %v312
    %v372 = vunpack.c.l.b16 %v313
    %v373 = vunpack.c.h.b16 %v313
    %v374 = vpack.c.b16 %v344, %v342
    %v375 = vpack.c.b16 %v345, %v343
    %v376 = vpack.c.b16 %v348, %v346
    %v377 = vpack.c.b16 %v349, %v347
    %v378 = vpack.c.b16 %v352, %v350
    %v379 = vpack.c.b16 %v353, %v351
    %v380 = vpack.c.b16 %v356, %v354
    %v381 = vpack.c.b16 %v357, %v355
    %v382 = vpack.c.b16 %v360, %v358
    %v383 = vpack.c.b16 %v361, %v359
    %v384 = vpack.c.b16 %v364, %v362
    %v385 = vpack.c.b16 %v365, %v363
    %v386 = vpack.c.b16 %v368, %v366
    %v387 = vpack.c.b16 %v369, %v367
    %v388 = vpack.c.b16 %v372, %v370
    %v389 = vpack.c.b16 %v373, %v371
    %406 = vmatprep.subr.bf16.mxu0 %v389
    %407 = vmatpush1.bf16.msra.mxu0 %v388
    %408 = vmatprep.subr.bf16.mxu0 %v387
    %409 = vmatpush1.bf16.msra.mxu0 %v386
    %410 = vmatprep.subr.bf16.mxu0 %v385
    %411 = vmatpush1.bf16.msra.mxu0 %v384
    %412 = vmatprep.subr.bf16.mxu0 %v383
    %413 = vmatpush1.bf16.msra.mxu0 %v382
    %414 = vmatprep.subr.bf16.mxu0 %v381
    %415 = vmatpush1.bf16.msra.mxu0 %v380
    %416 = vmatprep.subr.bf16.mxu0 %v379
    %417 = vmatpush1.bf16.msra.mxu0 %v378
    %418 = vmatprep.subr.bf16.mxu0 %v377
    %419 = vmatpush1.bf16.msra.mxu0 %v376
    %420 = vmatprep.subr.bf16.mxu0 %v375
    %421 = vmatpush1.bf16.msra.mxu0 %v374
    %422 = vmatprep.subr.bf16.mxu0 0
    %423 = vmatpush2.bf16.msra.mxu0 0
    %424 = vmatprep.subr.bf16.mxu0 0
    %425 = vmatpush2.bf16.msra.mxu0 0
    %426 = vmatprep.subr.bf16.mxu0 0
    %427 = vmatpush2.bf16.msra.mxu0 0
    %428 = vmatprep.subr.bf16.mxu0 0
    %429 = vmatpush2.bf16.msra.mxu0 0
    %430 = vmatprep.subr.bf16.mxu0 0
    %431 = vmatpush2.bf16.msra.mxu0 0
    %432 = vmatprep.subr.bf16.mxu0 0
    %433 = vmatpush2.bf16.msra.mxu0 0
    %434 = vmatprep.subr.bf16.mxu0 0
    %435 = vmatpush2.bf16.msra.mxu0 0
    %436 = vmatprep.subr.bf16.mxu0 0
    %437 = vmatpush2.bf16.msra.mxu0 0
    %438 = vmatprep.mubr.bf16.mxu0 0
    %439 = vmatmul.mubr.bf16.gmra.mxu0 %v294
    %v440 = vpop.f32.mrf.mxu0
    %v441 = vadd.f32 %v319, %v440
    %v442 = vpop.f32.mrf.mxu0
    %v443 = vadd.f32 %v323, %v442
    %v444 = vpop.f32.mrf.mxu0
    %v445 = vadd.f32 %v319, %v444
    %v446 = vpop.f32.mrf.mxu0
    %v447 = vadd.f32 %v323, %v446
    %448 = vmatprep.mubr.bf16.mxu0 0
    %449 = vmatmul.mubr.bf16.gmra.mxu0 %v295
    %v450 = vpop.f32.mrf.mxu0
    %v451 = vadd.f32 %v319, %v450
    %v452 = vpop.f32.mrf.mxu0
    %v453 = vadd.f32 %v323, %v452
    %v454 = vpop.f32.mrf.mxu0
    %v455 = vadd.f32 %v319, %v454
    %v456 = vpop.f32.mrf.mxu0
    %v457 = vadd.f32 %v323, %v456
    %458 = vmatprep.mubr.bf16.mxu0 0
    %459 = vmatmul.mubr.bf16.gmra.mxu0 %v296
    %v460 = vpop.f32.mrf.mxu0
    %v461 = vadd.f32 %v319, %v460
    %v462 = vpop.f32.mrf.mxu0
    %v463 = vadd.f32 %v323, %v462
    %v464 = vpop.f32.mrf.mxu0
    %v465 = vadd.f32 %v319, %v464
    %v466 = vpop.f32.mrf.mxu0
    %v467 = vadd.f32 %v323, %v466
    %468 = vmatprep.mubr.bf16.mxu0 0
    %469 = vmatmul.mubr.bf16.gmra.mxu0 %v297
    %v470 = vpop.f32.mrf.mxu0
    %v471 = vadd.f32 %v319, %v470
    %v472 = vpop.f32.mrf.mxu0
    %v473 = vadd.f32 %v323, %v472
    %v474 = vpop.f32.mrf.mxu0
    %v475 = vadd.f32 %v319, %v474
    %v476 = vpop.f32.mrf.mxu0
    %v477 = vadd.f32 %v323, %v476
    %478 = vdwg.mxu0
    %v479 = vrot.slane %v441, 4
    %v480 = vmax.f32 %v441, %v479
    %v481 = vrot.slane %v480, 2
    %v482 = vmax.f32 %v480, %v481
    %v483 = vrot.slane %v482, 1
    %v484 = vmax.f32 %v482, %v483
    %v485 = vrot.slane %v443, 4
    %v486 = vmax.f32 %v443, %v485
    %v487 = vrot.slane %v486, 2
    %v488 = vmax.f32 %v486, %v487
    %v489 = vrot.slane %v488, 1
    %v490 = vmax.f32 %v488, %v489
    %v491 = vrot.slane %v445, 4
    %v492 = vmax.f32 %v445, %v491
    %v493 = vrot.slane %v492, 2
    %v494 = vmax.f32 %v492, %v493
    %v495 = vrot.slane %v494, 1
    %v496 = vmax.f32 %v494, %v495
    %v497 = vrot.slane %v447, 4
    %v498 = vmax.f32 %v447, %v497
    %v499 = vrot.slane %v498, 2
    %v500 = vmax.f32 %v498, %v499
    %v501 = vrot.slane %v500, 1
    %v502 = vmax.f32 %v500, %v501
    %v503 = vrot.slane %v451, 4
    %v504 = vmax.f32 %v451, %v503
    %v505 = vrot.slane %v504, 2
    %v506 = vmax.f32 %v504, %v505
    %v507 = vrot.slane %v506, 1
    %v508 = vmax.f32 %v506, %v507
    %v509 = vrot.slane %v453, 4
    %v510 = vmax.f32 %v453, %v509
    %v511 = vrot.slane %v510, 2
    %v512 = vmax.f32 %v510, %v511
    %v513 = vrot.slane %v512, 1
    %v514 = vmax.f32 %v512, %v513
    %v515 = vrot.slane %v455, 4
    %v516 = vmax.f32 %v455, %v515
    %v517 = vrot.slane %v516, 2
    %v518 = vmax.f32 %v516, %v517
    %v519 = vrot.slane %v518, 1
    %v520 = vmax.f32 %v518, %v519
    %v521 = vrot.slane %v457, 4
    %v522 = vmax.f32 %v457, %v521
    %v523 = vrot.slane %v522, 2
    %v524 = vmax.f32 %v522, %v523
    %v525 = vrot.slane %v524, 1
    %v526 = vmax.f32 %v524, %v525
    %v527 = vrot.slane %v461, 4
    %v528 = vmax.f32 %v461, %v527
    %v529 = vrot.slane %v528, 2
    %v530 = vmax.f32 %v528, %v529
    %v531 = vrot.slane %v530, 1
    %v532 = vmax.f32 %v530, %v531
    %v533 = vrot.slane %v463, 4
    %v534 = vmax.f32 %v463, %v533
    %v535 = vrot.slane %v534, 2
    %v536 = vmax.f32 %v534, %v535
    %v537 = vrot.slane %v536, 1
    %v538 = vmax.f32 %v536, %v537
    %v539 = vrot.slane %v465, 4
    %v540 = vmax.f32 %v465, %v539
    %v541 = vrot.slane %v540, 2
    %v542 = vmax.f32 %v540, %v541
    %v543 = vrot.slane %v542, 1
    %v544 = vmax.f32 %v542, %v543
    %v545 = vrot.slane %v467, 4
    %v546 = vmax.f32 %v467, %v545
    %v547 = vrot.slane %v546, 2
    %v548 = vmax.f32 %v546, %v547
    %v549 = vrot.slane %v548, 1
    %v550 = vmax.f32 %v548, %v549
    %v551 = vrot.slane %v471, 4
    %v552 = vmax.f32 %v471, %v551
    %v553 = vrot.slane %v552, 2
    %v554 = vmax.f32 %v552, %v553
    %v555 = vrot.slane %v554, 1
    %v556 = vmax.f32 %v554, %v555
    %v557 = vrot.slane %v473, 4
    %v558 = vmax.f32 %v473, %v557
    %v559 = vrot.slane %v558, 2
    %v560 = vmax.f32 %v558, %v559
    %v561 = vrot.slane %v560, 1
    %v562 = vmax.f32 %v560, %v561
    %v563 = vrot.slane %v475, 4
    %v564 = vmax.f32 %v475, %v563
    %v565 = vrot.slane %v564, 2
    %v566 = vmax.f32 %v564, %v565
    %v567 = vrot.slane %v566, 1
    %v568 = vmax.f32 %v566, %v567
    %v569 = vrot.slane %v477, 4
    %v570 = vmax.f32 %v477, %v569
    %v571 = vrot.slane %v570, 2
    %v572 = vmax.f32 %v570, %v571
    %v573 = vrot.slane %v572, 1
    %v574 = vmax.f32 %v572, %v573
    %v575 = vpack.c.bf16 %v484, %v484
    %v576 = vpack.c.bf16 %v490, %v490
    %v577 = vpack.c.bf16 %v496, %v496
    %v578 = vpack.c.bf16 %v502, %v502
    %v579 = vpack.c.bf16 %v508, %v508
    %v580 = vpack.c.bf16 %v514, %v514
    %v581 = vpack.c.bf16 %v520, %v520
    %v582 = vpack.c.bf16 %v526, %v526
    %v583 = vpack.c.bf16 %v532, %v532
    %v584 = vpack.c.bf16 %v538, %v538
    %v585 = vpack.c.bf16 %v544, %v544
    %v586 = vpack.c.bf16 %v550, %v550
    %v587 = vpack.c.bf16 %v556, %v556
    %v588 = vpack.c.bf16 %v562, %v562
    %v589 = vpack.c.bf16 %v568, %v568
    %v590 = vpack.c.bf16 %v574, %v574
    %v591 = vld [vmem:[#allocation5] sm:$0xff]
    %v592 = vld [vmem:[#allocation5 + $0x8] sm:$0xff]
    %v593 = vld [vmem:[#allocation5 + $0x10] sm:$0xff]
    %v594 = vld [vmem:[#allocation5 + $0x18] sm:$0xff]
    %v595 = vld [vmem:[#allocation5 + $0x20] sm:$0xff]
    %v596 = vld [vmem:[#allocation5 + $0x28] sm:$0xff]
    %v597 = vld [vmem:[#allocation5 + $0x30] sm:$0xff]
    %v598 = vld [vmem:[#allocation5 + $0x38] sm:$0xff]
    %v599 = vld [vmem:[#allocation5 + $0x40] sm:$0xff]
    %v600 = vld [vmem:[#allocation5 + $0x48] sm:$0xff]
    %v601 = vld [vmem:[#allocation5 + $0x50] sm:$0xff]
    %v602 = vld [vmem:[#allocation5 + $0x58] sm:$0xff]
    %v603 = vld [vmem:[#allocation5 + $0x60] sm:$0xff]
    %v604 = vld [vmem:[#allocation5 + $0x68] sm:$0xff]
    %v605 = vld [vmem:[#allocation5 + $0x70] sm:$0xff]
    %v606 = vld [vmem:[#allocation5 + $0x78] sm:$0xff]
    %v607 = vld [vmem:[#allocation5 + $0x80] sm:$0xff]
    %v608 = vld [vmem:[#allocation5 + $0x88] sm:$0xff]
    %v609 = vld [vmem:[#allocation5 + $0x90] sm:$0xff]
    %v610 = vld [vmem:[#allocation5 + $0x98] sm:$0xff]
    %v611 = vld [vmem:[#allocation5 + $0xa0] sm:$0xff]
    %v612 = vld [vmem:[#allocation5 + $0xa8] sm:$0xff]
    %v613 = vld [vmem:[#allocation5 + $0xb0] sm:$0xff]
    %v614 = vld [vmem:[#allocation5 + $0xb8] sm:$0xff]
    %v615 = vld [vmem:[#allocation5 + $0xc0] sm:$0xff]
    %v616 = vld [vmem:[#allocation5 + $0xc8] sm:$0xff]
    %v617 = vld [vmem:[#allocation5 + $0xd0] sm:$0xff]
    %v618 = vld [vmem:[#allocation5 + $0xd8] sm:$0xff]
    %v619 = vld [vmem:[#allocation5 + $0xe0] sm:$0xff]
    %v620 = vld [vmem:[#allocation5 + $0xe8] sm:$0xff]
    %v621 = vld [vmem:[#allocation5 + $0xf0] sm:$0xff]
    %v622 = vld [vmem:[#allocation5 + $0xf8] sm:$0xff]
    %v623 = vld [vmem:[#allocation5 + $0x100] sm:$0xff]
    %v624 = vld [vmem:[#allocation5 + $0x108] sm:$0xff]
    %v625 = vld [vmem:[#allocation5 + $0x110] sm:$0xff]
    %v626 = vld [vmem:[#allocation5 + $0x118] sm:$0xff]
    %v627 = vld [vmem:[#allocation5 + $0x120] sm:$0xff]
    %v628 = vld [vmem:[#allocation5 + $0x128] sm:$0xff]
    %v629 = vld [vmem:[#allocation5 + $0x130] sm:$0xff]
    %v630 = vld [vmem:[#allocation5 + $0x138] sm:$0xff]
    %v631 = vld [vmem:[#allocation5 + $0x140] sm:$0xff]
    %v632 = vld [vmem:[#allocation5 + $0x148] sm:$0xff]
    %v633 = vld [vmem:[#allocation5 + $0x150] sm:$0xff]
    %v634 = vld [vmem:[#allocation5 + $0x158] sm:$0xff]
    %v635 = vld [vmem:[#allocation5 + $0x160] sm:$0xff]
    %v636 = vld [vmem:[#allocation5 + $0x168] sm:$0xff]
    %v637 = vld [vmem:[#allocation5 + $0x170] sm:$0xff]
    %v638 = vld [vmem:[#allocation5 + $0x178] sm:$0xff]
    %v639 = vld [vmem:[#allocation5 + $0x180] sm:$0xff]
    %v640 = vld [vmem:[#allocation5 + $0x188] sm:$0xff]
    %v641 = vld [vmem:[#allocation5 + $0x190] sm:$0xff]
    %v642 = vld [vmem:[#allocation5 + $0x198] sm:$0xff]
    %v643 = vld [vmem:[#allocation5 + $0x1a0] sm:$0xff]
    %v644 = vld [vmem:[#allocation5 + $0x1a8] sm:$0xff]
    %v645 = vld [vmem:[#allocation5 + $0x1b0] sm:$0xff]
    %v646 = vld [vmem:[#allocation5 + $0x1b8] sm:$0xff]
    %v647 = vld [vmem:[#allocation5 + $0x1c0] sm:$0xff]
    %v648 = vld [vmem:[#allocation5 + $0x1c8] sm:$0xff]
    %v649 = vld [vmem:[#allocation5 + $0x1d0] sm:$0xff]
    %v650 = vld [vmem:[#allocation5 + $0x1d8] sm:$0xff]
    %v651 = vld [vmem:[#allocation5 + $0x1e0] sm:$0xff]
    %v652 = vld [vmem:[#allocation5 + $0x1e8] sm:$0xff]
    %v653 = vld [vmem:[#allocation5 + $0x1f0] sm:$0xff]
    %v654 = vld [vmem:[#allocation5 + $0x1f8] sm:$0xff]
    %v671 = vunpack.c.l.b16 %v575
    %v672 = vunpack.c.l.b16 %v576
    %v673 = vunpack.c.l.b16 %v577
    %v674 = vunpack.c.l.b16 %v578
    %v675 = vunpack.c.l.b16 %v579
    %v676 = vunpack.c.l.b16 %v580
    %v677 = vunpack.c.l.b16 %v581
    %v678 = vunpack.c.l.b16 %v582
    %v679 = vunpack.c.l.b16 %v583
    %v680 = vunpack.c.l.b16 %v584
    %v681 = vunpack.c.l.b16 %v585
    %v682 = vunpack.c.l.b16 %v586
    %v683 = vunpack.c.l.b16 %v587
    %v684 = vunpack.c.l.b16 %v588
    %v685 = vunpack.c.l.b16 %v589
    %v686 = vunpack.c.l.b16 %v590
    %vm687 = vcmask 1041409
    %v688 = vsel %vm687, %v673, %v671
    %vm689 = vcmask 1042434
    %v690 = vsel %vm689, %v675, %v688
    %vm691 = vcmask 1043459
    %v692 = vsel %vm691, %v677, %v690
    %vm693 = vcmask 1044484
    %v694 = vsel %vm693, %v679, %v692
    %vm695 = vcmask 1045509
    %v696 = vsel %vm695, %v681, %v694
    %vm697 = vcmask 1046534
    %v698 = vsel %vm697, %v683, %v696
    %vm699 = vcmask 1047559
    %v700 = vsel %vm699, %v685, %v698
    %v701 = vsel %vm687, %v674, %v672
    %v702 = vsel %vm689, %v676, %v701
    %v703 = vsel %vm691, %v678, %v702
    %v704 = vsel %vm693, %v680, %v703
    %v705 = vsel %vm695, %v682, %v704
    %v706 = vsel %vm697, %v684, %v705
    %v707 = vsel %vm699, %v686, %v706
    %v708 = vpack.c.b16 %v700, %v700
    %v709 = vpack.c.b16 %v707, %v707
    %v776 = vunpack.c.l.b16 %v591
    %v777 = vunpack.c.h.b16 %v591
    %v778 = vunpack.c.l.b16 %v592
    %v779 = vunpack.c.h.b16 %v592
    %v780 = vunpack.c.l.b16 %v593
    %v781 = vunpack.c.h.b16 %v593
    %v782 = vunpack.c.l.b16 %v594
    %v783 = vunpack.c.h.b16 %v594
    %v784 = vunpack.c.l.b16 %v595
    %v785 = vunpack.c.h.b16 %v595
    %v786 = vunpack.c.l.b16 %v596
    %v787 = vunpack.c.h.b16 %v596
    %v788 = vunpack.c.l.b16 %v597
    %v789 = vunpack.c.h.b16 %v597
    %v790 = vunpack.c.l.b16 %v598
    %v791 = vunpack.c.h.b16 %v598
    %v792 = vunpack.c.l.b16 %v599
    %v793 = vunpack.c.h.b16 %v599
    %v794 = vunpack.c.l.b16 %v600
    %v795 = vunpack.c.h.b16 %v600
    %v796 = vunpack.c.l.b16 %v601
    %v797 = vunpack.c.h.b16 %v601
    %v798 = vunpack.c.l.b16 %v602
    %v799 = vunpack.c.h.b16 %v602
    %v800 = vunpack.c.l.b16 %v603
    %v801 = vunpack.c.h.b16 %v603
    %v802 = vunpack.c.l.b16 %v604
    %v803 = vunpack.c.h.b16 %v604
    %v804 = vunpack.c.l.b16 %v605
    %v805 = vunpack.c.h.b16 %v605
    %v806 = vunpack.c.l.b16 %v606
    %v807 = vunpack.c.h.b16 %v606
    %v808 = vunpack.c.l.b16 %v607
    %v809 = vunpack.c.h.b16 %v607
    %v810 = vunpack.c.l.b16 %v608
    %v811 = vunpack.c.h.b16 %v608
    %v812 = vunpack.c.l.b16 %v609
    %v813 = vunpack.c.h.b16 %v609
    %v814 = vunpack.c.l.b16 %v610
    %v815 = vunpack.c.h.b16 %v610
    %v816 = vunpack.c.l.b16 %v611
    %v817 = vunpack.c.h.b16 %v611
    %v818 = vunpack.c.l.b16 %v612
    %v819 = vunpack.c.h.b16 %v612
    %v820 = vunpack.c.l.b16 %v613
    %v821 = vunpack.c.h.b16 %v613
    %v822 = vunpack.c.l.b16 %v614
    %v823 = vunpack.c.h.b16 %v614
    %v824 = vunpack.c.l.b16 %v615
    %v825 = vunpack.c.h.b16 %v615
    %v826 = vunpack.c.l.b16 %v616
    %v827 = vunpack.c.h.b16 %v616
    %v828 = vunpack.c.l.b16 %v617
    %v829 = vunpack.c.h.b16 %v617
    %v830 = vunpack.c.l.b16 %v618
    %v831 = vunpack.c.h.b16 %v618
    %v832 = vunpack.c.l.b16 %v619
    %v833 = vunpack.c.h.b16 %v619
    %v834 = vunpack.c.l.b16 %v620
    %v835 = vunpack.c.h.b16 %v620
    %v836 = vunpack.c.l.b16 %v621
    %v837 = vunpack.c.h.b16 %v621
    %v838 = vunpack.c.l.b16 %v622
    %v839 = vunpack.c.h.b16 %v622
    %v840 = vunpack.c.l.b16 %v623
    %v841 = vunpack.c.h.b16 %v623
    %v842 = vunpack.c.l.b16 %v624
    %v843 = vunpack.c.h.b16 %v624
    %v844 = vunpack.c.l.b16 %v625
    %v845 = vunpack.c.h.b16 %v625
    %v846 = vunpack.c.l.b16 %v626
    %v847 = vunpack.c.h.b16 %v626
    %v848 = vunpack.c.l.b16 %v627
    %v849 = vunpack.c.h.b16 %v627
    %v850 = vunpack.c.l.b16 %v628
    %v851 = vunpack.c.h.b16 %v628
    %v852 = vunpack.c.l.b16 %v629
    %v853 = vunpack.c.h.b16 %v629
    %v854 = vunpack.c.l.b16 %v630
    %v855 = vunpack.c.h.b16 %v630
    %v856 = vunpack.c.l.b16 %v631
    %v857 = vunpack.c.h.b16 %v631
    %v858 = vunpack.c.l.b16 %v632
    %v859 = vunpack.c.h.b16 %v632
    %v860 = vunpack.c.l.b16 %v633
    %v861 = vunpack.c.h.b16 %v633
    %v862 = vunpack.c.l.b16 %v634
    %v863 = vunpack.c.h.b16 %v634
    %v864 = vunpack.c.l.b16 %v635
    %v865 = vunpack.c.h.b16 %v635
    %v866 = vunpack.c.l.b16 %v636
    %v867 = vunpack.c.h.b16 %v636
    %v868 = vunpack.c.l.b16 %v637
    %v869 = vunpack.c.h.b16 %v637
    %v870 = vunpack.c.l.b16 %v638
    %v871 = vunpack.c.h.b16 %v638
    %v872 = vunpack.c.l.b16 %v639
    %v873 = vunpack.c.h.b16 %v639
    %v874 = vunpack.c.l.b16 %v640
    %v875 = vunpack.c.h.b16 %v640
    %v876 = vunpack.c.l.b16 %v641
    %v877 = vunpack.c.h.b16 %v641
    %v878 = vunpack.c.l.b16 %v642
    %v879 = vunpack.c.h.b16 %v642
    %v880 = vunpack.c.l.b16 %v643
    %v881 = vunpack.c.h.b16 %v643
    %v882 = vunpack.c.l.b16 %v644
    %v883 = vunpack.c.h.b16 %v644
    %v884 = vunpack.c.l.b16 %v645
    %v885 = vunpack.c.h.b16 %v645
    %v886 = vunpack.c.l.b16 %v646
    %v887 = vunpack.c.h.b16 %v646
    %v888 = vunpack.c.l.b16 %v647
    %v889 = vunpack.c.h.b16 %v647
    %v890 = vunpack.c.l.b16 %v648
    %v891 = vunpack.c.h.b16 %v648
    %v892 = vunpack.c.l.b16 %v649
    %v893 = vunpack.c.h.b16 %v649
    %v894 = vunpack.c.l.b16 %v650
    %v895 = vunpack.c.h.b16 %v650
    %v896 = vunpack.c.l.b16 %v651
    %v897 = vunpack.c.h.b16 %v651
    %v898 = vunpack.c.l.b16 %v652
    %v899 = vunpack.c.h.b16 %v652
    %v900 = vunpack.c.l.b16 %v653
    %v901 = vunpack.c.h.b16 %v653
    %v902 = vunpack.c.l.b16 %v654
    %v903 = vunpack.c.h.b16 %v654
    %v904 = vpack.c.b16 %v780, %v776
    %v905 = vpack.c.b16 %v781, %v777
    %v906 = vpack.c.b16 %v782, %v778
    %v907 = vpack.c.b16 %v783, %v779
    %v908 = vpack.c.b16 %v788, %v784
    %v909 = vpack.c.b16 %v789, %v785
    %v910 = vpack.c.b16 %v790, %v786
    %v911 = vpack.c.b16 %v791, %v787
    %v912 = vpack.c.b16 %v796, %v792
    %v913 = vpack.c.b16 %v797, %v793
    %v914 = vpack.c.b16 %v798, %v794
    %v915 = vpack.c.b16 %v799, %v795
    %v916 = vpack.c.b16 %v804, %v800
    %v917 = vpack.c.b16 %v805, %v801
    %v918 = vpack.c.b16 %v806, %v802
    %v919 = vpack.c.b16 %v807, %v803
    %v920 = vpack.c.b16 %v812, %v808
    %v921 = vpack.c.b16 %v813, %v809
    %v922 = vpack.c.b16 %v814, %v810
    %v923 = vpack.c.b16 %v815, %v811
    %v924 = vpack.c.b16 %v820, %v816
    %v925 = vpack.c.b16 %v821, %v817
    %v926 = vpack.c.b16 %v822, %v818
    %v927 = vpack.c.b16 %v823, %v819
    %v928 = vpack.c.b16 %v828, %v824
    %v929 = vpack.c.b16 %v829, %v825
    %v930 = vpack.c.b16 %v830, %v826
    %v931 = vpack.c.b16 %v831, %v827
    %v932 = vpack.c.b16 %v836, %v832
    %v933 = vpack.c.b16 %v837, %v833
    %v934 = vpack.c.b16 %v838, %v834
    %v935 = vpack.c.b16 %v839, %v835
    %v936 = vpack.c.b16 %v844, %v840
    %v937 = vpack.c.b16 %v845, %v841
    %v938 = vpack.c.b16 %v846, %v842
    %v939 = vpack.c.b16 %v847, %v843
    %v940 = vpack.c.b16 %v852, %v848
    %v941 = vpack.c.b16 %v853, %v849
    %v942 = vpack.c.b16 %v854, %v850
    %v943 = vpack.c.b16 %v855, %v851
    %v944 = vpack.c.b16 %v860, %v856
    %v945 = vpack.c.b16 %v861, %v857
    %v946 = vpack.c.b16 %v862, %v858
    %v947 = vpack.c.b16 %v863, %v859
    %v948 = vpack.c.b16 %v868, %v864
    %v949 = vpack.c.b16 %v869, %v865
    %v950 = vpack.c.b16 %v870, %v866
    %v951 = vpack.c.b16 %v871, %v867
    %v952 = vpack.c.b16 %v876, %v872
    %v953 = vpack.c.b16 %v877, %v873
    %v954 = vpack.c.b16 %v878, %v874
    %v955 = vpack.c.b16 %v879, %v875
    %v956 = vpack.c.b16 %v884, %v880
    %v957 = vpack.c.b16 %v885, %v881
    %v958 = vpack.c.b16 %v886, %v882
    %v959 = vpack.c.b16 %v887, %v883
    %v960 = vpack.c.b16 %v892, %v888
    %v961 = vpack.c.b16 %v893, %v889
    %v962 = vpack.c.b16 %v894, %v890
    %v963 = vpack.c.b16 %v895, %v891
    %v964 = vpack.c.b16 %v900, %v896
    %v965 = vpack.c.b16 %v901, %v897
    %v966 = vpack.c.b16 %v902, %v898
    %v967 = vpack.c.b16 %v903, %v899
    %1032 = vmatprep.subr.bf16.mxu0 %v933
    %1033 = vmatpush1.bf16.msra.mxu0 %v932
    %1034 = vmatprep.subr.bf16.mxu0 %v929
    %1035 = vmatpush1.bf16.msra.mxu0 %v928
    %1036 = vmatprep.subr.bf16.mxu0 %v925
    %1037 = vmatpush1.bf16.msra.mxu0 %v924
    %1038 = vmatprep.subr.bf16.mxu0 %v921
    %1039 = vmatpush1.bf16.msra.mxu0 %v920
    %1040 = vmatprep.subr.bf16.mxu0 %v917
    %1041 = vmatpush1.bf16.msra.mxu0 %v916
    %1042 = vmatprep.subr.bf16.mxu0 %v913
    %1043 = vmatpush1.bf16.msra.mxu0 %v912
    %1044 = vmatprep.subr.bf16.mxu0 %v909
    %1045 = vmatpush1.bf16.msra.mxu0 %v908
    %1046 = vmatprep.subr.bf16.mxu0 %v905
    %1047 = vmatpush1.bf16.msra.mxu0 %v904
    %1048 = vmatprep.subr.bf16.mxu0 %v965
    %1049 = vmatpush2.bf16.msra.mxu0 %v964
    %1050 = vmatprep.subr.bf16.mxu0 %v961
    %1051 = vmatpush2.bf16.msra.mxu0 %v960
    %1052 = vmatprep.subr.bf16.mxu0 %v957
    %1053 = vmatpush2.bf16.msra.mxu0 %v956
    %1054 = vmatprep.subr.bf16.mxu0 %v953
    %1055 = vmatpush2.bf16.msra.mxu0 %v952
    %1056 = vmatprep.subr.bf16.mxu0 %v949
    %1057 = vmatpush2.bf16.msra.mxu0 %v948
    %1058 = vmatprep.subr.bf16.mxu0 %v945
    %1059 = vmatpush2.bf16.msra.mxu0 %v944
    %1060 = vmatprep.subr.bf16.mxu0 %v941
    %1061 = vmatpush2.bf16.msra.mxu0 %v940
    %1062 = vmatprep.subr.bf16.mxu0 %v937
    %1063 = vmatpush2.bf16.msra.mxu0 %v936
    %1064 = vmatprep.mubr.bf16.mxu0 %v709
    %1065 = vmatmul.mubr.bf16.gmra.mxu0 %v708
    %v1066 = vpop.f32.mrf.mxu0
    %v1067 = vadd.f32 0.0, %v1066
    %v1068 = vpop.f32.mrf.mxu0
    %v1069 = vadd.f32 0.0, %v1068
    %v1070 = vpop.f32.mrf.mxu0
    %v1071 = vpop.f32.mrf.mxu0
    %1072 = vdwg.mxu0
    %1073 = vmatprep.subr.bf16.mxu0 %v935
    %1074 = vmatpush1.bf16.msra.mxu0 %v934
    %1075 = vmatprep.subr.bf16.mxu0 %v931
    %1076 = vmatpush1.bf16.msra.mxu0 %v930
    %1077 = vmatprep.subr.bf16.mxu0 %v927
    %1078 = vmatpush1.bf16.msra.mxu0 %v926
    %1079 = vmatprep.subr.bf16.mxu0 %v923
    %1080 = vmatpush1.bf16.msra.mxu0 %v922
    %1081 = vmatprep.subr.bf16.mxu0 %v919
    %1082 = vmatpush1.bf16.msra.mxu0 %v918
    %1083 = vmatprep.subr.bf16.mxu0 %v915
    %1084 = vmatpush1.bf16.msra.mxu0 %v914
    %1085 = vmatprep.subr.bf16.mxu0 %v911
    %1086 = vmatpush1.bf16.msra.mxu0 %v910
    %1087 = vmatprep.subr.bf16.mxu0 %v907
    %1088 = vmatpush1.bf16.msra.mxu0 %v906
    %1089 = vmatprep.subr.bf16.mxu0 %v967
    %1090 = vmatpush2.bf16.msra.mxu0 %v966
    %1091 = vmatprep.subr.bf16.mxu0 %v963
    %1092 = vmatpush2.bf16.msra.mxu0 %v962
    %1093 = vmatprep.subr.bf16.mxu0 %v959
    %1094 = vmatpush2.bf16.msra.mxu0 %v958
    %1095 = vmatprep.subr.bf16.mxu0 %v955
    %1096 = vmatpush2.bf16.msra.mxu0 %v954
    %1097 = vmatprep.subr.bf16.mxu0 %v951
    %1098 = vmatpush2.bf16.msra.mxu0 %v950
    %1099 = vmatprep.subr.bf16.mxu0 %v947
    %1100 = vmatpush2.bf16.msra.mxu0 %v946
    %1101 = vmatprep.subr.bf16.mxu0 %v943
    %1102 = vmatpush2.bf16.msra.mxu0 %v942
    %1103 = vmatprep.subr.bf16.mxu0 %v939
    %1104 = vmatpush2.bf16.msra.mxu0 %v938
    %1105 = vmatprep.mubr.bf16.mxu0 %v709
    %1106 = vmatmul.mubr.bf16.gmra.mxu0 %v708
    %v1107 = vpop.f32.mrf.mxu0
    %v1108 = vadd.f32 0.0, %v1107
    %v1109 = vpop.f32.mrf.mxu0
    %v1110 = vadd.f32 0.0, %v1109
    %v1111 = vpop.f32.mrf.mxu0
    %v1112 = vpop.f32.mrf.mxu0
    %1113 = vdwg.mxu0
    %v1114 = vpack.c.bf16 %v445, %v441
    %v1115 = vpack.c.bf16 %v447, %v443
    %v1116 = vpack.c.bf16 %v455, %v451
    %v1117 = vpack.c.bf16 %v457, %v453
    %v1118 = vpack.c.bf16 %v465, %v461
    %v1119 = vpack.c.bf16 %v467, %v463
    %v1120 = vpack.c.bf16 %v475, %v471
    %v1121 = vpack.c.bf16 %v477, %v473
    %v1122 = vld [vmem:[#allocation7] sm:$0xff]
    %v1123 = vld [vmem:[#allocation7 + $0x8] sm:$0xff]
    %v1124 = vld [vmem:[#allocation7 + $0x10] sm:$0xff]
    %v1125 = vld [vmem:[#allocation7 + $0x18] sm:$0xff]
    %v1126 = vld [vmem:[#allocation7 + $0x20] sm:$0xff]
    %v1127 = vld [vmem:[#allocation7 + $0x28] sm:$0xff]
    %v1128 = vld [vmem:[#allocation7 + $0x30] sm:$0xff]
    %v1129 = vld [vmem:[#allocation7 + $0x38] sm:$0xff]
    %v1130 = vld [vmem:[#allocation7 + $0x40] sm:$0xff]
    %v1131 = vld [vmem:[#allocation7 + $0x48] sm:$0xff]
    %v1132 = vld [vmem:[#allocation7 + $0x50] sm:$0xff]
    %v1133 = vld [vmem:[#allocation7 + $0x58] sm:$0xff]
    %v1134 = vld [vmem:[#allocation7 + $0x60] sm:$0xff]
    %v1135 = vld [vmem:[#allocation7 + $0x68] sm:$0xff]
    %v1136 = vld [vmem:[#allocation7 + $0x70] sm:$0xff]
    %v1137 = vld [vmem:[#allocation7 + $0x78] sm:$0xff]
    %v1138 = vld [vmem:[#allocation7 + $0x80] sm:$0xff]
    %v1139 = vld [vmem:[#allocation7 + $0x88] sm:$0xff]
    %v1140 = vld [vmem:[#allocation7 + $0x90] sm:$0xff]
    %v1141 = vld [vmem:[#allocation7 + $0x98] sm:$0xff]
    %v1142 = vld [vmem:[#allocation7 + $0xa0] sm:$0xff]
    %v1143 = vld [vmem:[#allocation7 + $0xa8] sm:$0xff]
    %v1144 = vld [vmem:[#allocation7 + $0xb0] sm:$0xff]
    %v1145 = vld [vmem:[#allocation7 + $0xb8] sm:$0xff]
    %v1146 = vld [vmem:[#allocation7 + $0xc0] sm:$0xff]
    %v1147 = vld [vmem:[#allocation7 + $0xc8] sm:$0xff]
    %v1148 = vld [vmem:[#allocation7 + $0xd0] sm:$0xff]
    %v1149 = vld [vmem:[#allocation7 + $0xd8] sm:$0xff]
    %v1150 = vld [vmem:[#allocation7 + $0xe0] sm:$0xff]
    %v1151 = vld [vmem:[#allocation7 + $0xe8] sm:$0xff]
    %v1152 = vld [vmem:[#allocation7 + $0xf0] sm:$0xff]
    %v1153 = vld [vmem:[#allocation7 + $0xf8] sm:$0xff]
    %v1154 = vld [vmem:[#allocation7 + $0x100] sm:$0xff]
    %v1155 = vld [vmem:[#allocation7 + $0x108] sm:$0xff]
    %v1156 = vld [vmem:[#allocation7 + $0x110] sm:$0xff]
    %v1157 = vld [vmem:[#allocation7 + $0x118] sm:$0xff]
    %v1158 = vld [vmem:[#allocation7 + $0x120] sm:$0xff]
    %v1159 = vld [vmem:[#allocation7 + $0x128] sm:$0xff]
    %v1160 = vld [vmem:[#allocation7 + $0x130] sm:$0xff]
    %v1161 = vld [vmem:[#allocation7 + $0x138] sm:$0xff]
    %v1162 = vld [vmem:[#allocation7 + $0x140] sm:$0xff]
    %v1163 = vld [vmem:[#allocation7 + $0x148] sm:$0xff]
    %v1164 = vld [vmem:[#allocation7 + $0x150] sm:$0xff]
    %v1165 = vld [vmem:[#allocation7 + $0x158] sm:$0xff]
    %v1166 = vld [vmem:[#allocation7 + $0x160] sm:$0xff]
    %v1167 = vld [vmem:[#allocation7 + $0x168] sm:$0xff]
    %v1168 = vld [vmem:[#allocation7 + $0x170] sm:$0xff]
    %v1169 = vld [vmem:[#allocation7 + $0x178] sm:$0xff]
    %v1170 = vld [vmem:[#allocation7 + $0x180] sm:$0xff]
    %v1171 = vld [vmem:[#allocation7 + $0x188] sm:$0xff]
    %v1172 = vld [vmem:[#allocation7 + $0x190] sm:$0xff]
    %v1173 = vld [vmem:[#allocation7 + $0x198] sm:$0xff]
    %v1174 = vld [vmem:[#allocation7 + $0x1a0] sm:$0xff]
    %v1175 = vld [vmem:[#allocation7 + $0x1a8] sm:$0xff]
    %v1176 = vld [vmem:[#allocation7 + $0x1b0] sm:$0xff]
    %v1177 = vld [vmem:[#allocation7 + $0x1b8] sm:$0xff]
    %v1178 = vld [vmem:[#allocation7 + $0x1c0] sm:$0xff]
    %v1179 = vld [vmem:[#allocation7 + $0x1c8] sm:$0xff]
    %v1180 = vld [vmem:[#allocation7 + $0x1d0] sm:$0xff]
    %v1181 = vld [vmem:[#allocation7 + $0x1d8] sm:$0xff]
    %v1182 = vld [vmem:[#allocation7 + $0x1e0] sm:$0xff]
    %v1183 = vld [vmem:[#allocation7 + $0x1e8] sm:$0xff]
    %v1184 = vld [vmem:[#allocation7 + $0x1f0] sm:$0xff]
    %v1185 = vld [vmem:[#allocation7 + $0x1f8] sm:$0xff]
    %v1186 = vld [vmem:[%s9] sm:$0xf]
    %v1188 = vlaneseq
    %v1189 = vshrl.u32 %v1188, 7
    %v1190 = vsub.s32 0, %v1189
    %v1191 = vrot.slane %v1186, %v1190
    %v1192 = vlaneseq
    %v1193 = vshrl.u32 %v1192, 7
    %v1194 = vsub.s32 1, %v1193
    %v1195 = vrot.slane %v1186, %v1194
    %v1196 = vlaneseq
    %v1197 = vshrl.u32 %v1196, 7
    %v1198 = vsub.s32 2, %v1197
    %v1199 = vrot.slane %v1186, %v1198
    %v1200 = vlaneseq
    %v1201 = vshrl.u32 %v1200, 7
    %v1202 = vsub.s32 3, %v1201
    %v1203 = vrot.slane %v1186, %v1202
    %v1272 = vunpack.c.l.b16 %v1122
    %v1273 = vunpack.c.h.b16 %v1122
    %v1274 = vunpack.c.l.b16 %v1123
    %v1275 = vunpack.c.h.b16 %v1123
    %v1276 = vunpack.c.l.b16 %v1124
    %v1277 = vunpack.c.h.b16 %v1124
    %v1278 = vunpack.c.l.b16 %v1125
    %v1279 = vunpack.c.h.b16 %v1125
    %v1280 = vunpack.c.l.b16 %v1126
    %v1281 = vunpack.c.h.b16 %v1126
    %v1282 = vunpack.c.l.b16 %v1127
    %v1283 = vunpack.c.h.b16 %v1127
    %v1284 = vunpack.c.l.b16 %v1128
    %v1285 = vunpack.c.h.b16 %v1128
    %v1286 = vunpack.c.l.b16 %v1129
    %v1287 = vunpack.c.h.b16 %v1129
    %v1288 = vunpack.c.l.b16 %v1130
    %v1289 = vunpack.c.h.b16 %v1130
    %v1290 = vunpack.c.l.b16 %v1131
    %v1291 = vunpack.c.h.b16 %v1131
    %v1292 = vunpack.c.l.b16 %v1132
    %v1293 = vunpack.c.h.b16 %v1132
    %v1294 = vunpack.c.l.b16 %v1133
    %v1295 = vunpack.c.h.b16 %v1133
    %v1296 = vunpack.c.l.b16 %v1134
    %v1297 = vunpack.c.h.b16 %v1134
    %v1298 = vunpack.c.l.b16 %v1135
    %v1299 = vunpack.c.h.b16 %v1135
    %v1300 = vunpack.c.l.b16 %v1136
    %v1301 = vunpack.c.h.b16 %v1136
    %v1302 = vunpack.c.l.b16 %v1137
    %v1303 = vunpack.c.h.b16 %v1137
    %v1304 = vunpack.c.l.b16 %v1138
    %v1305 = vunpack.c.h.b16 %v1138
    %v1306 = vunpack.c.l.b16 %v1139
    %v1307 = vunpack.c.h.b16 %v1139
    %v1308 = vunpack.c.l.b16 %v1140
    %v1309 = vunpack.c.h.b16 %v1140
    %v1310 = vunpack.c.l.b16 %v1141
    %v1311 = vunpack.c.h.b16 %v1141
    %v1312 = vunpack.c.l.b16 %v1142
    %v1313 = vunpack.c.h.b16 %v1142
    %v1314 = vunpack.c.l.b16 %v1143
    %v1315 = vunpack.c.h.b16 %v1143
    %v1316 = vunpack.c.l.b16 %v1144
    %v1317 = vunpack.c.h.b16 %v1144
    %v1318 = vunpack.c.l.b16 %v1145
    %v1319 = vunpack.c.h.b16 %v1145
    %v1320 = vunpack.c.l.b16 %v1146
    %v1321 = vunpack.c.h.b16 %v1146
    %v1322 = vunpack.c.l.b16 %v1147
    %v1323 = vunpack.c.h.b16 %v1147
    %v1324 = vunpack.c.l.b16 %v1148
    %v1325 = vunpack.c.h.b16 %v1148
    %v1326 = vunpack.c.l.b16 %v1149
    %v1327 = vunpack.c.h.b16 %v1149
    %v1328 = vunpack.c.l.b16 %v1150
    %v1329 = vunpack.c.h.b16 %v1150
    %v1330 = vunpack.c.l.b16 %v1151
    %v1331 = vunpack.c.h.b16 %v1151
    %v1332 = vunpack.c.l.b16 %v1152
    %v1333 = vunpack.c.h.b16 %v1152
    %v1334 = vunpack.c.l.b16 %v1153
    %v1335 = vunpack.c.h.b16 %v1153
    %v1336 = vunpack.c.l.b16 %v1154
    %v1337 = vunpack.c.h.b16 %v1154
    %v1338 = vunpack.c.l.b16 %v1155
    %v1339 = vunpack.c.h.b16 %v1155
    %v1340 = vunpack.c.l.b16 %v1156
    %v1341 = vunpack.c.h.b16 %v1156
    %v1342 = vunpack.c.l.b16 %v1157
    %v1343 = vunpack.c.h.b16 %v1157
    %v1344 = vunpack.c.l.b16 %v1158
    %v1345 = vunpack.c.h.b16 %v1158
    %v1346 = vunpack.c.l.b16 %v1159
    %v1347 = vunpack.c.h.b16 %v1159
    %v1348 = vunpack.c.l.b16 %v1160
    %v1349 = vunpack.c.h.b16 %v1160
    %v1350 = vunpack.c.l.b16 %v1161
    %v1351 = vunpack.c.h.b16 %v1161
    %v1352 = vunpack.c.l.b16 %v1162
    %v1353 = vunpack.c.h.b16 %v1162
    %v1354 = vunpack.c.l.b16 %v1163
    %v1355 = vunpack.c.h.b16 %v1163
    %v1356 = vunpack.c.l.b16 %v1164
    %v1357 = vunpack.c.h.b16 %v1164
    %v1358 = vunpack.c.l.b16 %v1165
    %v1359 = vunpack.c.h.b16 %v1165
    %v1360 = vunpack.c.l.b16 %v1166
    %v1361 = vunpack.c.h.b16 %v1166
    %v1362 = vunpack.c.l.b16 %v1167
    %v1363 = vunpack.c.h.b16 %v1167
    %v1364 = vunpack.c.l.b16 %v1168
    %v1365 = vunpack.c.h.b16 %v1168
    %v1366 = vunpack.c.l.b16 %v1169
    %v1367 = vunpack.c.h.b16 %v1169
    %v1368 = vunpack.c.l.b16 %v1170
    %v1369 = vunpack.c.h.b16 %v1170
    %v1370 = vunpack.c.l.b16 %v1171
    %v1371 = vunpack.c.h.b16 %v1171
    %v1372 = vunpack.c.l.b16 %v1172
    %v1373 = vunpack.c.h.b16 %v1172
    %v1374 = vunpack.c.l.b16 %v1173
    %v1375 = vunpack.c.h.b16 %v1173
    %v1376 = vunpack.c.l.b16 %v1174
    %v1377 = vunpack.c.h.b16 %v1174
    %v1378 = vunpack.c.l.b16 %v1175
    %v1379 = vunpack.c.h.b16 %v1175
    %v1380 = vunpack.c.l.b16 %v1176
    %v1381 = vunpack.c.h.b16 %v1176
    %v1382 = vunpack.c.l.b16 %v1177
    %v1383 = vunpack.c.h.b16 %v1177
    %v1384 = vunpack.c.l.b16 %v1178
    %v1385 = vunpack.c.h.b16 %v1178
    %v1386 = vunpack.c.l.b16 %v1179
    %v1387 = vunpack.c.h.b16 %v1179
    %v1388 = vunpack.c.l.b16 %v1180
    %v1389 = vunpack.c.h.b16 %v1180
    %v1390 = vunpack.c.l.b16 %v1181
    %v1391 = vunpack.c.h.b16 %v1181
    %v1392 = vunpack.c.l.b16 %v1182
    %v1393 = vunpack.c.h.b16 %v1182
    %v1394 = vunpack.c.l.b16 %v1183
    %v1395 = vunpack.c.h.b16 %v1183
    %v1396 = vunpack.c.l.b16 %v1184
    %v1397 = vunpack.c.h.b16 %v1184
    %v1398 = vunpack.c.l.b16 %v1185
    %v1399 = vunpack.c.h.b16 %v1185
    %v1400 = vpack.c.b16 %v1276, %v1272
    %v1401 = vpack.c.b16 %v1277, %v1273
    %v1402 = vpack.c.b16 %v1278, %v1274
    %v1403 = vpack.c.b16 %v1279, %v1275
    %v1404 = vpack.c.b16 %v1284, %v1280
    %v1405 = vpack.c.b16 %v1285, %v1281
    %v1406 = vpack.c.b16 %v1286, %v1282
    %v1407 = vpack.c.b16 %v1287, %v1283
    %v1408 = vpack.c.b16 %v1292, %v1288
    %v1409 = vpack.c.b16 %v1293, %v1289
    %v1410 = vpack.c.b16 %v1294, %v1290
    %v1411 = vpack.c.b16 %v1295, %v1291
    %v1412 = vpack.c.b16 %v1300, %v1296
    %v1413 = vpack.c.b16 %v1301, %v1297
    %v1414 = vpack.c.b16 %v1302, %v1298
    %v1415 = vpack.c.b16 %v1303, %v1299
    %v1416 = vpack.c.b16 %v1308, %v1304
    %v1417 = vpack.c.b16 %v1309, %v1305
    %v1418 = vpack.c.b16 %v1310, %v1306
    %v1419 = vpack.c.b16 %v1311, %v1307
    %v1420 = vpack.c.b16 %v1316, %v1312
    %v1421 = vpack.c.b16 %v1317, %v1313
    %v1422 = vpack.c.b16 %v1318, %v1314
    %v1423 = vpack.c.b16 %v1319, %v1315
    %v1424 = vpack.c.b16 %v1324, %v1320
    %v1425 = vpack.c.b16 %v1325, %v1321
    %v1426 = vpack.c.b16 %v1326, %v1322
    %v1427 = vpack.c.b16 %v1327, %v1323
    %v1428 = vpack.c.b16 %v1332, %v1328
    %v1429 = vpack.c.b16 %v1333, %v1329
    %v1430 = vpack.c.b16 %v1334, %v1330
    %v1431 = vpack.c.b16 %v1335, %v1331
    %v1432 = vpack.c.b16 %v1340, %v1336
    %v1433 = vpack.c.b16 %v1341, %v1337
    %v1434 = vpack.c.b16 %v1342, %v1338
    %v1435 = vpack.c.b16 %v1343, %v1339
    %v1436 = vpack.c.b16 %v1348, %v1344
    %v1437 = vpack.c.b16 %v1349, %v1345
    %v1438 = vpack.c.b16 %v1350, %v1346
    %v1439 = vpack.c.b16 %v1351, %v1347
    %v1440 = vpack.c.b16 %v1356, %v1352
    %v1441 = vpack.c.b16 %v1357, %v1353
    %v1442 = vpack.c.b16 %v1358, %v1354
    %v1443 = vpack.c.b16 %v1359, %v1355
    %v1444 = vpack.c.b16 %v1364, %v1360
    %v1445 = vpack.c.b16 %v1365, %v1361
    %v1446 = vpack.c.b16 %v1366, %v1362
    %v1447 = vpack.c.b16 %v1367, %v1363
    %v1448 = vpack.c.b16 %v1372, %v1368
    %v1449 = vpack.c.b16 %v1373, %v1369
    %v1450 = vpack.c.b16 %v1374, %v1370
    %v1451 = vpack.c.b16 %v1375, %v1371
    %v1452 = vpack.c.b16 %v1380, %v1376
    %v1453 = vpack.c.b16 %v1381, %v1377
    %v1454 = vpack.c.b16 %v1382, %v1378
    %v1455 = vpack.c.b16 %v1383, %v1379
    %v1456 = vpack.c.b16 %v1388, %v1384
    %v1457 = vpack.c.b16 %v1389, %v1385
    %v1458 = vpack.c.b16 %v1390, %v1386
    %v1459 = vpack.c.b16 %v1391, %v1387
    %v1460 = vpack.c.b16 %v1396, %v1392
    %v1461 = vpack.c.b16 %v1397, %v1393
    %v1462 = vpack.c.b16 %v1398, %v1394
    %v1463 = vpack.c.b16 %v1399, %v1395
    %1528 = vmatprep.subr.bf16.mxu0 %v1429
    %1529 = vmatpush1.bf16.msra.mxu0 %v1428
    %1530 = vmatprep.subr.bf16.mxu0 %v1425
    %1531 = vmatpush1.bf16.msra.mxu0 %v1424
    %1532 = vmatprep.subr.bf16.mxu0 %v1421
    %1533 = vmatpush1.bf16.msra.mxu0 %v1420
    %1534 = vmatprep.subr.bf16.mxu0 %v1417
    %1535 = vmatpush1.bf16.msra.mxu0 %v1416
    %1536 = vmatprep.subr.bf16.mxu0 %v1413
    %1537 = vmatpush1.bf16.msra.mxu0 %v1412
    %1538 = vmatprep.subr.bf16.mxu0 %v1409
    %1539 = vmatpush1.bf16.msra.mxu0 %v1408
    %1540 = vmatprep.subr.bf16.mxu0 %v1405
    %1541 = vmatpush1.bf16.msra.mxu0 %v1404
    %1542 = vmatprep.subr.bf16.mxu0 %v1401
    %1543 = vmatpush1.bf16.msra.mxu0 %v1400
    %1544 = vmatprep.subr.bf16.mxu0 %v1461
    %1545 = vmatpush2.bf16.msra.mxu0 %v1460
    %1546 = vmatprep.subr.bf16.mxu0 %v1457
    %1547 = vmatpush2.bf16.msra.mxu0 %v1456
    %1548 = vmatprep.subr.bf16.mxu0 %v1453
    %1549 = vmatpush2.bf16.msra.mxu0 %v1452
    %1550 = vmatprep.subr.bf16.mxu0 %v1449
    %1551 = vmatpush2.bf16.msra.mxu0 %v1448
    %1552 = vmatprep.subr.bf16.mxu0 %v1445
    %1553 = vmatpush2.bf16.msra.mxu0 %v1444
    %1554 = vmatprep.subr.bf16.mxu0 %v1441
    %1555 = vmatpush2.bf16.msra.mxu0 %v1440
    %1556 = vmatprep.subr.bf16.mxu0 %v1437
    %1557 = vmatpush2.bf16.msra.mxu0 %v1436
    %1558 = vmatprep.subr.bf16.mxu0 %v1433
    %1559 = vmatpush2.bf16.msra.mxu0 %v1432
    %1560 = vmatprep.mubr.bf16.mxu0 %v1115
    %1561 = vmatmul.mubr.bf16.gmra.mxu0 %v1114
    %v1562 = vpop.f32.mrf.mxu0
    %v1563 = vadd.f32 %v1191, %v1562
    %v1564 = vpop.f32.mrf.mxu0
    %v1565 = vadd.f32 %v1195, %v1564
    %v1566 = vpop.f32.mrf.mxu0
    %v1567 = vadd.f32 %v1191, %v1566
    %v1568 = vpop.f32.mrf.mxu0
    %v1569 = vadd.f32 %v1195, %v1568
    %1570 = vmatprep.mubr.bf16.mxu0 %v1117
    %1571 = vmatmul.mubr.bf16.gmra.mxu0 %v1116
    %v1572 = vpop.f32.mrf.mxu0
    %v1573 = vadd.f32 %v1191, %v1572
    %v1574 = vpop.f32.mrf.mxu0
    %v1575 = vadd.f32 %v1195, %v1574
    %v1576 = vpop.f32.mrf.mxu0
    %v1577 = vadd.f32 %v1191, %v1576
    %v1578 = vpop.f32.mrf.mxu0
    %v1579 = vadd.f32 %v1195, %v1578
    %1580 = vmatprep.mubr.bf16.mxu0 %v1119
    %1581 = vmatmul.mubr.bf16.gmra.mxu0 %v1118
    %v1582 = vpop.f32.mrf.mxu0
    %v1583 = vadd.f32 %v1191, %v1582
    %v1584 = vpop.f32.mrf.mxu0
    %v1585 = vadd.f32 %v1195, %v1584
    %v1586 = vpop.f32.mrf.mxu0
    %v1587 = vadd.f32 %v1191, %v1586
    %v1588 = vpop.f32.mrf.mxu0
    %v1589 = vadd.f32 %v1195, %v1588
    %1590 = vmatprep.mubr.bf16.mxu0 %v1121
    %1591 = vmatmul.mubr.bf16.gmra.mxu0 %v1120
    %v1592 = vpop.f32.mrf.mxu0
    %v1593 = vadd.f32 %v1191, %v1592
    %v1594 = vpop.f32.mrf.mxu0
    %v1595 = vadd.f32 %v1195, %v1594
    %v1596 = vpop.f32.mrf.mxu0
    %v1597 = vadd.f32 %v1191, %v1596
    %v1598 = vpop.f32.mrf.mxu0
    %v1599 = vadd.f32 %v1195, %v1598
    %1600 = vdwg.mxu0
    %1601 = vmatprep.subr.bf16.mxu0 %v1431
    %1602 = vmatpush1.bf16.msra.mxu0 %v1430
    %1603 = vmatprep.subr.bf16.mxu0 %v1427
    %1604 = vmatpush1.bf16.msra.mxu0 %v1426
    %1605 = vmatprep.subr.bf16.mxu0 %v1423
    %1606 = vmatpush1.bf16.msra.mxu0 %v1422
    %1607 = vmatprep.subr.bf16.mxu0 %v1419
    %1608 = vmatpush1.bf16.msra.mxu0 %v1418
    %1609 = vmatprep.subr.bf16.mxu0 %v1415
    %1610 = vmatpush1.bf16.msra.mxu0 %v1414
    %1611 = vmatprep.subr.bf16.mxu0 %v1411
    %1612 = vmatpush1.bf16.msra.mxu0 %v1410
    %1613 = vmatprep.subr.bf16.mxu0 %v1407
    %1614 = vmatpush1.bf16.msra.mxu0 %v1406
    %1615 = vmatprep.subr.bf16.mxu0 %v1403
    %1616 = vmatpush1.bf16.msra.mxu0 %v1402
    %1617 = vmatprep.subr.bf16.mxu0 %v1463
    %1618 = vmatpush2.bf16.msra.mxu0 %v1462
    %1619 = vmatprep.subr.bf16.mxu0 %v1459
    %1620 = vmatpush2.bf16.msra.mxu0 %v1458
    %1621 = vmatprep.subr.bf16.mxu0 %v1455
    %1622 = vmatpush2.bf16.msra.mxu0 %v1454
    %1623 = vmatprep.subr.bf16.mxu0 %v1451
    %1624 = vmatpush2.bf16.msra.mxu0 %v1450
    %1625 = vmatprep.subr.bf16.mxu0 %v1447
    %1626 = vmatpush2.bf16.msra.mxu0 %v1446
    %1627 = vmatprep.subr.bf16.mxu0 %v1443
    %1628 = vmatpush2.bf16.msra.mxu0 %v1442
    %1629 = vmatprep.subr.bf16.mxu0 %v1439
    %1630 = vmatpush2.bf16.msra.mxu0 %v1438
    %1631 = vmatprep.subr.bf16.mxu0 %v1435
    %1632 = vmatpush2.bf16.msra.mxu0 %v1434
    %1633 = vmatprep.mubr.bf16.mxu0 %v1115
    %1634 = vmatmul.mubr.bf16.gmra.mxu0 %v1114
    %v1635 = vpop.f32.mrf.mxu0
    %v1636 = vadd.f32 %v1199, %v1635
    %v1637 = vpop.f32.mrf.mxu0
    %v1638 = vadd.f32 %v1203, %v1637
    %v1639 = vpop.f32.mrf.mxu0
    %v1640 = vadd.f32 %v1199, %v1639
    %v1641 = vpop.f32.mrf.mxu0
    %v1642 = vadd.f32 %v1203, %v1641
    %1643 = vmatprep.mubr.bf16.mxu0 %v1117
    %1644 = vmatmul.mubr.bf16.gmra.mxu0 %v1116
    %v1645 = vpop.f32.mrf.mxu0
    %v1646 = vadd.f32 %v1199, %v1645
    %v1647 = vpop.f32.mrf.mxu0
    %v1648 = vadd.f32 %v1203, %v1647
    %v1649 = vpop.f32.mrf.mxu0
    %v1650 = vadd.f32 %v1199, %v1649
    %v1651 = vpop.f32.mrf.mxu0
    %v1652 = vadd.f32 %v1203, %v1651
    %1653 = vmatprep.mubr.bf16.mxu0 %v1119
    %1654 = vmatmul.mubr.bf16.gmra.mxu0 %v1118
    %v1655 = vpop.f32.mrf.mxu0
    %v1656 = vadd.f32 %v1199, %v1655
    %v1657 = vpop.f32.mrf.mxu0
    %v1658 = vadd.f32 %v1203, %v1657
    %v1659 = vpop.f32.mrf.mxu0
    %v1660 = vadd.f32 %v1199, %v1659
    %v1661 = vpop.f32.mrf.mxu0
    %v1662 = vadd.f32 %v1203, %v1661
    %1663 = vmatprep.mubr.bf16.mxu0 %v1121
    %1664 = vmatmul.mubr.bf16.gmra.mxu0 %v1120
    %v1665 = vpop.f32.mrf.mxu0
    %v1666 = vadd.f32 %v1199, %v1665
    %v1667 = vpop.f32.mrf.mxu0
    %v1668 = vadd.f32 %v1203, %v1667
    %v1669 = vpop.f32.mrf.mxu0
    %v1670 = vadd.f32 %v1199, %v1669
    %v1671 = vpop.f32.mrf.mxu0
    %v1672 = vadd.f32 %v1203, %v1671
    %1673 = vdwg.mxu0
    %v1678 = vcombine.low %v1067, %v1069
    %v1679 = vcombine.high %v1067, %v1069
    %v1680 = vcombine.low %v1108, %v1110
    %v1681 = vcombine.high %v1108, %v1110
    %v1683 = vunpack.c.l.s4 1966171168
    %v1684 = vunpack.c.0.s8 %v1683
    %v1685 = vlaneseq
    %v1686 = vshrl.u32 %v1685, 7
    %v1687 = vsub.s32 %v1684, %v1686
    %v1688 = vrot.slane %v1678, %v1687
    %v1690 = vunpack.c.l.s4 1966171168
    %v1691 = vunpack.c.0.s8 %v1690
    %v1692 = vlaneseq
    %v1693 = vshrl.u32 %v1692, 7
    %v1694 = vsub.s32 %v1691, %v1693
    %v1695 = vrot.slane %v1679, %v1694
    %v1697 = vunpack.c.l.s4 1966171168
    %v1698 = vunpack.c.0.s8 %v1697
    %v1699 = vlaneseq
    %v1700 = vshrl.u32 %v1699, 7
    %v1701 = vsub.s32 %v1698, %v1700
    %v1702 = vrot.slane %v1680, %v1701
    %v1704 = vunpack.c.l.s4 1966171168
    %v1705 = vunpack.c.0.s8 %v1704
    %v1706 = vlaneseq
    %v1707 = vshrl.u32 %v1706, 7
    %v1708 = vsub.s32 %v1705, %v1707
    %v1709 = vrot.slane %v1681, %v1708
    %v1710 = vcombine.low %v1688, %v1702
    %v1711 = vcombine.high %v1688, %v1702
    %v1712 = vcombine.low %v1695, %v1709
    %v1713 = vcombine.high %v1695, %v1709
    %v1715 = vunpack.c.l.s4 1966171168
    %v1716 = vunpack.c.0.s8 %v1715
    %v1717 = vlaneseq
    %v1718 = vshrl.u32 %v1717, 7
    %v1719 = vsub.s32 %v1716, %v1718
    %v1720 = vrot.slane %v1710, %v1719
    %v1722 = vunpack.c.l.s4 1966171168
    %v1723 = vunpack.c.0.s8 %v1722
    %v1724 = vlaneseq
    %v1725 = vshrl.u32 %v1724, 7
    %v1726 = vsub.s32 %v1723, %v1725
    %v1727 = vrot.slane %v1712, %v1726
    %v1729 = vunpack.c.l.s4 1966171168
    %v1730 = vunpack.c.0.s8 %v1729
    %v1731 = vlaneseq
    %v1732 = vshrl.u32 %v1731, 7
    %v1733 = vsub.s32 %v1730, %v1732
    %v1734 = vrot.slane %v1711, %v1733
    %v1736 = vunpack.c.l.s4 1966171168
    %v1737 = vunpack.c.0.s8 %v1736
    %v1738 = vlaneseq
    %v1739 = vshrl.u32 %v1738, 7
    %v1740 = vsub.s32 %v1737, %v1739
    %v1741 = vrot.slane %v1713, %v1740
    %v1742 = vcombine.high %v1720, %v1720
    %v1743 = vcombine.high %v1727, %v1727
    %v1744 = vcombine.high %v1734, %v1734
    %v1745 = vcombine.high %v1741, %v1741
    %v1746 = vlaneseq
    %v1747 = vshrl.u32 %v1746, 7
    %v1748 = vsub.s32 0, %v1747
    %v1749 = vrot.slane %v1720, %v1748
    %v1750 = vlaneseq
    %v1751 = vshrl.u32 %v1750, 7
    %v1752 = vsub.s32 1, %v1751
    %v1753 = vrot.slane %v1720, %v1752
    %v1754 = vlaneseq
    %v1755 = vshrl.u32 %v1754, 7
    %v1756 = vsub.s32 2, %v1755
    %v1757 = vrot.slane %v1720, %v1756
    %v1758 = vlaneseq
    %v1759 = vshrl.u32 %v1758, 7
    %v1760 = vsub.s32 3, %v1759
    %v1761 = vrot.slane %v1720, %v1760
    %v1762 = vlaneseq
    %v1763 = vshrl.u32 %v1762, 7
    %v1764 = vsub.s32 0, %v1763
    %v1765 = vrot.slane %v1734, %v1764
    %v1766 = vlaneseq
    %v1767 = vshrl.u32 %v1766, 7
    %v1768 = vsub.s32 1, %v1767
    %v1769 = vrot.slane %v1734, %v1768
    %v1770 = vlaneseq
    %v1771 = vshrl.u32 %v1770, 7
    %v1772 = vsub.s32 2, %v1771
    %v1773 = vrot.slane %v1734, %v1772
    %v1774 = vlaneseq
    %v1775 = vshrl.u32 %v1774, 7
    %v1776 = vsub.s32 3, %v1775
    %v1777 = vrot.slane %v1734, %v1776
    %v1778 = vlaneseq
    %v1779 = vshrl.u32 %v1778, 7
    %v1780 = vsub.s32 0, %v1779
    %v1781 = vrot.slane %v1742, %v1780
    %v1782 = vlaneseq
    %v1783 = vshrl.u32 %v1782, 7
    %v1784 = vsub.s32 1, %v1783
    %v1785 = vrot.slane %v1742, %v1784
    %v1786 = vlaneseq
    %v1787 = vshrl.u32 %v1786, 7
    %v1788 = vsub.s32 2, %v1787
    %v1789 = vrot.slane %v1742, %v1788
    %v1790 = vlaneseq
    %v1791 = vshrl.u32 %v1790, 7
    %v1792 = vsub.s32 3, %v1791
    %v1793 = vrot.slane %v1742, %v1792
    %v1794 = vlaneseq
    %v1795 = vshrl.u32 %v1794, 7
    %v1796 = vsub.s32 0, %v1795
    %v1797 = vrot.slane %v1744, %v1796
    %v1798 = vlaneseq
    %v1799 = vshrl.u32 %v1798, 7
    %v1800 = vsub.s32 1, %v1799
    %v1801 = vrot.slane %v1744, %v1800
    %v1802 = vlaneseq
    %v1803 = vshrl.u32 %v1802, 7
    %v1804 = vsub.s32 2, %v1803
    %v1805 = vrot.slane %v1744, %v1804
    %v1806 = vlaneseq
    %v1807 = vshrl.u32 %v1806, 7
    %v1808 = vsub.s32 3, %v1807
    %v1809 = vrot.slane %v1744, %v1808
    %v1810 = vlaneseq
    %v1811 = vshrl.u32 %v1810, 7
    %v1812 = vsub.s32 0, %v1811
    %v1813 = vrot.slane %v1727, %v1812
    %v1814 = vlaneseq
    %v1815 = vshrl.u32 %v1814, 7
    %v1816 = vsub.s32 1, %v1815
    %v1817 = vrot.slane %v1727, %v1816
    %v1818 = vlaneseq
    %v1819 = vshrl.u32 %v1818, 7
    %v1820 = vsub.s32 2, %v1819
    %v1821 = vrot.slane %v1727, %v1820
    %v1822 = vlaneseq
    %v1823 = vshrl.u32 %v1822, 7
    %v1824 = vsub.s32 3, %v1823
    %v1825 = vrot.slane %v1727, %v1824
    %v1826 = vlaneseq
    %v1827 = vshrl.u32 %v1826, 7
    %v1828 = vsub.s32 0, %v1827
    %v1829 = vrot.slane %v1741, %v1828
    %v1830 = vlaneseq
    %v1831 = vshrl.u32 %v1830, 7
    %v1832 = vsub.s32 1, %v1831
    %v1833 = vrot.slane %v1741, %v1832
    %v1834 = vlaneseq
    %v1835 = vshrl.u32 %v1834, 7
    %v1836 = vsub.s32 2, %v1835
    %v1837 = vrot.slane %v1741, %v1836
    %v1838 = vlaneseq
    %v1839 = vshrl.u32 %v1838, 7
    %v1840 = vsub.s32 3, %v1839
    %v1841 = vrot.slane %v1741, %v1840
    %v1842 = vlaneseq
    %v1843 = vshrl.u32 %v1842, 7
    %v1844 = vsub.s32 0, %v1843
    %v1845 = vrot.slane %v1743, %v1844
    %v1846 = vlaneseq
    %v1847 = vshrl.u32 %v1846, 7
    %v1848 = vsub.s32 1, %v1847
    %v1849 = vrot.slane %v1743, %v1848
    %v1850 = vlaneseq
    %v1851 = vshrl.u32 %v1850, 7
    %v1852 = vsub.s32 2, %v1851
    %v1853 = vrot.slane %v1743, %v1852
    %v1854 = vlaneseq
    %v1855 = vshrl.u32 %v1854, 7
    %v1856 = vsub.s32 3, %v1855
    %v1857 = vrot.slane %v1743, %v1856
    %v1858 = vlaneseq
    %v1859 = vshrl.u32 %v1858, 7
    %v1860 = vsub.s32 0, %v1859
    %v1861 = vrot.slane %v1745, %v1860
    %v1862 = vlaneseq
    %v1863 = vshrl.u32 %v1862, 7
    %v1864 = vsub.s32 1, %v1863
    %v1865 = vrot.slane %v1745, %v1864
    %v1866 = vlaneseq
    %v1867 = vshrl.u32 %v1866, 7
    %v1868 = vsub.s32 2, %v1867
    %v1869 = vrot.slane %v1745, %v1868
    %v1870 = vlaneseq
    %v1871 = vshrl.u32 %v1870, 7
    %v1872 = vsub.s32 3, %v1871
    %v1873 = vrot.slane %v1745, %v1872
    %v1906 = vadd.f32 %v1563, %v1749
    %v1907 = vadd.f32 %v1565, %v1753
    %v1908 = vadd.f32 %v1636, %v1757
    %v1909 = vadd.f32 %v1638, %v1761
    %v1910 = vadd.f32 %v1567, %v1765
    %v1911 = vadd.f32 %v1569, %v1769
    %v1912 = vadd.f32 %v1640, %v1773
    %v1913 = vadd.f32 %v1642, %v1777
    %v1914 = vadd.f32 %v1573, %v1781
    %v1915 = vadd.f32 %v1575, %v1785
    %v1916 = vadd.f32 %v1646, %v1789
    %v1917 = vadd.f32 %v1648, %v1793
    %v1918 = vadd.f32 %v1577, %v1797
    %v1919 = vadd.f32 %v1579, %v1801
    %v1920 = vadd.f32 %v1650, %v1805
    %v1921 = vadd.f32 %v1652, %v1809
    %v1922 = vadd.f32 %v1583, %v1813
    %v1923 = vadd.f32 %v1585, %v1817
    %v1924 = vadd.f32 %v1656, %v1821
    %v1925 = vadd.f32 %v1658, %v1825
    %v1926 = vadd.f32 %v1587, %v1829
    %v1927 = vadd.f32 %v1589, %v1833
    %v1928 = vadd.f32 %v1660, %v1837
    %v1929 = vadd.f32 %v1662, %v1841
    %v1930 = vadd.f32 %v1593, %v1845
    %v1931 = vadd.f32 %v1595, %v1849
    %v1932 = vadd.f32 %v1666, %v1853
    %v1933 = vadd.f32 %v1668, %v1857
    %v1934 = vadd.f32 %v1597, %v1861
    %v1935 = vadd.f32 %v1599, %v1865
    %v1936 = vadd.f32 %v1670, %v1869
    %v1937 = vadd.f32 %v1672, %v1873
    %v1938 = vmax.f32 %v1906, 0.0
    %v1939 = vmax.f32 %v1907, 0.0
    %v1940 = vmax.f32 %v1908, 0.0
    %v1941 = vmax.f32 %v1909, 0.0
    %v1942 = vmax.f32 %v1910, 0.0
    %v1943 = vmax.f32 %v1911, 0.0
    %v1944 = vmax.f32 %v1912, 0.0
    %v1945 = vmax.f32 %v1913, 0.0
    %v1946 = vmax.f32 %v1914, 0.0
    %v1947 = vmax.f32 %v1915, 0.0
    %v1948 = vmax.f32 %v1916, 0.0
    %v1949 = vmax.f32 %v1917, 0.0
    %v1950 = vmax.f32 %v1918, 0.0
    %v1951 = vmax.f32 %v1919, 0.0
    %v1952 = vmax.f32 %v1920, 0.0
    %v1953 = vmax.f32 %v1921, 0.0
    %v1954 = vmax.f32 %v1922, 0.0
    %v1955 = vmax.f32 %v1923, 0.0
    %v1956 = vmax.f32 %v1924, 0.0
    %v1957 = vmax.f32 %v1925, 0.0
    %v1958 = vmax.f32 %v1926, 0.0
    %v1959 = vmax.f32 %v1927, 0.0
    %v1960 = vmax.f32 %v1928, 0.0
    %v1961 = vmax.f32 %v1929, 0.0
    %v1962 = vmax.f32 %v1930, 0.0
    %v1963 = vmax.f32 %v1931, 0.0
    %v1964 = vmax.f32 %v1932, 0.0
    %v1965 = vmax.f32 %v1933, 0.0
    %v1966 = vmax.f32 %v1934, 0.0
    %v1967 = vmax.f32 %v1935, 0.0
    %v1968 = vmax.f32 %v1936, 0.0
    %v1969 = vmax.f32 %v1937, 0.0
    %v1970 = vpack.c.bf16 %v1942, %v1938
    %v1971 = vpack.c.bf16 %v1943, %v1939
    %v1972 = vpack.c.bf16 %v1944, %v1940
    %v1973 = vpack.c.bf16 %v1945, %v1941
    %v1974 = vpack.c.bf16 %v1950, %v1946
    %v1975 = vpack.c.bf16 %v1951, %v1947
    %v1976 = vpack.c.bf16 %v1952, %v1948
    %v1977 = vpack.c.bf16 %v1953, %v1949
    %v1978 = vpack.c.bf16 %v1958, %v1954
    %v1979 = vpack.c.bf16 %v1959, %v1955
    %v1980 = vpack.c.bf16 %v1960, %v1956
    %v1981 = vpack.c.bf16 %v1961, %v1957
    %v1982 = vpack.c.bf16 %v1966, %v1962
    %v1983 = vpack.c.bf16 %v1967, %v1963
    %v1984 = vpack.c.bf16 %v1968, %v1964
    %v1985 = vpack.c.bf16 %v1969, %v1965
    %v1986 = vld [vmem:[#allocation8] sm:$0xff]
    %v1987 = vld [vmem:[#allocation8 + $0x8] sm:$0xff]
    %v1988 = vld [vmem:[#allocation8 + $0x10] sm:$0xff]
    %v1989 = vld [vmem:[#allocation8 + $0x18] sm:$0xff]
    %v1990 = vld [vmem:[#allocation8 + $0x20] sm:$0xff]
    %v1991 = vld [vmem:[#allocation8 + $0x28] sm:$0xff]
    %v1992 = vld [vmem:[#allocation8 + $0x30] sm:$0xff]
    %v1993 = vld [vmem:[#allocation8 + $0x38] sm:$0xff]
    %v1994 = vld [vmem:[#allocation8 + $0x40] sm:$0xff]
    %v1995 = vld [vmem:[#allocation8 + $0x48] sm:$0xff]
    %v1996 = vld [vmem:[#allocation8 + $0x50] sm:$0xff]
    %v1997 = vld [vmem:[#allocation8 + $0x58] sm:$0xff]
    %v1998 = vld [vmem:[#allocation8 + $0x60] sm:$0xff]
    %v1999 = vld [vmem:[#allocation8 + $0x68] sm:$0xff]
    %v2000 = vld [vmem:[#allocation8 + $0x70] sm:$0xff]
    %v2001 = vld [vmem:[#allocation8 + $0x78] sm:$0xff]
    %v2002 = vld [vmem:[#allocation8 + $0x80] sm:$0xff]
    %v2003 = vld [vmem:[#allocation8 + $0x88] sm:$0xff]
    %v2004 = vld [vmem:[#allocation8 + $0x90] sm:$0xff]
    %v2005 = vld [vmem:[#allocation8 + $0x98] sm:$0xff]
    %v2006 = vld [vmem:[#allocation8 + $0xa0] sm:$0xff]
    %v2007 = vld [vmem:[#allocation8 + $0xa8] sm:$0xff]
    %v2008 = vld [vmem:[#allocation8 + $0xb0] sm:$0xff]
    %v2009 = vld [vmem:[#allocation8 + $0xb8] sm:$0xff]
    %v2010 = vld [vmem:[#allocation8 + $0xc0] sm:$0xff]
    %v2011 = vld [vmem:[#allocation8 + $0xc8] sm:$0xff]
    %v2012 = vld [vmem:[#allocation8 + $0xd0] sm:$0xff]
    %v2013 = vld [vmem:[#allocation8 + $0xd8] sm:$0xff]
    %v2014 = vld [vmem:[#allocation8 + $0xe0] sm:$0xff]
    %v2015 = vld [vmem:[#allocation8 + $0xe8] sm:$0xff]
    %v2016 = vld [vmem:[#allocation8 + $0xf0] sm:$0xff]
    %v2017 = vld [vmem:[#allocation8 + $0xf8] sm:$0xff]
    %v2018 = vld [vmem:[#allocation8 + $0x100] sm:$0xff]
    %v2019 = vld [vmem:[#allocation8 + $0x108] sm:$0xff]
    %v2020 = vld [vmem:[#allocation8 + $0x110] sm:$0xff]
    %v2021 = vld [vmem:[#allocation8 + $0x118] sm:$0xff]
    %v2022 = vld [vmem:[#allocation8 + $0x120] sm:$0xff]
    %v2023 = vld [vmem:[#allocation8 + $0x128] sm:$0xff]
    %v2024 = vld [vmem:[#allocation8 + $0x130] sm:$0xff]
    %v2025 = vld [vmem:[#allocation8 + $0x138] sm:$0xff]
    %v2026 = vld [vmem:[#allocation8 + $0x140] sm:$0xff]
    %v2027 = vld [vmem:[#allocation8 + $0x148] sm:$0xff]
    %v2028 = vld [vmem:[#allocation8 + $0x150] sm:$0xff]
    %v2029 = vld [vmem:[#allocation8 + $0x158] sm:$0xff]
    %v2030 = vld [vmem:[#allocation8 + $0x160] sm:$0xff]
    %v2031 = vld [vmem:[#allocation8 + $0x168] sm:$0xff]
    %v2032 = vld [vmem:[#allocation8 + $0x170] sm:$0xff]
    %v2033 = vld [vmem:[#allocation8 + $0x178] sm:$0xff]
    %v2034 = vld [vmem:[#allocation8 + $0x180] sm:$0xff]
    %v2035 = vld [vmem:[#allocation8 + $0x188] sm:$0xff]
    %v2036 = vld [vmem:[#allocation8 + $0x190] sm:$0xff]
    %v2037 = vld [vmem:[#allocation8 + $0x198] sm:$0xff]
    %v2038 = vld [vmem:[#allocation8 + $0x1a0] sm:$0xff]
    %v2039 = vld [vmem:[#allocation8 + $0x1a8] sm:$0xff]
    %v2040 = vld [vmem:[#allocation8 + $0x1b0] sm:$0xff]
    %v2041 = vld [vmem:[#allocation8 + $0x1b8] sm:$0xff]
    %v2042 = vld [vmem:[#allocation8 + $0x1c0] sm:$0xff]
    %v2043 = vld [vmem:[#allocation8 + $0x1c8] sm:$0xff]
    %v2044 = vld [vmem:[#allocation8 + $0x1d0] sm:$0xff]
    %v2045 = vld [vmem:[#allocation8 + $0x1d8] sm:$0xff]
    %v2046 = vld [vmem:[#allocation8 + $0x1e0] sm:$0xff]
    %v2047 = vld [vmem:[#allocation8 + $0x1e8] sm:$0xff]
    %v2048 = vld [vmem:[#allocation8 + $0x1f0] sm:$0xff]
    %v2049 = vld [vmem:[#allocation8 + $0x1f8] sm:$0xff]
    %v2050 = vld [vmem:[%s11] sm:$0x3]
    %v2052 = vlaneseq
    %v2053 = vshrl.u32 %v2052, 7
    %v2054 = vsub.s32 0, %v2053
    %v2055 = vrot.slane %v2050, %v2054
    %v2056 = vlaneseq
    %v2057 = vshrl.u32 %v2056, 7
    %v2058 = vsub.s32 1, %v2057
    %v2059 = vrot.slane %v2050, %v2058
    %v2126 = vunpack.c.l.b16 %v1986
    %v2127 = vunpack.c.h.b16 %v1986
    %v2128 = vunpack.c.l.b16 %v1987
    %v2129 = vunpack.c.h.b16 %v1987
    %v2130 = vunpack.c.l.b16 %v1988
    %v2131 = vunpack.c.h.b16 %v1988
    %v2132 = vunpack.c.l.b16 %v1989
    %v2133 = vunpack.c.h.b16 %v1989
    %v2134 = vunpack.c.l.b16 %v1990
    %v2135 = vunpack.c.h.b16 %v1990
    %v2136 = vunpack.c.l.b16 %v1991
    %v2137 = vunpack.c.h.b16 %v1991
    %v2138 = vunpack.c.l.b16 %v1992
    %v2139 = vunpack.c.h.b16 %v1992
    %v2140 = vunpack.c.l.b16 %v1993
    %v2141 = vunpack.c.h.b16 %v1993
    %v2142 = vunpack.c.l.b16 %v1994
    %v2143 = vunpack.c.h.b16 %v1994
    %v2144 = vunpack.c.l.b16 %v1995
    %v2145 = vunpack.c.h.b16 %v1995
    %v2146 = vunpack.c.l.b16 %v1996
    %v2147 = vunpack.c.h.b16 %v1996
    %v2148 = vunpack.c.l.b16 %v1997
    %v2149 = vunpack.c.h.b16 %v1997
    %v2150 = vunpack.c.l.b16 %v1998
    %v2151 = vunpack.c.h.b16 %v1998
    %v2152 = vunpack.c.l.b16 %v1999
    %v2153 = vunpack.c.h.b16 %v1999
    %v2154 = vunpack.c.l.b16 %v2000
    %v2155 = vunpack.c.h.b16 %v2000
    %v2156 = vunpack.c.l.b16 %v2001
    %v2157 = vunpack.c.h.b16 %v2001
    %v2158 = vunpack.c.l.b16 %v2002
    %v2159 = vunpack.c.h.b16 %v2002
    %v2160 = vunpack.c.l.b16 %v2003
    %v2161 = vunpack.c.h.b16 %v2003
    %v2162 = vunpack.c.l.b16 %v2004
    %v2163 = vunpack.c.h.b16 %v2004
    %v2164 = vunpack.c.l.b16 %v2005
    %v2165 = vunpack.c.h.b16 %v2005
    %v2166 = vunpack.c.l.b16 %v2006
    %v2167 = vunpack.c.h.b16 %v2006
    %v2168 = vunpack.c.l.b16 %v2007
    %v2169 = vunpack.c.h.b16 %v2007
    %v2170 = vunpack.c.l.b16 %v2008
    %v2171 = vunpack.c.h.b16 %v2008
    %v2172 = vunpack.c.l.b16 %v2009
    %v2173 = vunpack.c.h.b16 %v2009
    %v2174 = vunpack.c.l.b16 %v2010
    %v2175 = vunpack.c.h.b16 %v2010
    %v2176 = vunpack.c.l.b16 %v2011
    %v2177 = vunpack.c.h.b16 %v2011
    %v2178 = vunpack.c.l.b16 %v2012
    %v2179 = vunpack.c.h.b16 %v2012
    %v2180 = vunpack.c.l.b16 %v2013
    %v2181 = vunpack.c.h.b16 %v2013
    %v2182 = vunpack.c.l.b16 %v2014
    %v2183 = vunpack.c.h.b16 %v2014
    %v2184 = vunpack.c.l.b16 %v2015
    %v2185 = vunpack.c.h.b16 %v2015
    %v2186 = vunpack.c.l.b16 %v2016
    %v2187 = vunpack.c.h.b16 %v2016
    %v2188 = vunpack.c.l.b16 %v2017
    %v2189 = vunpack.c.h.b16 %v2017
    %v2190 = vunpack.c.l.b16 %v2018
    %v2191 = vunpack.c.h.b16 %v2018
    %v2192 = vunpack.c.l.b16 %v2019
    %v2193 = vunpack.c.h.b16 %v2019
    %v2194 = vunpack.c.l.b16 %v2020
    %v2195 = vunpack.c.h.b16 %v2020
    %v2196 = vunpack.c.l.b16 %v2021
    %v2197 = vunpack.c.h.b16 %v2021
    %v2198 = vunpack.c.l.b16 %v2022
    %v2199 = vunpack.c.h.b16 %v2022
    %v2200 = vunpack.c.l.b16 %v2023
    %v2201 = vunpack.c.h.b16 %v2023
    %v2202 = vunpack.c.l.b16 %v2024
    %v2203 = vunpack.c.h.b16 %v2024
    %v2204 = vunpack.c.l.b16 %v2025
    %v2205 = vunpack.c.h.b16 %v2025
    %v2206 = vunpack.c.l.b16 %v2026
    %v2207 = vunpack.c.h.b16 %v2026
    %v2208 = vunpack.c.l.b16 %v2027
    %v2209 = vunpack.c.h.b16 %v2027
    %v2210 = vunpack.c.l.b16 %v2028
    %v2211 = vunpack.c.h.b16 %v2028
    %v2212 = vunpack.c.l.b16 %v2029
    %v2213 = vunpack.c.h.b16 %v2029
    %v2214 = vunpack.c.l.b16 %v2030
    %v2215 = vunpack.c.h.b16 %v2030
    %v2216 = vunpack.c.l.b16 %v2031
    %v2217 = vunpack.c.h.b16 %v2031
    %v2218 = vunpack.c.l.b16 %v2032
    %v2219 = vunpack.c.h.b16 %v2032
    %v2220 = vunpack.c.l.b16 %v2033
    %v2221 = vunpack.c.h.b16 %v2033
    %v2222 = vunpack.c.l.b16 %v2034
    %v2223 = vunpack.c.h.b16 %v2034
    %v2224 = vunpack.c.l.b16 %v2035
    %v2225 = vunpack.c.h.b16 %v2035
    %v2226 = vunpack.c.l.b16 %v2036
    %v2227 = vunpack.c.h.b16 %v2036
    %v2228 = vunpack.c.l.b16 %v2037
    %v2229 = vunpack.c.h.b16 %v2037
    %v2230 = vunpack.c.l.b16 %v2038
    %v2231 = vunpack.c.h.b16 %v2038
    %v2232 = vunpack.c.l.b16 %v2039
    %v2233 = vunpack.c.h.b16 %v2039
    %v2234 = vunpack.c.l.b16 %v2040
    %v2235 = vunpack.c.h.b16 %v2040
    %v2236 = vunpack.c.l.b16 %v2041
    %v2237 = vunpack.c.h.b16 %v2041
    %v2238 = vunpack.c.l.b16 %v2042
    %v2239 = vunpack.c.h.b16 %v2042
    %v2240 = vunpack.c.l.b16 %v2043
    %v2241 = vunpack.c.h.b16 %v2043
    %v2242 = vunpack.c.l.b16 %v2044
    %v2243 = vunpack.c.h.b16 %v2044
    %v2244 = vunpack.c.l.b16 %v2045
    %v2245 = vunpack.c.h.b16 %v2045
    %v2246 = vunpack.c.l.b16 %v2046
    %v2247 = vunpack.c.h.b16 %v2046
    %v2248 = vunpack.c.l.b16 %v2047
    %v2249 = vunpack.c.h.b16 %v2047
    %v2250 = vunpack.c.l.b16 %v2048
    %v2251 = vunpack.c.h.b16 %v2048
    %v2252 = vunpack.c.l.b16 %v2049
    %v2253 = vunpack.c.h.b16 %v2049
    %v2254 = vpack.c.b16 %v2128, %v2126
    %v2255 = vpack.c.b16 %v2129, %v2127
    %v2256 = vpack.c.b16 %v2132, %v2130
    %v2257 = vpack.c.b16 %v2133, %v2131
    %v2258 = vpack.c.b16 %v2136, %v2134
    %v2259 = vpack.c.b16 %v2137, %v2135
    %v2260 = vpack.c.b16 %v2140, %v2138
    %v2261 = vpack.c.b16 %v2141, %v2139
    %v2262 = vpack.c.b16 %v2144, %v2142
    %v2263 = vpack.c.b16 %v2145, %v2143
    %v2264 = vpack.c.b16 %v2148, %v2146
    %v2265 = vpack.c.b16 %v2149, %v2147
    %v2266 = vpack.c.b16 %v2152, %v2150
    %v2267 = vpack.c.b16 %v2153, %v2151
    %v2268 = vpack.c.b16 %v2156, %v2154
    %v2269 = vpack.c.b16 %v2157, %v2155
    %v2270 = vpack.c.b16 %v2160, %v2158
    %v2271 = vpack.c.b16 %v2161, %v2159
    %v2272 = vpack.c.b16 %v2164, %v2162
    %v2273 = vpack.c.b16 %v2165, %v2163
    %v2274 = vpack.c.b16 %v2168, %v2166
    %v2275 = vpack.c.b16 %v2169, %v2167
    %v2276 = vpack.c.b16 %v2172, %v2170
    %v2277 = vpack.c.b16 %v2173, %v2171
    %v2278 = vpack.c.b16 %v2176, %v2174
    %v2279 = vpack.c.b16 %v2177, %v2175
    %v2280 = vpack.c.b16 %v2180, %v2178
    %v2281 = vpack.c.b16 %v2181, %v2179
    %v2282 = vpack.c.b16 %v2184, %v2182
    %v2283 = vpack.c.b16 %v2185, %v2183
    %v2284 = vpack.c.b16 %v2188, %v2186
    %v2285 = vpack.c.b16 %v2189, %v2187
    %v2286 = vpack.c.b16 %v2192, %v2190
    %v2287 = vpack.c.b16 %v2193, %v2191
    %v2288 = vpack.c.b16 %v2196, %v2194
    %v2289 = vpack.c.b16 %v2197, %v2195
    %v2290 = vpack.c.b16 %v2200, %v2198
    %v2291 = vpack.c.b16 %v2201, %v2199
    %v2292 = vpack.c.b16 %v2204, %v2202
    %v2293 = vpack.c.b16 %v2205, %v2203
    %v2294 = vpack.c.b16 %v2208, %v2206
    %v2295 = vpack.c.b16 %v2209, %v2207
    %v2296 = vpack.c.b16 %v2212, %v2210
    %v2297 = vpack.c.b16 %v2213, %v2211
    %v2298 = vpack.c.b16 %v2216, %v2214
    %v2299 = vpack.c.b16 %v2217, %v2215
    %v2300 = vpack.c.b16 %v2220, %v2218
    %v2301 = vpack.c.b16 %v2221, %v2219
    %v2302 = vpack.c.b16 %v2224, %v2222
    %v2303 = vpack.c.b16 %v2225, %v2223
    %v2304 = vpack.c.b16 %v2228, %v2226
    %v2305 = vpack.c.b16 %v2229, %v2227
    %v2306 = vpack.c.b16 %v2232, %v2230
    %v2307 = vpack.c.b16 %v2233, %v2231
    %v2308 = vpack.c.b16 %v2236, %v2234
    %v2309 = vpack.c.b16 %v2237, %v2235
    %v2310 = vpack.c.b16 %v2240, %v2238
    %v2311 = vpack.c.b16 %v2241, %v2239
    %v2312 = vpack.c.b16 %v2244, %v2242
    %v2313 = vpack.c.b16 %v2245, %v2243
    %v2314 = vpack.c.b16 %v2248, %v2246
    %v2315 = vpack.c.b16 %v2249, %v2247
    %v2316 = vpack.c.b16 %v2252, %v2250
    %v2317 = vpack.c.b16 %v2253, %v2251
    %2382 = vmatprep.subr.bf16.mxu0 %v2269
    %2383 = vmatpush1.bf16.msra.mxu0 %v2268
    %2384 = vmatprep.subr.bf16.mxu0 %v2267
    %2385 = vmatpush1.bf16.msra.mxu0 %v2266
    %2386 = vmatprep.subr.bf16.mxu0 %v2265
    %2387 = vmatpush1.bf16.msra.mxu0 %v2264
    %2388 = vmatprep.subr.bf16.mxu0 %v2263
    %2389 = vmatpush1.bf16.msra.mxu0 %v2262
    %2390 = vmatprep.subr.bf16.mxu0 %v2261
    %2391 = vmatpush1.bf16.msra.mxu0 %v2260
    %2392 = vmatprep.subr.bf16.mxu0 %v2259
    %2393 = vmatpush1.bf16.msra.mxu0 %v2258
    %2394 = vmatprep.subr.bf16.mxu0 %v2257
    %2395 = vmatpush1.bf16.msra.mxu0 %v2256
    %2396 = vmatprep.subr.bf16.mxu0 %v2255
    %2397 = vmatpush1.bf16.msra.mxu0 %v2254
    %2398 = vmatprep.subr.bf16.mxu0 %v2285
    %2399 = vmatpush2.bf16.msra.mxu0 %v2284
    %2400 = vmatprep.subr.bf16.mxu0 %v2283
    %2401 = vmatpush2.bf16.msra.mxu0 %v2282
    %2402 = vmatprep.subr.bf16.mxu0 %v2281
    %2403 = vmatpush2.bf16.msra.mxu0 %v2280
    %2404 = vmatprep.subr.bf16.mxu0 %v2279
    %2405 = vmatpush2.bf16.msra.mxu0 %v2278
    %2406 = vmatprep.subr.bf16.mxu0 %v2277
    %2407 = vmatpush2.bf16.msra.mxu0 %v2276
    %2408 = vmatprep.subr.bf16.mxu0 %v2275
    %2409 = vmatpush2.bf16.msra.mxu0 %v2274
    %2410 = vmatprep.subr.bf16.mxu0 %v2273
    %2411 = vmatpush2.bf16.msra.mxu0 %v2272
    %2412 = vmatprep.subr.bf16.mxu0 %v2271
    %2413 = vmatpush2.bf16.msra.mxu0 %v2270
    %2414 = vmatprep.mubr.bf16.mxu0 %v1971
    %2415 = vmatmul.mubr.bf16.gmra.mxu0 %v1970
    %v2416 = vpop.f32.mrf.mxu0
    %v2417 = vadd.f32 %v2055, %v2416
    %v2418 = vpop.f32.mrf.mxu0
    %v2419 = vadd.f32 %v2059, %v2418
    %v2420 = vpop.f32.mrf.mxu0
    %v2421 = vadd.f32 %v2055, %v2420
    %v2422 = vpop.f32.mrf.mxu0
    %v2423 = vadd.f32 %v2059, %v2422
    %2424 = vmatprep.mubr.bf16.mxu0 %v1975
    %2425 = vmatmul.mubr.bf16.gmra.mxu0 %v1974
    %v2426 = vpop.f32.mrf.mxu0
    %v2427 = vadd.f32 %v2055, %v2426
    %v2428 = vpop.f32.mrf.mxu0
    %v2429 = vadd.f32 %v2059, %v2428
    %v2430 = vpop.f32.mrf.mxu0
    %v2431 = vadd.f32 %v2055, %v2430
    %v2432 = vpop.f32.mrf.mxu0
    %v2433 = vadd.f32 %v2059, %v2432
    %2434 = vmatprep.mubr.bf16.mxu0 %v1979
    %2435 = vmatmul.mubr.bf16.gmra.mxu0 %v1978
    %v2436 = vpop.f32.mrf.mxu0
    %v2437 = vadd.f32 %v2055, %v2436
    %v2438 = vpop.f32.mrf.mxu0
    %v2439 = vadd.f32 %v2059, %v2438
    %v2440 = vpop.f32.mrf.mxu0
    %v2441 = vadd.f32 %v2055, %v2440
    %v2442 = vpop.f32.mrf.mxu0
    %v2443 = vadd.f32 %v2059, %v2442
    %2444 = vmatprep.mubr.bf16.mxu0 %v1983
    %2445 = vmatmul.mubr.bf16.gmra.mxu0 %v1982
    %v2446 = vpop.f32.mrf.mxu0
    %v2447 = vadd.f32 %v2055, %v2446
    %v2448 = vpop.f32.mrf.mxu0
    %v2449 = vadd.f32 %v2059, %v2448
    %v2450 = vpop.f32.mrf.mxu0
    %v2451 = vadd.f32 %v2055, %v2450
    %v2452 = vpop.f32.mrf.mxu0
    %v2453 = vadd.f32 %v2059, %v2452
    %2454 = vdwg.mxu0
    %2455 = vmatprep.subr.bf16.mxu0 %v2301
    %2456 = vmatpush1.bf16.msra.mxu0 %v2300
    %2457 = vmatprep.subr.bf16.mxu0 %v2299
    %2458 = vmatpush1.bf16.msra.mxu0 %v2298
    %2459 = vmatprep.subr.bf16.mxu0 %v2297
    %2460 = vmatpush1.bf16.msra.mxu0 %v2296
    %2461 = vmatprep.subr.bf16.mxu0 %v2295
    %2462 = vmatpush1.bf16.msra.mxu0 %v2294
    %2463 = vmatprep.subr.bf16.mxu0 %v2293
    %2464 = vmatpush1.bf16.msra.mxu0 %v2292
    %2465 = vmatprep.subr.bf16.mxu0 %v2291
    %2466 = vmatpush1.bf16.msra.mxu0 %v2290
    %2467 = vmatprep.subr.bf16.mxu0 %v2289
    %2468 = vmatpush1.bf16.msra.mxu0 %v2288
    %2469 = vmatprep.subr.bf16.mxu0 %v2287
    %2470 = vmatpush1.bf16.msra.mxu0 %v2286
    %2471 = vmatprep.subr.bf16.mxu0 %v2317
    %2472 = vmatpush2.bf16.msra.mxu0 %v2316
    %2473 = vmatprep.subr.bf16.mxu0 %v2315
    %2474 = vmatpush2.bf16.msra.mxu0 %v2314
    %2475 = vmatprep.subr.bf16.mxu0 %v2313
    %2476 = vmatpush2.bf16.msra.mxu0 %v2312
    %2477 = vmatprep.subr.bf16.mxu0 %v2311
    %2478 = vmatpush2.bf16.msra.mxu0 %v2310
    %2479 = vmatprep.subr.bf16.mxu0 %v2309
    %2480 = vmatpush2.bf16.msra.mxu0 %v2308
    %2481 = vmatprep.subr.bf16.mxu0 %v2307
    %2482 = vmatpush2.bf16.msra.mxu0 %v2306
    %2483 = vmatprep.subr.bf16.mxu0 %v2305
    %2484 = vmatpush2.bf16.msra.mxu0 %v2304
    %2485 = vmatprep.subr.bf16.mxu0 %v2303
    %2486 = vmatpush2.bf16.msra.mxu0 %v2302
    %2487 = vmatprep.mubr.bf16.mxu0 %v1973
    %2488 = vmatmul.mubr.bf16.gmra.mxu0 %v1972
    %v2489 = vpop.f32.mrf.mxu0
    %v2490 = vadd.f32 %v2417, %v2489
    %v2491 = vpop.f32.mrf.mxu0
    %v2492 = vadd.f32 %v2419, %v2491
    %v2493 = vpop.f32.mrf.mxu0
    %v2494 = vadd.f32 %v2421, %v2493
    %v2495 = vpop.f32.mrf.mxu0
    %v2496 = vadd.f32 %v2423, %v2495
    %2497 = vmatprep.mubr.bf16.mxu0 %v1977
    %2498 = vmatmul.mubr.bf16.gmra.mxu0 %v1976
    %v2499 = vpop.f32.mrf.mxu0
    %v2500 = vadd.f32 %v2427, %v2499
    %v2501 = vpop.f32.mrf.mxu0
    %v2502 = vadd.f32 %v2429, %v2501
    %v2503 = vpop.f32.mrf.mxu0
    %v2504 = vadd.f32 %v2431, %v2503
    %v2505 = vpop.f32.mrf.mxu0
    %v2506 = vadd.f32 %v2433, %v2505
    %2507 = vmatprep.mubr.bf16.mxu0 %v1981
    %2508 = vmatmul.mubr.bf16.gmra.mxu0 %v1980
    %v2509 = vpop.f32.mrf.mxu0
    %v2510 = vadd.f32 %v2437, %v2509
    %v2511 = vpop.f32.mrf.mxu0
    %v2512 = vadd.f32 %v2439, %v2511
    %v2513 = vpop.f32.mrf.mxu0
    %v2514 = vadd.f32 %v2441, %v2513
    %v2515 = vpop.f32.mrf.mxu0
    %v2516 = vadd.f32 %v2443, %v2515
    %2517 = vmatprep.mubr.bf16.mxu0 %v1985
    %2518 = vmatmul.mubr.bf16.gmra.mxu0 %v1984
    %v2519 = vpop.f32.mrf.mxu0
    %v2520 = vadd.f32 %v2447, %v2519
    %v2521 = vpop.f32.mrf.mxu0
    %v2522 = vadd.f32 %v2449, %v2521
    %v2523 = vpop.f32.mrf.mxu0
    %v2524 = vadd.f32 %v2451, %v2523
    %v2525 = vpop.f32.mrf.mxu0
    %v2526 = vadd.f32 %v2453, %v2525
    %2527 = vdwg.mxu0
    %v2528 = vrot.slane %v2490, 4
    %v2529 = vmax.f32 %v2490, %v2528
    %v2530 = vrot.slane %v2529, 2
    %v2531 = vmax.f32 %v2529, %v2530
    %v2532 = vrot.slane %v2531, 1
    %v2533 = vmax.f32 %v2531, %v2532
    %v2534 = vrot.slane %v2492, 4
    %v2535 = vmax.f32 %v2492, %v2534
    %v2536 = vrot.slane %v2535, 2
    %v2537 = vmax.f32 %v2535, %v2536
    %v2538 = vrot.slane %v2537, 1
    %v2539 = vmax.f32 %v2537, %v2538
    %v2540 = vrot.slane %v2494, 4
    %v2541 = vmax.f32 %v2494, %v2540
    %v2542 = vrot.slane %v2541, 2
    %v2543 = vmax.f32 %v2541, %v2542
    %v2544 = vrot.slane %v2543, 1
    %v2545 = vmax.f32 %v2543, %v2544
    %v2546 = vrot.slane %v2496, 4
    %v2547 = vmax.f32 %v2496, %v2546
    %v2548 = vrot.slane %v2547, 2
    %v2549 = vmax.f32 %v2547, %v2548
    %v2550 = vrot.slane %v2549, 1
    %v2551 = vmax.f32 %v2549, %v2550
    %v2552 = vrot.slane %v2500, 4
    %v2553 = vmax.f32 %v2500, %v2552
    %v2554 = vrot.slane %v2553, 2
    %v2555 = vmax.f32 %v2553, %v2554
    %v2556 = vrot.slane %v2555, 1
    %v2557 = vmax.f32 %v2555, %v2556
    %v2558 = vrot.slane %v2502, 4
    %v2559 = vmax.f32 %v2502, %v2558
    %v2560 = vrot.slane %v2559, 2
    %v2561 = vmax.f32 %v2559, %v2560
    %v2562 = vrot.slane %v2561, 1
    %v2563 = vmax.f32 %v2561, %v2562
    %v2564 = vrot.slane %v2504, 4
    %v2565 = vmax.f32 %v2504, %v2564
    %v2566 = vrot.slane %v2565, 2
    %v2567 = vmax.f32 %v2565, %v2566
    %v2568 = vrot.slane %v2567, 1
    %v2569 = vmax.f32 %v2567, %v2568
    %v2570 = vrot.slane %v2506, 4
    %v2571 = vmax.f32 %v2506, %v2570
    %v2572 = vrot.slane %v2571, 2
    %v2573 = vmax.f32 %v2571, %v2572
    %v2574 = vrot.slane %v2573, 1
    %v2575 = vmax.f32 %v2573, %v2574
    %v2576 = vrot.slane %v2510, 4
    %v2577 = vmax.f32 %v2510, %v2576
    %v2578 = vrot.slane %v2577, 2
    %v2579 = vmax.f32 %v2577, %v2578
    %v2580 = vrot.slane %v2579, 1
    %v2581 = vmax.f32 %v2579, %v2580
    %v2582 = vrot.slane %v2512, 4
    %v2583 = vmax.f32 %v2512, %v2582
    %v2584 = vrot.slane %v2583, 2
    %v2585 = vmax.f32 %v2583, %v2584
    %v2586 = vrot.slane %v2585, 1
    %v2587 = vmax.f32 %v2585, %v2586
    %v2588 = vrot.slane %v2514, 4
    %v2589 = vmax.f32 %v2514, %v2588
    %v2590 = vrot.slane %v2589, 2
    %v2591 = vmax.f32 %v2589, %v2590
    %v2592 = vrot.slane %v2591, 1
    %v2593 = vmax.f32 %v2591, %v2592
    %v2594 = vrot.slane %v2516, 4
    %v2595 = vmax.f32 %v2516, %v2594
    %v2596 = vrot.slane %v2595, 2
    %v2597 = vmax.f32 %v2595, %v2596
    %v2598 = vrot.slane %v2597, 1
    %v2599 = vmax.f32 %v2597, %v2598
    %v2600 = vrot.slane %v2520, 4
    %v2601 = vmax.f32 %v2520, %v2600
    %v2602 = vrot.slane %v2601, 2
    %v2603 = vmax.f32 %v2601, %v2602
    %v2604 = vrot.slane %v2603, 1
    %v2605 = vmax.f32 %v2603, %v2604
    %v2606 = vrot.slane %v2522, 4
    %v2607 = vmax.f32 %v2522, %v2606
    %v2608 = vrot.slane %v2607, 2
    %v2609 = vmax.f32 %v2607, %v2608
    %v2610 = vrot.slane %v2609, 1
    %v2611 = vmax.f32 %v2609, %v2610
    %v2612 = vrot.slane %v2524, 4
    %v2613 = vmax.f32 %v2524, %v2612
    %v2614 = vrot.slane %v2613, 2
    %v2615 = vmax.f32 %v2613, %v2614
    %v2616 = vrot.slane %v2615, 1
    %v2617 = vmax.f32 %v2615, %v2616
    %v2618 = vrot.slane %v2526, 4
    %v2619 = vmax.f32 %v2526, %v2618
    %v2620 = vrot.slane %v2619, 2
    %v2621 = vmax.f32 %v2619, %v2620
    %v2622 = vrot.slane %v2621, 1
    %v2623 = vmax.f32 %v2621, %v2622
    %v2640 = vsel %vm687, %v2545, %v2533
    %v2641 = vsel %vm689, %v2557, %v2640
    %v2642 = vsel %vm691, %v2569, %v2641
    %v2643 = vsel %vm693, %v2581, %v2642
    %v2644 = vsel %vm695, %v2593, %v2643
    %v2645 = vsel %vm697, %v2605, %v2644
    %v2646 = vsel %vm699, %v2617, %v2645
    %v2647 = vsel %vm687, %v2551, %v2539
    %v2648 = vsel %vm689, %v2563, %v2647
    %v2649 = vsel %vm691, %v2575, %v2648
    %v2650 = vsel %vm693, %v2587, %v2649
    %v2651 = vsel %vm695, %v2599, %v2650
    %v2652 = vsel %vm697, %v2611, %v2651
    %v2653 = vsel %vm699, %v2623, %v2652
    %2656 = vst [vmem:[#allocation10] sm:$0xff] %v2646
    %2657 = vst [vmem:[#allocation10 + $0x8] sm:$0xff] %v2653
    // Predicated region
    $region66: #{tpu_custom_call.1} parent=1 // pred_check
      _
    $region67: #{tpu_custom_call.1} parent=1 // pred_check_branch
      %2659 = sbr.rel (0) target = $region69
    $region68: #{tpu_custom_call.1} parent=1 // pred_region
      %s2661 = ssub.s32 256, 256
      %2662 = vsyncadd [#allocation4], %s2661
      %s2664 = sshll.u32 [#allocation10], 4
      %s2665 = int_to_ptr.vmem [resolvable:$true] %s2664
      %2667 = dma.vmem_to_hbm [thread:$0]  %s2665, 256, %s12, [#allocation4]
    $region69: #{tpu_custom_call.1} parent=1 // pred_fallthru
      _
    // Predicated region
    $region70: #{tpu_custom_call.1} parent=1 // pred_check
      _
    $region71: #{tpu_custom_call.1} parent=1 // pred_check_branch
      %2669 = sbr.rel (0) target = $region73
    $region72: #{tpu_custom_call.1} parent=1 // pred_region
      %2670 = dma.done [#allocation4], 256
    $region73: #{tpu_custom_call.1} parent=1 // pred_fallthru
      _
    %2671 = vsyncpa [#allocation3], 1
    %2672 = vsyncpa [#allocation6], 1
    %2673 = vsyncpa [#allocation9], 1
    %2674 = vsyncpa [#allocation4], 1

// kernel: tpu_custom_call.1
$region0: #{tpu_custom_call.1}
  #allocation0 [shape = 'u32[]', space=smem, size = 0x4, offset = 0x4, fixed_abs, tag = 'smem constant byte address 0x4 - core index']
  #allocation1 [shape = 'u32[144,128]{1,0:T(1,128)}', space=vmem, size = 0x12000, scoped, tag = 'internal scratch']
  %s0 = inlined_call_operand.vmem [shape: f32[64,3], index: 0, kind: input, shape index: {}]
  %s1 = inlined_call_operand.vmem [shape: f32[1,128], index: 1, kind: input, shape index: {}]
  %s2 = inlined_call_operand.vmem [shape: f32[1,128], index: 2, kind: input, shape index: {}]
  %s3 = inlined_call_operand.vmem [shape: f32[1,128], index: 3, kind: input, shape index: {}]
  %s4 = inlined_call_operand.vmem [shape: f32[1,128], index: 4, kind: input, shape index: {}]
  %s5 = inlined_call_operand.hbm [shape: bf16[128,256], index: 5, kind: input, shape index: {}]
  %s6 = inlined_call_operand.vmem [shape: f32[1,256], index: 6, kind: input, shape index: {}]
  %s7 = inlined_call_operand.hbm [shape: bf16[256,512], index: 7, kind: input, shape index: {}]
  %s8 = inlined_call_operand.hbm [shape: bf16[256,512], index: 8, kind: input, shape index: {}]
  %s9 = inlined_call_operand.vmem [shape: f32[1,512], index: 9, kind: input, shape index: {}]
  %s10 = inlined_call_operand.hbm [shape: bf16[512,256], index: 10, kind: input, shape index: {}]
  %s11 = inlined_call_operand.vmem [shape: f32[1,256], index: 11, kind: input, shape index: {}]
  %s12 = inlined_call_operand.hbm [shape: f32[8,256], index: 12, kind: output, shape index: {}]
  %s13 = sld [smem:[#allocation0]]
  $region74: #{tpu_custom_call.1} parent=0
    _
  %s15 = ssub.s32 1, %s13
  %s16 = scalar_select 0, %s15, %s13
  $region1: #{tpu_custom_call.1} parent=0
    #allocation2 [shape = 'u8[65536]{0}', space=vmem, size = 0x10000, scoped, tag = 'input window, operand 5, single buffered']
    #allocation3 [shape = 's32[1]{0}', space=sflag, size = 0x4, scoped, tag = 'scoped memory for tpu_custom_call.1']
    #allocation4 [shape = 's32[1]{0}', space=sflag, size = 0x4, scoped, tag = 'scoped memory for tpu_custom_call.1']
    #allocation5 [shape = 'u8[262144]{0}', space=vmem, size = 0x40000, scoped, tag = 'input window, operand 7, single buffered']
    #allocation6 [shape = 's32[1]{0}', space=sflag, size = 0x4, scoped, tag = 'scoped memory for tpu_custom_call.1']
    #allocation7 [shape = 'u8[262144]{0}', space=vmem, size = 0x40000, scoped, tag = 'input window, operand 8, single buffered']
    #allocation8 [shape = 'u8[262144]{0}', space=vmem, size = 0x40000, scoped, tag = 'input window, operand 10, single buffered']
    #allocation9 [shape = 's32[1]{0}', space=sflag, size = 0x4, scoped, tag = 'scoped memory for tpu_custom_call.1']
    #allocation10 [shape = 'u8[8192]{0}', space=vmem, size = 0x2000, scoped, tag = 'output window, operand 0, single buffered']
    %17 = vsyncpa [#allocation3], 0
    %18 = vsyncpa [#allocation6], 0
    %19 = vsyncpa [#allocation9], 0
    %20 = vsyncpa [#allocation4], 0
    // Predicated region
    $region2: #{tpu_custom_call.1} parent=1 // pred_check
      _
    $region3: #{tpu_custom_call.1} parent=1 // pred_check_branch
      %22 = sbr.rel (0) target = $region5
    $region4: #{tpu_custom_call.1} parent=1 // pred_region
      _
    $region5: #{tpu_custom_call.1} parent=1 // pred_fallthru
      _
    // Predicated region
    $region6: #{tpu_custom_call.1} parent=1 // pred_check
      _
    $region7: #{tpu_custom_call.1} parent=1 // pred_check_branch
      %24 = sbr.rel (0) target = $region9
    $region8: #{tpu_custom_call.1} parent=1 // pred_region
      _
    $region9: #{tpu_custom_call.1} parent=1 // pred_fallthru
      _
    // Predicated region
    $region10: #{tpu_custom_call.1} parent=1 // pred_check
      _
    $region11: #{tpu_custom_call.1} parent=1 // pred_check_branch
      %26 = sbr.rel (0) target = $region13
    $region12: #{tpu_custom_call.1} parent=1 // pred_region
      _
    $region13: #{tpu_custom_call.1} parent=1 // pred_fallthru
      _
    // Predicated region
    $region14: #{tpu_custom_call.1} parent=1 // pred_check
      _
    $region15: #{tpu_custom_call.1} parent=1 // pred_check_branch
      %28 = sbr.rel (0) target = $region17
    $region16: #{tpu_custom_call.1} parent=1 // pred_region
      _
    $region17: #{tpu_custom_call.1} parent=1 // pred_fallthru
      _
    // Predicated region
    $region18: #{tpu_custom_call.1} parent=1 // pred_check
      _
    $region19: #{tpu_custom_call.1} parent=1 // pred_check_branch
      %30 = sbr.rel (0) target = $region21
    $region20: #{tpu_custom_call.1} parent=1 // pred_region
      _
    $region21: #{tpu_custom_call.1} parent=1 // pred_fallthru
      _
    // Predicated region
    $region22: #{tpu_custom_call.1} parent=1 // pred_check
      _
    $region23: #{tpu_custom_call.1} parent=1 // pred_check_branch
      %32 = sbr.rel (0) target = $region25
    $region24: #{tpu_custom_call.1} parent=1 // pred_region
      %s34 = ssub.s32 2048, 2048
      %35 = vsyncadd [#allocation3], %s34
      %s36 = sshll.u32 [#allocation2], 4
      %s37 = int_to_ptr.vmem [resolvable:$true] %s36
      %42 = dma.hbm_to_vmem [thread:$0]  %s5, 2048, %s37, [#allocation3], 128, 128, 8
    $region25: #{tpu_custom_call.1} parent=1 // pred_fallthru
      _
    // Predicated region
    $region26: #{tpu_custom_call.1} parent=1 // pred_check
      _
    $region27: #{tpu_custom_call.1} parent=1 // pred_check_branch
      %44 = sbr.rel (0) target = $region29
    $region28: #{tpu_custom_call.1} parent=1 // pred_region
      _
    $region29: #{tpu_custom_call.1} parent=1 // pred_fallthru
      _
    // Predicated region
    $region30: #{tpu_custom_call.1} parent=1 // pred_check
      _
    $region31: #{tpu_custom_call.1} parent=1 // pred_check_branch
      %46 = sbr.rel (0) target = $region33
    $region32: #{tpu_custom_call.1} parent=1 // pred_region
      %s48 = ssub.s32 8192, 8192
      %49 = vsyncadd [#allocation6], %s48
      %s50 = sshll.u32 [#allocation5], 4
      %s51 = int_to_ptr.vmem [resolvable:$true] %s50
      %56 = dma.hbm_to_vmem [thread:$0]  %s7, 8192, %s51, [#allocation6], 256, 256, 16
    $region33: #{tpu_custom_call.1} parent=1 // pred_fallthru
      _
    // Predicated region
    $region34: #{tpu_custom_call.1} parent=1 // pred_check
      _
    $region35: #{tpu_custom_call.1} parent=1 // pred_check_branch
      %58 = sbr.rel (0) target = $region37
    $region36: #{tpu_custom_call.1} parent=1 // pred_region
      %s60 = ssub.s32 8192, 8192
      %61 = vsyncadd [#allocation6], %s60
      %s62 = sshll.u32 [#allocation7], 4
      %s63 = int_to_ptr.vmem [resolvable:$true] %s62
      %68 = dma.hbm_to_vmem [thread:$0]  %s8, 8192, %s63, [#allocation6], 256, 256, 16
    $region37: #{tpu_custom_call.1} parent=1 // pred_fallthru
      _
    // Predicated region
    $region38: #{tpu_custom_call.1} parent=1 // pred_check
      _
    $region39: #{tpu_custom_call.1} parent=1 // pred_check_branch
      %70 = sbr.rel (0) target = $region41
    $region40: #{tpu_custom_call.1} parent=1 // pred_region
      _
    $region41: #{tpu_custom_call.1} parent=1 // pred_fallthru
      _
    // Predicated region
    $region42: #{tpu_custom_call.1} parent=1 // pred_check
      _
    $region43: #{tpu_custom_call.1} parent=1 // pred_check_branch
      %72 = sbr.rel (0) target = $region45
    $region44: #{tpu_custom_call.1} parent=1 // pred_region
      %s74 = ssub.s32 8192, 8192
      %75 = vsyncadd [#allocation9], %s74
      %s76 = sshll.u32 [#allocation8], 4
      %s77 = int_to_ptr.vmem [resolvable:$true] %s76
      %82 = dma.hbm_to_vmem [thread:$0]  %s10, 8192, %s77, [#allocation9], 128, 128, 8
    $region45: #{tpu_custom_call.1} parent=1 // pred_fallthru
      _
    // Predicated region
    $region46: #{tpu_custom_call.1} parent=1 // pred_check
      _
    $region47: #{tpu_custom_call.1} parent=1 // pred_check_branch
      %84 = sbr.rel (0) target = $region49
    $region48: #{tpu_custom_call.1} parent=1 // pred_region
      _
    $region49: #{tpu_custom_call.1} parent=1 // pred_fallthru
      _
    // Predicated region
    $region50: #{tpu_custom_call.1} parent=1 // pred_check
      _
    $region51: #{tpu_custom_call.1} parent=1 // pred_check_branch
      %86 = sbr.rel (0) target = $region53
    $region52: #{tpu_custom_call.1} parent=1 // pred_region
      %87 = dma.done [#allocation3], 2048
    $region53: #{tpu_custom_call.1} parent=1 // pred_fallthru
      _
    // Predicated region
    $region54: #{tpu_custom_call.1} parent=1 // pred_check
      _
    $region55: #{tpu_custom_call.1} parent=1 // pred_check_branch
      %89 = sbr.rel (0) target = $region57
    $region56: #{tpu_custom_call.1} parent=1 // pred_region
      %90 = dma.done [#allocation6], 8192
    $region57: #{tpu_custom_call.1} parent=1 // pred_fallthru
      _
    // Predicated region
    $region58: #{tpu_custom_call.1} parent=1 // pred_check
      _
    $region59: #{tpu_custom_call.1} parent=1 // pred_check_branch
      %92 = sbr.rel (0) target = $region61
    $region60: #{tpu_custom_call.1} parent=1 // pred_region
      %93 = dma.done [#allocation6], 8192
    $region61: #{tpu_custom_call.1} parent=1 // pred_fallthru
      _
    // Predicated region
    $region62: #{tpu_custom_call.1} parent=1 // pred_check
      _
    $region63: #{tpu_custom_call.1} parent=1 // pred_check_branch
      %95 = sbr.rel (0) target = $region65
    $region64: #{tpu_custom_call.1} parent=1 // pred_region
      %96 = dma.done [#allocation9], 8192
    $region65: #{tpu_custom_call.1} parent=1 // pred_fallthru
      _
    %v98 = vld [vmem:[%s0] sm:$0xff]
    %v99 = vld [vmem:[%s0 + $0x8] sm:$0xff]
    %v100 = vld [vmem:[%s0 + $0x10] sm:$0xff]
    %v101 = vld [vmem:[%s0 + $0x18] sm:$0xff]
    %v102 = vld [vmem:[%s0 + $0x20] sm:$0xff]
    %v103 = vld [vmem:[%s0 + $0x28] sm:$0xff]
    %v104 = vld [vmem:[%s0 + $0x30] sm:$0xff]
    %v105 = vld [vmem:[%s0 + $0x38] sm:$0xff]
    %v106 = vld [vmem:[%s1] sm:$0x1]
    %108 = vset.pattern.permute.xlu0 0
    %109 = vperm.xlu0 %108, %v98
    %v110 = vpop.permute.xlu0 %109
    %113 = vset.pattern.permute.xlu0 0
    %114 = vperm.xlu0 %113, %v99
    %v115 = vpop.permute.xlu0 %114
    %118 = vset.pattern.permute.xlu0 0
    %119 = vperm.xlu0 %118, %v100
    %v120 = vpop.permute.xlu0 %119
    %123 = vset.pattern.permute.xlu0 0
    %124 = vperm.xlu0 %123, %v101
    %v125 = vpop.permute.xlu0 %124
    %128 = vset.pattern.permute.xlu0 0
    %129 = vperm.xlu0 %128, %v102
    %v130 = vpop.permute.xlu0 %129
    %133 = vset.pattern.permute.xlu0 0
    %134 = vperm.xlu0 %133, %v103
    %v135 = vpop.permute.xlu0 %134
    %138 = vset.pattern.permute.xlu0 0
    %139 = vperm.xlu0 %138, %v104
    %v140 = vpop.permute.xlu0 %139
    %143 = vset.pattern.permute.xlu0 0
    %144 = vperm.xlu0 %143, %v105
    %v145 = vpop.permute.xlu0 %144
    %v148 = vlaneseq
    %v149 = vshrl.u32 %v148, 7
    %v150 = vsub.s32 0, %v149
    %v151 = vrot.slane %v106, %v150
    %v153 = vmul.f32 %v110, %v151
    %v154 = vmul.f32 %v115, %v151
    %v155 = vmul.f32 %v120, %v151
    %v156 = vmul.f32 %v125, %v151
    %v157 = vmul.f32 %v130, %v151
    %v158 = vmul.f32 %v135, %v151
    %v159 = vmul.f32 %v140, %v151
    %v160 = vmul.f32 %v145, %v151
    %v161 = vld [vmem:[%s2] sm:$0x1]
    %162 = vset.pattern.permute.xlu0 1
    %163 = vperm.xlu0 %162, %v98
    %v164 = vpop.permute.xlu0 %163
    %166 = vset.pattern.permute.xlu0 1
    %167 = vperm.xlu0 %166, %v99
    %v168 = vpop.permute.xlu0 %167
    %170 = vset.pattern.permute.xlu0 1
    %171 = vperm.xlu0 %170, %v100
    %v172 = vpop.permute.xlu0 %171
    %174 = vset.pattern.permute.xlu0 1
    %175 = vperm.xlu0 %174, %v101
    %v176 = vpop.permute.xlu0 %175
    %178 = vset.pattern.permute.xlu0 1
    %179 = vperm.xlu0 %178, %v102
    %v180 = vpop.permute.xlu0 %179
    %182 = vset.pattern.permute.xlu0 1
    %183 = vperm.xlu0 %182, %v103
    %v184 = vpop.permute.xlu0 %183
    %186 = vset.pattern.permute.xlu0 1
    %187 = vperm.xlu0 %186, %v104
    %v188 = vpop.permute.xlu0 %187
    %190 = vset.pattern.permute.xlu0 1
    %191 = vperm.xlu0 %190, %v105
    %v192 = vpop.permute.xlu0 %191
    %v195 = vlaneseq
    %v196 = vshrl.u32 %v195, 7
    %v197 = vsub.s32 0, %v196
    %v198 = vrot.slane %v161, %v197
    %v200 = vmul.f32 %v164, %v198
    %v201 = vmul.f32 %v168, %v198
    %v202 = vmul.f32 %v172, %v198
    %v203 = vmul.f32 %v176, %v198
    %v204 = vmul.f32 %v180, %v198
    %v205 = vmul.f32 %v184, %v198
    %v206 = vmul.f32 %v188, %v198
    %v207 = vmul.f32 %v192, %v198
    %v208 = vadd.f32 %v153, %v200
    %v209 = vadd.f32 %v154, %v201
    %v210 = vadd.f32 %v155, %v202
    %v211 = vadd.f32 %v156, %v203
    %v212 = vadd.f32 %v157, %v204
    %v213 = vadd.f32 %v158, %v205
    %v214 = vadd.f32 %v159, %v206
    %v215 = vadd.f32 %v160, %v207
    %v216 = vld [vmem:[%s3] sm:$0x1]
    %217 = vset.pattern.permute.xlu0 2
    %218 = vperm.xlu0 %217, %v98
    %v219 = vpop.permute.xlu0 %218
    %221 = vset.pattern.permute.xlu0 2
    %222 = vperm.xlu0 %221, %v99
    %v223 = vpop.permute.xlu0 %222
    %225 = vset.pattern.permute.xlu0 2
    %226 = vperm.xlu0 %225, %v100
    %v227 = vpop.permute.xlu0 %226
    %229 = vset.pattern.permute.xlu0 2
    %230 = vperm.xlu0 %229, %v101
    %v231 = vpop.permute.xlu0 %230
    %233 = vset.pattern.permute.xlu0 2
    %234 = vperm.xlu0 %233, %v102
    %v235 = vpop.permute.xlu0 %234
    %237 = vset.pattern.permute.xlu0 2
    %238 = vperm.xlu0 %237, %v103
    %v239 = vpop.permute.xlu0 %238
    %241 = vset.pattern.permute.xlu0 2
    %242 = vperm.xlu0 %241, %v104
    %v243 = vpop.permute.xlu0 %242
    %245 = vset.pattern.permute.xlu0 2
    %246 = vperm.xlu0 %245, %v105
    %v247 = vpop.permute.xlu0 %246
    %v250 = vlaneseq
    %v251 = vshrl.u32 %v250, 7
    %v252 = vsub.s32 0, %v251
    %v253 = vrot.slane %v216, %v252
    %v255 = vmul.f32 %v219, %v253
    %v256 = vmul.f32 %v223, %v253
    %v257 = vmul.f32 %v227, %v253
    %v258 = vmul.f32 %v231, %v253
    %v259 = vmul.f32 %v235, %v253
    %v260 = vmul.f32 %v239, %v253
    %v261 = vmul.f32 %v243, %v253
    %v262 = vmul.f32 %v247, %v253
    %v263 = vadd.f32 %v208, %v255
    %v264 = vadd.f32 %v209, %v256
    %v265 = vadd.f32 %v210, %v257
    %v266 = vadd.f32 %v211, %v258
    %v267 = vadd.f32 %v212, %v259
    %v268 = vadd.f32 %v213, %v260
    %v269 = vadd.f32 %v214, %v261
    %v270 = vadd.f32 %v215, %v262
    %v271 = vld [vmem:[%s4] sm:$0x1]
    %v273 = vlaneseq
    %v274 = vshrl.u32 %v273, 7
    %v275 = vsub.s32 0, %v274
    %v276 = vrot.slane %v271, %v275
    %v278 = vadd.f32 %v263, %v276
    %v279 = vadd.f32 %v264, %v276
    %v280 = vadd.f32 %v265, %v276
    %v281 = vadd.f32 %v266, %v276
    %v282 = vadd.f32 %v267, %v276
    %v283 = vadd.f32 %v268, %v276
    %v284 = vadd.f32 %v269, %v276
    %v285 = vadd.f32 %v270, %v276
    %v286 = vmax.f32 %v278, 0.0
    %v287 = vmax.f32 %v279, 0.0
    %v288 = vmax.f32 %v280, 0.0
    %v289 = vmax.f32 %v281, 0.0
    %v290 = vmax.f32 %v282, 0.0
    %v291 = vmax.f32 %v283, 0.0
    %v292 = vmax.f32 %v284, 0.0
    %v293 = vmax.f32 %v285, 0.0
    %v294 = vpack.c.bf16 %v287, %v286
    %v295 = vpack.c.bf16 %v289, %v288
    %v296 = vpack.c.bf16 %v291, %v290
    %v297 = vpack.c.bf16 %v293, %v292
    %v298 = vld [vmem:[#allocation2] sm:$0xff]
    %v299 = vld [vmem:[#allocation2 + $0x8] sm:$0xff]
    %v300 = vld [vmem:[#allocation2 + $0x10] sm:$0xff]
    %v301 = vld [vmem:[#allocation2 + $0x18] sm:$0xff]
    %v302 = vld [vmem:[#allocation2 + $0x20] sm:$0xff]
    %v303 = vld [vmem:[#allocation2 + $0x28] sm:$0xff]
    %v304 = vld [vmem:[#allocation2 + $0x30] sm:$0xff]
    %v305 = vld [vmem:[#allocation2 + $0x38] sm:$0xff]
    %v306 = vld [vmem:[#allocation2 + $0x40] sm:$0xff]
    %v307 = vld [vmem:[#allocation2 + $0x48] sm:$0xff]
    %v308 = vld [vmem:[#allocation2 + $0x50] sm:$0xff]
    %v309 = vld [vmem:[#allocation2 + $0x58] sm:$0xff]
    %v310 = vld [vmem:[#allocation2 + $0x60] sm:$0xff]
    %v311 = vld [vmem:[#allocation2 + $0x68] sm:$0xff]
    %v312 = vld [vmem:[#allocation2 + $0x70] sm:$0xff]
    %v313 = vld [vmem:[#allocation2 + $0x78] sm:$0xff]
    %v314 = vld [vmem:[%s6] sm:$0x3]
    %v316 = vlaneseq
    %v317 = vshrl.u32 %v316, 7
    %v318 = vsub.s32 0, %v317
    %v319 = vrot.slane %v314, %v318
    %v320 = vlaneseq
    %v321 = vshrl.u32 %v320, 7
    %v322 = vsub.s32 1, %v321
    %v323 = vrot.slane %v314, %v322
    %v342 = vunpack.c.l.b16 %v298
    %v343 = vunpack.c.h.b16 %v298
    %v344 = vunpack.c.l.b16 %v299
    %v345 = vunpack.c.h.b16 %v299
    %v346 = vunpack.c.l.b16 %v300
    %v347 = vunpack.c.h.b16 %v300
    %v348 = vunpack.c.l.b16 %v301
    %v349 = vunpack.c.h.b16 %v301
    %v350 = vunpack.c.l.b16 %v302
    %v351 = vunpack.c.h.b16 %v302
    %v352 = vunpack.c.l.b16 %v303
    %v353 = vunpack.c.h.b16 %v303
    %v354 = vunpack.c.l.b16 %v304
    %v355 = vunpack.c.h.b16 %v304
    %v356 = vunpack.c.l.b16 %v305
    %v357 = vunpack.c.h.b16 %v305
    %v358 = vunpack.c.l.b16 %v306
    %v359 = vunpack.c.h.b16 %v306
    %v360 = vunpack.c.l.b16 %v307
    %v361 = vunpack.c.h.b16 %v307
    %v362 = vunpack.c.l.b16 %v308
    %v363 = vunpack.c.h.b16 %v308
    %v364 = vunpack.c.l.b16 %v309
    %v365 = vunpack.c.h.b16 %v309
    %v366 = vunpack.c.l.b16 %v310
    %v367 = vunpack.c.h.b16 %v310
    %v368 = vunpack.c.l.b16 %v311
    %v369 = vunpack.c.h.b16 %v311
    %v370 = vunpack.c.l.b16 %v312
    %v371 = vunpack.c.h.b16 %v312
    %v372 = vunpack.c.l.b16 %v313
    %v373 = vunpack.c.h.b16 %v313
    %v374 = vpack.c.b16 %v344, %v342
    %v375 = vpack.c.b16 %v345, %v343
    %v376 = vpack.c.b16 %v348, %v346
    %v377 = vpack.c.b16 %v349, %v347
    %v378 = vpack.c.b16 %v352, %v350
    %v379 = vpack.c.b16 %v353, %v351
    %v380 = vpack.c.b16 %v356, %v354
    %v381 = vpack.c.b16 %v357, %v355
    %v382 = vpack.c.b16 %v360, %v358
    %v383 = vpack.c.b16 %v361, %v359
    %v384 = vpack.c.b16 %v364, %v362
    %v385 = vpack.c.b16 %v365, %v363
    %v386 = vpack.c.b16 %v368, %v366
    %v387 = vpack.c.b16 %v369, %v367
    %v388 = vpack.c.b16 %v372, %v370
    %v389 = vpack.c.b16 %v373, %v371
    %406 = vmatprep.subr.bf16.mxu0 %v389
    %407 = vmatpush1.bf16.msra.mxu0 %v388
    %408 = vmatprep.subr.bf16.mxu0 %v387
    %409 = vmatpush1.bf16.msra.mxu0 %v386
    %410 = vmatprep.subr.bf16.mxu0 %v385
    %411 = vmatpush1.bf16.msra.mxu0 %v384
    %412 = vmatprep.subr.bf16.mxu0 %v383
    %413 = vmatpush1.bf16.msra.mxu0 %v382
    %414 = vmatprep.subr.bf16.mxu0 %v381
    %415 = vmatpush1.bf16.msra.mxu0 %v380
    %416 = vmatprep.subr.bf16.mxu0 %v379
    %417 = vmatpush1.bf16.msra.mxu0 %v378
    %418 = vmatprep.subr.bf16.mxu0 %v377
    %419 = vmatpush1.bf16.msra.mxu0 %v376
    %420 = vmatprep.subr.bf16.mxu0 %v375
    %421 = vmatpush1.bf16.msra.mxu0 %v374
    %422 = vmatprep.subr.bf16.mxu0 0
    %423 = vmatpush2.bf16.msra.mxu0 0
    %424 = vmatprep.subr.bf16.mxu0 0
    %425 = vmatpush2.bf16.msra.mxu0 0
    %426 = vmatprep.subr.bf16.mxu0 0
    %427 = vmatpush2.bf16.msra.mxu0 0
    %428 = vmatprep.subr.bf16.mxu0 0
    %429 = vmatpush2.bf16.msra.mxu0 0
    %430 = vmatprep.subr.bf16.mxu0 0
    %431 = vmatpush2.bf16.msra.mxu0 0
    %432 = vmatprep.subr.bf16.mxu0 0
    %433 = vmatpush2.bf16.msra.mxu0 0
    %434 = vmatprep.subr.bf16.mxu0 0
    %435 = vmatpush2.bf16.msra.mxu0 0
    %436 = vmatprep.subr.bf16.mxu0 0
    %437 = vmatpush2.bf16.msra.mxu0 0
    %438 = vmatprep.mubr.bf16.mxu0 0
    %439 = vmatmul.mubr.bf16.gmra.mxu0 %v294
    %v440 = vpop.f32.mrf.mxu0
    %v441 = vadd.f32 %v319, %v440
    %v442 = vpop.f32.mrf.mxu0
    %v443 = vadd.f32 %v323, %v442
    %v444 = vpop.f32.mrf.mxu0
    %v445 = vadd.f32 %v319, %v444
    %v446 = vpop.f32.mrf.mxu0
    %v447 = vadd.f32 %v323, %v446
    %448 = vmatprep.mubr.bf16.mxu0 0
    %449 = vmatmul.mubr.bf16.gmra.mxu0 %v295
    %v450 = vpop.f32.mrf.mxu0
    %v451 = vadd.f32 %v319, %v450
    %v452 = vpop.f32.mrf.mxu0
    %v453 = vadd.f32 %v323, %v452
    %v454 = vpop.f32.mrf.mxu0
    %v455 = vadd.f32 %v319, %v454
    %v456 = vpop.f32.mrf.mxu0
    %v457 = vadd.f32 %v323, %v456
    %458 = vmatprep.mubr.bf16.mxu0 0
    %459 = vmatmul.mubr.bf16.gmra.mxu0 %v296
    %v460 = vpop.f32.mrf.mxu0
    %v461 = vadd.f32 %v319, %v460
    %v462 = vpop.f32.mrf.mxu0
    %v463 = vadd.f32 %v323, %v462
    %v464 = vpop.f32.mrf.mxu0
    %v465 = vadd.f32 %v319, %v464
    %v466 = vpop.f32.mrf.mxu0
    %v467 = vadd.f32 %v323, %v466
    %468 = vmatprep.mubr.bf16.mxu0 0
    %469 = vmatmul.mubr.bf16.gmra.mxu0 %v297
    %v470 = vpop.f32.mrf.mxu0
    %v471 = vadd.f32 %v319, %v470
    %v472 = vpop.f32.mrf.mxu0
    %v473 = vadd.f32 %v323, %v472
    %v474 = vpop.f32.mrf.mxu0
    %v475 = vadd.f32 %v319, %v474
    %v476 = vpop.f32.mrf.mxu0
    %v477 = vadd.f32 %v323, %v476
    %478 = vdwg.mxu0
    %v479 = vrot.slane %v441, 4
    %v480 = vmax.f32 %v441, %v479
    %v481 = vrot.slane %v480, 2
    %v482 = vmax.f32 %v480, %v481
    %v483 = vrot.slane %v482, 1
    %v484 = vmax.f32 %v482, %v483
    %v485 = vrot.slane %v443, 4
    %v486 = vmax.f32 %v443, %v485
    %v487 = vrot.slane %v486, 2
    %v488 = vmax.f32 %v486, %v487
    %v489 = vrot.slane %v488, 1
    %v490 = vmax.f32 %v488, %v489
    %v491 = vrot.slane %v445, 4
    %v492 = vmax.f32 %v445, %v491
    %v493 = vrot.slane %v492, 2
    %v494 = vmax.f32 %v492, %v493
    %v495 = vrot.slane %v494, 1
    %v496 = vmax.f32 %v494, %v495
    %v497 = vrot.slane %v447, 4
    %v498 = vmax.f32 %v447, %v497
    %v499 = vrot.slane %v498, 2
    %v500 = vmax.f32 %v498, %v499
    %v501 = vrot.slane %v500, 1
    %v502 = vmax.f32 %v500, %v501
    %v503 = vrot.slane %v451, 4
    %v504 = vmax.f32 %v451, %v503
    %v505 = vrot.slane %v504, 2
    %v506 = vmax.f32 %v504, %v505
    %v507 = vrot.slane %v506, 1
    %v508 = vmax.f32 %v506, %v507
    %v509 = vrot.slane %v453, 4
    %v510 = vmax.f32 %v453, %v509
    %v511 = vrot.slane %v510, 2
    %v512 = vmax.f32 %v510, %v511
    %v513 = vrot.slane %v512, 1
    %v514 = vmax.f32 %v512, %v513
    %v515 = vrot.slane %v455, 4
    %v516 = vmax.f32 %v455, %v515
    %v517 = vrot.slane %v516, 2
    %v518 = vmax.f32 %v516, %v517
    %v519 = vrot.slane %v518, 1
    %v520 = vmax.f32 %v518, %v519
    %v521 = vrot.slane %v457, 4
    %v522 = vmax.f32 %v457, %v521
    %v523 = vrot.slane %v522, 2
    %v524 = vmax.f32 %v522, %v523
    %v525 = vrot.slane %v524, 1
    %v526 = vmax.f32 %v524, %v525
    %v527 = vrot.slane %v461, 4
    %v528 = vmax.f32 %v461, %v527
    %v529 = vrot.slane %v528, 2
    %v530 = vmax.f32 %v528, %v529
    %v531 = vrot.slane %v530, 1
    %v532 = vmax.f32 %v530, %v531
    %v533 = vrot.slane %v463, 4
    %v534 = vmax.f32 %v463, %v533
    %v535 = vrot.slane %v534, 2
    %v536 = vmax.f32 %v534, %v535
    %v537 = vrot.slane %v536, 1
    %v538 = vmax.f32 %v536, %v537
    %v539 = vrot.slane %v465, 4
    %v540 = vmax.f32 %v465, %v539
    %v541 = vrot.slane %v540, 2
    %v542 = vmax.f32 %v540, %v541
    %v543 = vrot.slane %v542, 1
    %v544 = vmax.f32 %v542, %v543
    %v545 = vrot.slane %v467, 4
    %v546 = vmax.f32 %v467, %v545
    %v547 = vrot.slane %v546, 2
    %v548 = vmax.f32 %v546, %v547
    %v549 = vrot.slane %v548, 1
    %v550 = vmax.f32 %v548, %v549
    %v551 = vrot.slane %v471, 4
    %v552 = vmax.f32 %v471, %v551
    %v553 = vrot.slane %v552, 2
    %v554 = vmax.f32 %v552, %v553
    %v555 = vrot.slane %v554, 1
    %v556 = vmax.f32 %v554, %v555
    %v557 = vrot.slane %v473, 4
    %v558 = vmax.f32 %v473, %v557
    %v559 = vrot.slane %v558, 2
    %v560 = vmax.f32 %v558, %v559
    %v561 = vrot.slane %v560, 1
    %v562 = vmax.f32 %v560, %v561
    %v563 = vrot.slane %v475, 4
    %v564 = vmax.f32 %v475, %v563
    %v565 = vrot.slane %v564, 2
    %v566 = vmax.f32 %v564, %v565
    %v567 = vrot.slane %v566, 1
    %v568 = vmax.f32 %v566, %v567
    %v569 = vrot.slane %v477, 4
    %v570 = vmax.f32 %v477, %v569
    %v571 = vrot.slane %v570, 2
    %v572 = vmax.f32 %v570, %v571
    %v573 = vrot.slane %v572, 1
    %v574 = vmax.f32 %v572, %v573
    %v575 = vpack.c.bf16 %v484, %v484
    %v576 = vpack.c.bf16 %v490, %v490
    %v577 = vpack.c.bf16 %v496, %v496
    %v578 = vpack.c.bf16 %v502, %v502
    %v579 = vpack.c.bf16 %v508, %v508
    %v580 = vpack.c.bf16 %v514, %v514
    %v581 = vpack.c.bf16 %v520, %v520
    %v582 = vpack.c.bf16 %v526, %v526
    %v583 = vpack.c.bf16 %v532, %v532
    %v584 = vpack.c.bf16 %v538, %v538
    %v585 = vpack.c.bf16 %v544, %v544
    %v586 = vpack.c.bf16 %v550, %v550
    %v587 = vpack.c.bf16 %v556, %v556
    %v588 = vpack.c.bf16 %v562, %v562
    %v589 = vpack.c.bf16 %v568, %v568
    %v590 = vpack.c.bf16 %v574, %v574
    %v591 = vld [vmem:[#allocation5] sm:$0xff]
    %v592 = vld [vmem:[#allocation5 + $0x8] sm:$0xff]
    %v593 = vld [vmem:[#allocation5 + $0x10] sm:$0xff]
    %v594 = vld [vmem:[#allocation5 + $0x18] sm:$0xff]
    %v595 = vld [vmem:[#allocation5 + $0x20] sm:$0xff]
    %v596 = vld [vmem:[#allocation5 + $0x28] sm:$0xff]
    %v597 = vld [vmem:[#allocation5 + $0x30] sm:$0xff]
    %v598 = vld [vmem:[#allocation5 + $0x38] sm:$0xff]
    %v599 = vld [vmem:[#allocation5 + $0x40] sm:$0xff]
    %v600 = vld [vmem:[#allocation5 + $0x48] sm:$0xff]
    %v601 = vld [vmem:[#allocation5 + $0x50] sm:$0xff]
    %v602 = vld [vmem:[#allocation5 + $0x58] sm:$0xff]
    %v603 = vld [vmem:[#allocation5 + $0x60] sm:$0xff]
    %v604 = vld [vmem:[#allocation5 + $0x68] sm:$0xff]
    %v605 = vld [vmem:[#allocation5 + $0x70] sm:$0xff]
    %v606 = vld [vmem:[#allocation5 + $0x78] sm:$0xff]
    %v607 = vld [vmem:[#allocation5 + $0x80] sm:$0xff]
    %v608 = vld [vmem:[#allocation5 + $0x88] sm:$0xff]
    %v609 = vld [vmem:[#allocation5 + $0x90] sm:$0xff]
    %v610 = vld [vmem:[#allocation5 + $0x98] sm:$0xff]
    %v611 = vld [vmem:[#allocation5 + $0xa0] sm:$0xff]
    %v612 = vld [vmem:[#allocation5 + $0xa8] sm:$0xff]
    %v613 = vld [vmem:[#allocation5 + $0xb0] sm:$0xff]
    %v614 = vld [vmem:[#allocation5 + $0xb8] sm:$0xff]
    %v615 = vld [vmem:[#allocation5 + $0xc0] sm:$0xff]
    %v616 = vld [vmem:[#allocation5 + $0xc8] sm:$0xff]
    %v617 = vld [vmem:[#allocation5 + $0xd0] sm:$0xff]
    %v618 = vld [vmem:[#allocation5 + $0xd8] sm:$0xff]
    %v619 = vld [vmem:[#allocation5 + $0xe0] sm:$0xff]
    %v620 = vld [vmem:[#allocation5 + $0xe8] sm:$0xff]
    %v621 = vld [vmem:[#allocation5 + $0xf0] sm:$0xff]
    %v622 = vld [vmem:[#allocation5 + $0xf8] sm:$0xff]
    %v623 = vld [vmem:[#allocation5 + $0x100] sm:$0xff]
    %v624 = vld [vmem:[#allocation5 + $0x108] sm:$0xff]
    %v625 = vld [vmem:[#allocation5 + $0x110] sm:$0xff]
    %v626 = vld [vmem:[#allocation5 + $0x118] sm:$0xff]
    %v627 = vld [vmem:[#allocation5 + $0x120] sm:$0xff]
    %v628 = vld [vmem:[#allocation5 + $0x128] sm:$0xff]
    %v629 = vld [vmem:[#allocation5 + $0x130] sm:$0xff]
    %v630 = vld [vmem:[#allocation5 + $0x138] sm:$0xff]
    %v631 = vld [vmem:[#allocation5 + $0x140] sm:$0xff]
    %v632 = vld [vmem:[#allocation5 + $0x148] sm:$0xff]
    %v633 = vld [vmem:[#allocation5 + $0x150] sm:$0xff]
    %v634 = vld [vmem:[#allocation5 + $0x158] sm:$0xff]
    %v635 = vld [vmem:[#allocation5 + $0x160] sm:$0xff]
    %v636 = vld [vmem:[#allocation5 + $0x168] sm:$0xff]
    %v637 = vld [vmem:[#allocation5 + $0x170] sm:$0xff]
    %v638 = vld [vmem:[#allocation5 + $0x178] sm:$0xff]
    %v639 = vld [vmem:[#allocation5 + $0x180] sm:$0xff]
    %v640 = vld [vmem:[#allocation5 + $0x188] sm:$0xff]
    %v641 = vld [vmem:[#allocation5 + $0x190] sm:$0xff]
    %v642 = vld [vmem:[#allocation5 + $0x198] sm:$0xff]
    %v643 = vld [vmem:[#allocation5 + $0x1a0] sm:$0xff]
    %v644 = vld [vmem:[#allocation5 + $0x1a8] sm:$0xff]
    %v645 = vld [vmem:[#allocation5 + $0x1b0] sm:$0xff]
    %v646 = vld [vmem:[#allocation5 + $0x1b8] sm:$0xff]
    %v647 = vld [vmem:[#allocation5 + $0x1c0] sm:$0xff]
    %v648 = vld [vmem:[#allocation5 + $0x1c8] sm:$0xff]
    %v649 = vld [vmem:[#allocation5 + $0x1d0] sm:$0xff]
    %v650 = vld [vmem:[#allocation5 + $0x1d8] sm:$0xff]
    %v651 = vld [vmem:[#allocation5 + $0x1e0] sm:$0xff]
    %v652 = vld [vmem:[#allocation5 + $0x1e8] sm:$0xff]
    %v653 = vld [vmem:[#allocation5 + $0x1f0] sm:$0xff]
    %v654 = vld [vmem:[#allocation5 + $0x1f8] sm:$0xff]
    %v671 = vunpack.c.l.b16 %v575
    %v672 = vunpack.c.l.b16 %v576
    %v673 = vunpack.c.l.b16 %v577
    %v674 = vunpack.c.l.b16 %v578
    %v675 = vunpack.c.l.b16 %v579
    %v676 = vunpack.c.l.b16 %v580
    %v677 = vunpack.c.l.b16 %v581
    %v678 = vunpack.c.l.b16 %v582
    %v679 = vunpack.c.l.b16 %v583
    %v680 = vunpack.c.l.b16 %v584
    %v681 = vunpack.c.l.b16 %v585
    %v682 = vunpack.c.l.b16 %v586
    %v683 = vunpack.c.l.b16 %v587
    %v684 = vunpack.c.l.b16 %v588
    %v685 = vunpack.c.l.b16 %v589
    %v686 = vunpack.c.l.b16 %v590
    %vm687 = vcmask 1041409
    %v688 = vsel %vm687, %v673, %v671
    %vm689 = vcmask 1042434
    %v690 = vsel %vm689, %v675, %v688
    %vm691 = vcmask 1043459
    %v692 = vsel %vm691, %v677, %v690
    %vm693 = vcmask 1044484
    %v694 = vsel %vm693, %v679, %v692
    %vm695 = vcmask 1045509
    %v696 = vsel %vm695, %v681, %v694
    %vm697 = vcmask 1046534
    %v698 = vsel %vm697, %v683, %v696
    %vm699 = vcmask 1047559
    %v700 = vsel %vm699, %v685, %v698
    %v701 = vsel %vm687, %v674, %v672
    %v702 = vsel %vm689, %v676, %v701
    %v703 = vsel %vm691, %v678, %v702
    %v704 = vsel %vm693, %v680, %v703
    %v705 = vsel %vm695, %v682, %v704
    %v706 = vsel %vm697, %v684, %v705
    %v707 = vsel %vm699, %v686, %v706
    %v708 = vpack.c.b16 %v700, %v700
    %v709 = vpack.c.b16 %v707, %v707
    %v776 = vunpack.c.l.b16 %v591
    %v777 = vunpack.c.h.b16 %v591
    %v778 = vunpack.c.l.b16 %v592
    %v779 = vunpack.c.h.b16 %v592
    %v780 = vunpack.c.l.b16 %v593
    %v781 = vunpack.c.h.b16 %v593
    %v782 = vunpack.c.l.b16 %v594
    %v783 = vunpack.c.h.b16 %v594
    %v784 = vunpack.c.l.b16 %v595
    %v785 = vunpack.c.h.b16 %v595
    %v786 = vunpack.c.l.b16 %v596
    %v787 = vunpack.c.h.b16 %v596
    %v788 = vunpack.c.l.b16 %v597
    %v789 = vunpack.c.h.b16 %v597
    %v790 = vunpack.c.l.b16 %v598
    %v791 = vunpack.c.h.b16 %v598
    %v792 = vunpack.c.l.b16 %v599
    %v793 = vunpack.c.h.b16 %v599
    %v794 = vunpack.c.l.b16 %v600
    %v795 = vunpack.c.h.b16 %v600
    %v796 = vunpack.c.l.b16 %v601
    %v797 = vunpack.c.h.b16 %v601
    %v798 = vunpack.c.l.b16 %v602
    %v799 = vunpack.c.h.b16 %v602
    %v800 = vunpack.c.l.b16 %v603
    %v801 = vunpack.c.h.b16 %v603
    %v802 = vunpack.c.l.b16 %v604
    %v803 = vunpack.c.h.b16 %v604
    %v804 = vunpack.c.l.b16 %v605
    %v805 = vunpack.c.h.b16 %v605
    %v806 = vunpack.c.l.b16 %v606
    %v807 = vunpack.c.h.b16 %v606
    %v808 = vunpack.c.l.b16 %v607
    %v809 = vunpack.c.h.b16 %v607
    %v810 = vunpack.c.l.b16 %v608
    %v811 = vunpack.c.h.b16 %v608
    %v812 = vunpack.c.l.b16 %v609
    %v813 = vunpack.c.h.b16 %v609
    %v814 = vunpack.c.l.b16 %v610
    %v815 = vunpack.c.h.b16 %v610
    %v816 = vunpack.c.l.b16 %v611
    %v817 = vunpack.c.h.b16 %v611
    %v818 = vunpack.c.l.b16 %v612
    %v819 = vunpack.c.h.b16 %v612
    %v820 = vunpack.c.l.b16 %v613
    %v821 = vunpack.c.h.b16 %v613
    %v822 = vunpack.c.l.b16 %v614
    %v823 = vunpack.c.h.b16 %v614
    %v824 = vunpack.c.l.b16 %v615
    %v825 = vunpack.c.h.b16 %v615
    %v826 = vunpack.c.l.b16 %v616
    %v827 = vunpack.c.h.b16 %v616
    %v828 = vunpack.c.l.b16 %v617
    %v829 = vunpack.c.h.b16 %v617
    %v830 = vunpack.c.l.b16 %v618
    %v831 = vunpack.c.h.b16 %v618
    %v832 = vunpack.c.l.b16 %v619
    %v833 = vunpack.c.h.b16 %v619
    %v834 = vunpack.c.l.b16 %v620
    %v835 = vunpack.c.h.b16 %v620
    %v836 = vunpack.c.l.b16 %v621
    %v837 = vunpack.c.h.b16 %v621
    %v838 = vunpack.c.l.b16 %v622
    %v839 = vunpack.c.h.b16 %v622
    %v840 = vunpack.c.l.b16 %v623
    %v841 = vunpack.c.h.b16 %v623
    %v842 = vunpack.c.l.b16 %v624
    %v843 = vunpack.c.h.b16 %v624
    %v844 = vunpack.c.l.b16 %v625
    %v845 = vunpack.c.h.b16 %v625
    %v846 = vunpack.c.l.b16 %v626
    %v847 = vunpack.c.h.b16 %v626
    %v848 = vunpack.c.l.b16 %v627
    %v849 = vunpack.c.h.b16 %v627
    %v850 = vunpack.c.l.b16 %v628
    %v851 = vunpack.c.h.b16 %v628
    %v852 = vunpack.c.l.b16 %v629
    %v853 = vunpack.c.h.b16 %v629
    %v854 = vunpack.c.l.b16 %v630
    %v855 = vunpack.c.h.b16 %v630
    %v856 = vunpack.c.l.b16 %v631
    %v857 = vunpack.c.h.b16 %v631
    %v858 = vunpack.c.l.b16 %v632
    %v859 = vunpack.c.h.b16 %v632
    %v860 = vunpack.c.l.b16 %v633
    %v861 = vunpack.c.h.b16 %v633
    %v862 = vunpack.c.l.b16 %v634
    %v863 = vunpack.c.h.b16 %v634
    %v864 = vunpack.c.l.b16 %v635
    %v865 = vunpack.c.h.b16 %v635
    %v866 = vunpack.c.l.b16 %v636
    %v867 = vunpack.c.h.b16 %v636
    %v868 = vunpack.c.l.b16 %v637
    %v869 = vunpack.c.h.b16 %v637
    %v870 = vunpack.c.l.b16 %v638
    %v871 = vunpack.c.h.b16 %v638
    %v872 = vunpack.c.l.b16 %v639
    %v873 = vunpack.c.h.b16 %v639
    %v874 = vunpack.c.l.b16 %v640
    %v875 = vunpack.c.h.b16 %v640
    %v876 = vunpack.c.l.b16 %v641
    %v877 = vunpack.c.h.b16 %v641
    %v878 = vunpack.c.l.b16 %v642
    %v879 = vunpack.c.h.b16 %v642
    %v880 = vunpack.c.l.b16 %v643
    %v881 = vunpack.c.h.b16 %v643
    %v882 = vunpack.c.l.b16 %v644
    %v883 = vunpack.c.h.b16 %v644
    %v884 = vunpack.c.l.b16 %v645
    %v885 = vunpack.c.h.b16 %v645
    %v886 = vunpack.c.l.b16 %v646
    %v887 = vunpack.c.h.b16 %v646
    %v888 = vunpack.c.l.b16 %v647
    %v889 = vunpack.c.h.b16 %v647
    %v890 = vunpack.c.l.b16 %v648
    %v891 = vunpack.c.h.b16 %v648
    %v892 = vunpack.c.l.b16 %v649
    %v893 = vunpack.c.h.b16 %v649
    %v894 = vunpack.c.l.b16 %v650
    %v895 = vunpack.c.h.b16 %v650
    %v896 = vunpack.c.l.b16 %v651
    %v897 = vunpack.c.h.b16 %v651
    %v898 = vunpack.c.l.b16 %v652
    %v899 = vunpack.c.h.b16 %v652
    %v900 = vunpack.c.l.b16 %v653
    %v901 = vunpack.c.h.b16 %v653
    %v902 = vunpack.c.l.b16 %v654
    %v903 = vunpack.c.h.b16 %v654
    %v904 = vpack.c.b16 %v780, %v776
    %v905 = vpack.c.b16 %v781, %v777
    %v906 = vpack.c.b16 %v782, %v778
    %v907 = vpack.c.b16 %v783, %v779
    %v908 = vpack.c.b16 %v788, %v784
    %v909 = vpack.c.b16 %v789, %v785
    %v910 = vpack.c.b16 %v790, %v786
    %v911 = vpack.c.b16 %v791, %v787
    %v912 = vpack.c.b16 %v796, %v792
    %v913 = vpack.c.b16 %v797, %v793
    %v914 = vpack.c.b16 %v798, %v794
    %v915 = vpack.c.b16 %v799, %v795
    %v916 = vpack.c.b16 %v804, %v800
    %v917 = vpack.c.b16 %v805, %v801
    %v918 = vpack.c.b16 %v806, %v802
    %v919 = vpack.c.b16 %v807, %v803
    %v920 = vpack.c.b16 %v812, %v808
    %v921 = vpack.c.b16 %v813, %v809
    %v922 = vpack.c.b16 %v814, %v810
    %v923 = vpack.c.b16 %v815, %v811
    %v924 = vpack.c.b16 %v820, %v816
    %v925 = vpack.c.b16 %v821, %v817
    %v926 = vpack.c.b16 %v822, %v818
    %v927 = vpack.c.b16 %v823, %v819
    %v928 = vpack.c.b16 %v828, %v824
    %v929 = vpack.c.b16 %v829, %v825
    %v930 = vpack.c.b16 %v830, %v826
    %v931 = vpack.c.b16 %v831, %v827
    %v932 = vpack.c.b16 %v836, %v832
    %v933 = vpack.c.b16 %v837, %v833
    %v934 = vpack.c.b16 %v838, %v834
    %v935 = vpack.c.b16 %v839, %v835
    %v936 = vpack.c.b16 %v844, %v840
    %v937 = vpack.c.b16 %v845, %v841
    %v938 = vpack.c.b16 %v846, %v842
    %v939 = vpack.c.b16 %v847, %v843
    %v940 = vpack.c.b16 %v852, %v848
    %v941 = vpack.c.b16 %v853, %v849
    %v942 = vpack.c.b16 %v854, %v850
    %v943 = vpack.c.b16 %v855, %v851
    %v944 = vpack.c.b16 %v860, %v856
    %v945 = vpack.c.b16 %v861, %v857
    %v946 = vpack.c.b16 %v862, %v858
    %v947 = vpack.c.b16 %v863, %v859
    %v948 = vpack.c.b16 %v868, %v864
    %v949 = vpack.c.b16 %v869, %v865
    %v950 = vpack.c.b16 %v870, %v866
    %v951 = vpack.c.b16 %v871, %v867
    %v952 = vpack.c.b16 %v876, %v872
    %v953 = vpack.c.b16 %v877, %v873
    %v954 = vpack.c.b16 %v878, %v874
    %v955 = vpack.c.b16 %v879, %v875
    %v956 = vpack.c.b16 %v884, %v880
    %v957 = vpack.c.b16 %v885, %v881
    %v958 = vpack.c.b16 %v886, %v882
    %v959 = vpack.c.b16 %v887, %v883
    %v960 = vpack.c.b16 %v892, %v888
    %v961 = vpack.c.b16 %v893, %v889
    %v962 = vpack.c.b16 %v894, %v890
    %v963 = vpack.c.b16 %v895, %v891
    %v964 = vpack.c.b16 %v900, %v896
    %v965 = vpack.c.b16 %v901, %v897
    %v966 = vpack.c.b16 %v902, %v898
    %v967 = vpack.c.b16 %v903, %v899
    %1032 = vmatprep.subr.bf16.mxu0 %v933
    %1033 = vmatpush1.bf16.msra.mxu0 %v932
    %1034 = vmatprep.subr.bf16.mxu0 %v929
    %1035 = vmatpush1.bf16.msra.mxu0 %v928
    %1036 = vmatprep.subr.bf16.mxu0 %v925
    %1037 = vmatpush1.bf16.msra.mxu0 %v924
    %1038 = vmatprep.subr.bf16.mxu0 %v921
    %1039 = vmatpush1.bf16.msra.mxu0 %v920
    %1040 = vmatprep.subr.bf16.mxu0 %v917
    %1041 = vmatpush1.bf16.msra.mxu0 %v916
    %1042 = vmatprep.subr.bf16.mxu0 %v913
    %1043 = vmatpush1.bf16.msra.mxu0 %v912
    %1044 = vmatprep.subr.bf16.mxu0 %v909
    %1045 = vmatpush1.bf16.msra.mxu0 %v908
    %1046 = vmatprep.subr.bf16.mxu0 %v905
    %1047 = vmatpush1.bf16.msra.mxu0 %v904
    %1048 = vmatprep.subr.bf16.mxu0 %v965
    %1049 = vmatpush2.bf16.msra.mxu0 %v964
    %1050 = vmatprep.subr.bf16.mxu0 %v961
    %1051 = vmatpush2.bf16.msra.mxu0 %v960
    %1052 = vmatprep.subr.bf16.mxu0 %v957
    %1053 = vmatpush2.bf16.msra.mxu0 %v956
    %1054 = vmatprep.subr.bf16.mxu0 %v953
    %1055 = vmatpush2.bf16.msra.mxu0 %v952
    %1056 = vmatprep.subr.bf16.mxu0 %v949
    %1057 = vmatpush2.bf16.msra.mxu0 %v948
    %1058 = vmatprep.subr.bf16.mxu0 %v945
    %1059 = vmatpush2.bf16.msra.mxu0 %v944
    %1060 = vmatprep.subr.bf16.mxu0 %v941
    %1061 = vmatpush2.bf16.msra.mxu0 %v940
    %1062 = vmatprep.subr.bf16.mxu0 %v937
    %1063 = vmatpush2.bf16.msra.mxu0 %v936
    %1064 = vmatprep.mubr.bf16.mxu0 %v709
    %1065 = vmatmul.mubr.bf16.gmra.mxu0 %v708
    %v1066 = vpop.f32.mrf.mxu0
    %v1067 = vadd.f32 0.0, %v1066
    %v1068 = vpop.f32.mrf.mxu0
    %v1069 = vadd.f32 0.0, %v1068
    %v1070 = vpop.f32.mrf.mxu0
    %v1071 = vpop.f32.mrf.mxu0
    %1072 = vdwg.mxu0
    %1073 = vmatprep.subr.bf16.mxu0 %v935
    %1074 = vmatpush1.bf16.msra.mxu0 %v934
    %1075 = vmatprep.subr.bf16.mxu0 %v931
    %1076 = vmatpush1.bf16.msra.mxu0 %v930
    %1077 = vmatprep.subr.bf16.mxu0 %v927
    %1078 = vmatpush1.bf16.msra.mxu0 %v926
    %1079 = vmatprep.subr.bf16.mxu0 %v923
    %1080 = vmatpush1.bf16.msra.mxu0 %v922
    %1081 = vmatprep.subr.bf16.mxu0 %v919
    %1082 = vmatpush1.bf16.msra.mxu0 %v918
    %1083 = vmatprep.subr.bf16.mxu0 %v915
    %1084 = vmatpush1.bf16.msra.mxu0 %v914
    %1085 = vmatprep.subr.bf16.mxu0 %v911
    %1086 = vmatpush1.bf16.msra.mxu0 %v910
    %1087 = vmatprep.subr.bf16.mxu0 %v907
    %1088 = vmatpush1.bf16.msra.mxu0 %v906
    %1089 = vmatprep.subr.bf16.mxu0 %v967
    %1090 = vmatpush2.bf16.msra.mxu0 %v966
    %1091 = vmatprep.subr.bf16.mxu0 %v963
    %1092 = vmatpush2.bf16.msra.mxu0 %v962
    %1093 = vmatprep.subr.bf16.mxu0 %v959
    %1094 = vmatpush2.bf16.msra.mxu0 %v958
    %1095 = vmatprep.subr.bf16.mxu0 %v955
    %1096 = vmatpush2.bf16.msra.mxu0 %v954
    %1097 = vmatprep.subr.bf16.mxu0 %v951
    %1098 = vmatpush2.bf16.msra.mxu0 %v950
    %1099 = vmatprep.subr.bf16.mxu0 %v947
    %1100 = vmatpush2.bf16.msra.mxu0 %v946
    %1101 = vmatprep.subr.bf16.mxu0 %v943
    %1102 = vmatpush2.bf16.msra.mxu0 %v942
    %1103 = vmatprep.subr.bf16.mxu0 %v939
    %1104 = vmatpush2.bf16.msra.mxu0 %v938
    %1105 = vmatprep.mubr.bf16.mxu0 %v709
    %1106 = vmatmul.mubr.bf16.gmra.mxu0 %v708
    %v1107 = vpop.f32.mrf.mxu0
    %v1108 = vadd.f32 0.0, %v1107
    %v1109 = vpop.f32.mrf.mxu0
    %v1110 = vadd.f32 0.0, %v1109
    %v1111 = vpop.f32.mrf.mxu0
    %v1112 = vpop.f32.mrf.mxu0
    %1113 = vdwg.mxu0
    %v1114 = vpack.c.bf16 %v445, %v441
    %v1115 = vpack.c.bf16 %v447, %v443
    %v1116 = vpack.c.bf16 %v455, %v451
    %v1117 = vpack.c.bf16 %v457, %v453
    %v1118 = vpack.c.bf16 %v465, %v461
    %v1119 = vpack.c.bf16 %v467, %v463
    %v1120 = vpack.c.bf16 %v475, %v471
    %v1121 = vpack.c.bf16 %v477, %v473
    %v1122 = vld [vmem:[#allocation7] sm:$0xff]
    %v1123 = vld [vmem:[#allocation7 + $0x8] sm:$0xff]
    %v1124 = vld [vmem:[#allocation7 + $0x10] sm:$0xff]
    %v1125 = vld [vmem:[#allocation7 + $0x18] sm:$0xff]
    %v1126 = vld [vmem:[#allocation7 + $0x20] sm:$0xff]
    %v1127 = vld [vmem:[#allocation7 + $0x28] sm:$0xff]
    %v1128 = vld [vmem:[#allocation7 + $0x30] sm:$0xff]
    %v1129 = vld [vmem:[#allocation7 + $0x38] sm:$0xff]
    %v1130 = vld [vmem:[#allocation7 + $0x40] sm:$0xff]
    %v1131 = vld [vmem:[#allocation7 + $0x48] sm:$0xff]
    %v1132 = vld [vmem:[#allocation7 + $0x50] sm:$0xff]
    %v1133 = vld [vmem:[#allocation7 + $0x58] sm:$0xff]
    %v1134 = vld [vmem:[#allocation7 + $0x60] sm:$0xff]
    %v1135 = vld [vmem:[#allocation7 + $0x68] sm:$0xff]
    %v1136 = vld [vmem:[#allocation7 + $0x70] sm:$0xff]
    %v1137 = vld [vmem:[#allocation7 + $0x78] sm:$0xff]
    %v1138 = vld [vmem:[#allocation7 + $0x80] sm:$0xff]
    %v1139 = vld [vmem:[#allocation7 + $0x88] sm:$0xff]
    %v1140 = vld [vmem:[#allocation7 + $0x90] sm:$0xff]
    %v1141 = vld [vmem:[#allocation7 + $0x98] sm:$0xff]
    %v1142 = vld [vmem:[#allocation7 + $0xa0] sm:$0xff]
    %v1143 = vld [vmem:[#allocation7 + $0xa8] sm:$0xff]
    %v1144 = vld [vmem:[#allocation7 + $0xb0] sm:$0xff]
    %v1145 = vld [vmem:[#allocation7 + $0xb8] sm:$0xff]
    %v1146 = vld [vmem:[#allocation7 + $0xc0] sm:$0xff]
    %v1147 = vld [vmem:[#allocation7 + $0xc8] sm:$0xff]
    %v1148 = vld [vmem:[#allocation7 + $0xd0] sm:$0xff]
    %v1149 = vld [vmem:[#allocation7 + $0xd8] sm:$0xff]
    %v1150 = vld [vmem:[#allocation7 + $0xe0] sm:$0xff]
    %v1151 = vld [vmem:[#allocation7 + $0xe8] sm:$0xff]
    %v1152 = vld [vmem:[#allocation7 + $0xf0] sm:$0xff]
    %v1153 = vld [vmem:[#allocation7 + $0xf8] sm:$0xff]
    %v1154 = vld [vmem:[#allocation7 + $0x100] sm:$0xff]
    %v1155 = vld [vmem:[#allocation7 + $0x108] sm:$0xff]
    %v1156 = vld [vmem:[#allocation7 + $0x110] sm:$0xff]
    %v1157 = vld [vmem:[#allocation7 + $0x118] sm:$0xff]
    %v1158 = vld [vmem:[#allocation7 + $0x120] sm:$0xff]
    %v1159 = vld [vmem:[#allocation7 + $0x128] sm:$0xff]
    %v1160 = vld [vmem:[#allocation7 + $0x130] sm:$0xff]
    %v1161 = vld [vmem:[#allocation7 + $0x138] sm:$0xff]
    %v1162 = vld [vmem:[#allocation7 + $0x140] sm:$0xff]
    %v1163 = vld [vmem:[#allocation7 + $0x148] sm:$0xff]
    %v1164 = vld [vmem:[#allocation7 + $0x150] sm:$0xff]
    %v1165 = vld [vmem:[#allocation7 + $0x158] sm:$0xff]
    %v1166 = vld [vmem:[#allocation7 + $0x160] sm:$0xff]
    %v1167 = vld [vmem:[#allocation7 + $0x168] sm:$0xff]
    %v1168 = vld [vmem:[#allocation7 + $0x170] sm:$0xff]
    %v1169 = vld [vmem:[#allocation7 + $0x178] sm:$0xff]
    %v1170 = vld [vmem:[#allocation7 + $0x180] sm:$0xff]
    %v1171 = vld [vmem:[#allocation7 + $0x188] sm:$0xff]
    %v1172 = vld [vmem:[#allocation7 + $0x190] sm:$0xff]
    %v1173 = vld [vmem:[#allocation7 + $0x198] sm:$0xff]
    %v1174 = vld [vmem:[#allocation7 + $0x1a0] sm:$0xff]
    %v1175 = vld [vmem:[#allocation7 + $0x1a8] sm:$0xff]
    %v1176 = vld [vmem:[#allocation7 + $0x1b0] sm:$0xff]
    %v1177 = vld [vmem:[#allocation7 + $0x1b8] sm:$0xff]
    %v1178 = vld [vmem:[#allocation7 + $0x1c0] sm:$0xff]
    %v1179 = vld [vmem:[#allocation7 + $0x1c8] sm:$0xff]
    %v1180 = vld [vmem:[#allocation7 + $0x1d0] sm:$0xff]
    %v1181 = vld [vmem:[#allocation7 + $0x1d8] sm:$0xff]
    %v1182 = vld [vmem:[#allocation7 + $0x1e0] sm:$0xff]
    %v1183 = vld [vmem:[#allocation7 + $0x1e8] sm:$0xff]
    %v1184 = vld [vmem:[#allocation7 + $0x1f0] sm:$0xff]
    %v1185 = vld [vmem:[#allocation7 + $0x1f8] sm:$0xff]
    %v1186 = vld [vmem:[%s9] sm:$0xf]
    %v1188 = vlaneseq
    %v1189 = vshrl.u32 %v1188, 7
    %v1190 = vsub.s32 0, %v1189
    %v1191 = vrot.slane %v1186, %v1190
    %v1192 = vlaneseq
    %v1193 = vshrl.u32 %v1192, 7
    %v1194 = vsub.s32 1, %v1193
    %v1195 = vrot.slane %v1186, %v1194
    %v1196 = vlaneseq
    %v1197 = vshrl.u32 %v1196, 7
    %v1198 = vsub.s32 2, %v1197
    %v1199 = vrot.slane %v1186, %v1198
    %v1200 = vlaneseq
    %v1201 = vshrl.u32 %v1200, 7
    %v1202 = vsub.s32 3, %v1201
    %v1203 = vrot.slane %v1186, %v1202
    %v1272 = vunpack.c.l.b16 %v1122
    %v1273 = vunpack.c.h.b16 %v1122
    %v1274 = vunpack.c.l.b16 %v1123
    %v1275 = vunpack.c.h.b16 %v1123
    %v1276 = vunpack.c.l.b16 %v1124
    %v1277 = vunpack.c.h.b16 %v1124
    %v1278 = vunpack.c.l.b16 %v1125
    %v1279 = vunpack.c.h.b16 %v1125
    %v1280 = vunpack.c.l.b16 %v1126
    %v1281 = vunpack.c.h.b16 %v1126
    %v1282 = vunpack.c.l.b16 %v1127
    %v1283 = vunpack.c.h.b16 %v1127
    %v1284 = vunpack.c.l.b16 %v1128
    %v1285 = vunpack.c.h.b16 %v1128
    %v1286 = vunpack.c.l.b16 %v1129
    %v1287 = vunpack.c.h.b16 %v1129
    %v1288 = vunpack.c.l.b16 %v1130
    %v1289 = vunpack.c.h.b16 %v1130
    %v1290 = vunpack.c.l.b16 %v1131
    %v1291 = vunpack.c.h.b16 %v1131
    %v1292 = vunpack.c.l.b16 %v1132
    %v1293 = vunpack.c.h.b16 %v1132
    %v1294 = vunpack.c.l.b16 %v1133
    %v1295 = vunpack.c.h.b16 %v1133
    %v1296 = vunpack.c.l.b16 %v1134
    %v1297 = vunpack.c.h.b16 %v1134
    %v1298 = vunpack.c.l.b16 %v1135
    %v1299 = vunpack.c.h.b16 %v1135
    %v1300 = vunpack.c.l.b16 %v1136
    %v1301 = vunpack.c.h.b16 %v1136
    %v1302 = vunpack.c.l.b16 %v1137
    %v1303 = vunpack.c.h.b16 %v1137
    %v1304 = vunpack.c.l.b16 %v1138
    %v1305 = vunpack.c.h.b16 %v1138
    %v1306 = vunpack.c.l.b16 %v1139
    %v1307 = vunpack.c.h.b16 %v1139
    %v1308 = vunpack.c.l.b16 %v1140
    %v1309 = vunpack.c.h.b16 %v1140
    %v1310 = vunpack.c.l.b16 %v1141
    %v1311 = vunpack.c.h.b16 %v1141
    %v1312 = vunpack.c.l.b16 %v1142
    %v1313 = vunpack.c.h.b16 %v1142
    %v1314 = vunpack.c.l.b16 %v1143
    %v1315 = vunpack.c.h.b16 %v1143
    %v1316 = vunpack.c.l.b16 %v1144
    %v1317 = vunpack.c.h.b16 %v1144
    %v1318 = vunpack.c.l.b16 %v1145
    %v1319 = vunpack.c.h.b16 %v1145
    %v1320 = vunpack.c.l.b16 %v1146
    %v1321 = vunpack.c.h.b16 %v1146
    %v1322 = vunpack.c.l.b16 %v1147
    %v1323 = vunpack.c.h.b16 %v1147
    %v1324 = vunpack.c.l.b16 %v1148
    %v1325 = vunpack.c.h.b16 %v1148
    %v1326 = vunpack.c.l.b16 %v1149
    %v1327 = vunpack.c.h.b16 %v1149
    %v1328 = vunpack.c.l.b16 %v1150
    %v1329 = vunpack.c.h.b16 %v1150
    %v1330 = vunpack.c.l.b16 %v1151
    %v1331 = vunpack.c.h.b16 %v1151
    %v1332 = vunpack.c.l.b16 %v1152
    %v1333 = vunpack.c.h.b16 %v1152
    %v1334 = vunpack.c.l.b16 %v1153
    %v1335 = vunpack.c.h.b16 %v1153
    %v1336 = vunpack.c.l.b16 %v1154
    %v1337 = vunpack.c.h.b16 %v1154
    %v1338 = vunpack.c.l.b16 %v1155
    %v1339 = vunpack.c.h.b16 %v1155
    %v1340 = vunpack.c.l.b16 %v1156
    %v1341 = vunpack.c.h.b16 %v1156
    %v1342 = vunpack.c.l.b16 %v1157
    %v1343 = vunpack.c.h.b16 %v1157
    %v1344 = vunpack.c.l.b16 %v1158
    %v1345 = vunpack.c.h.b16 %v1158
    %v1346 = vunpack.c.l.b16 %v1159
    %v1347 = vunpack.c.h.b16 %v1159
    %v1348 = vunpack.c.l.b16 %v1160
    %v1349 = vunpack.c.h.b16 %v1160
    %v1350 = vunpack.c.l.b16 %v1161
    %v1351 = vunpack.c.h.b16 %v1161
    %v1352 = vunpack.c.l.b16 %v1162
    %v1353 = vunpack.c.h.b16 %v1162
    %v1354 = vunpack.c.l.b16 %v1163
    %v1355 = vunpack.c.h.b16 %v1163
    %v1356 = vunpack.c.l.b16 %v1164
    %v1357 = vunpack.c.h.b16 %v1164
    %v1358 = vunpack.c.l.b16 %v1165
    %v1359 = vunpack.c.h.b16 %v1165
    %v1360 = vunpack.c.l.b16 %v1166
    %v1361 = vunpack.c.h.b16 %v1166
    %v1362 = vunpack.c.l.b16 %v1167
    %v1363 = vunpack.c.h.b16 %v1167
    %v1364 = vunpack.c.l.b16 %v1168
    %v1365 = vunpack.c.h.b16 %v1168
    %v1366 = vunpack.c.l.b16 %v1169
    %v1367 = vunpack.c.h.b16 %v1169
    %v1368 = vunpack.c.l.b16 %v1170
    %v1369 = vunpack.c.h.b16 %v1170
    %v1370 = vunpack.c.l.b16 %v1171
    %v1371 = vunpack.c.h.b16 %v1171
    %v1372 = vunpack.c.l.b16 %v1172
    %v1373 = vunpack.c.h.b16 %v1172
    %v1374 = vunpack.c.l.b16 %v1173
    %v1375 = vunpack.c.h.b16 %v1173
    %v1376 = vunpack.c.l.b16 %v1174
    %v1377 = vunpack.c.h.b16 %v1174
    %v1378 = vunpack.c.l.b16 %v1175
    %v1379 = vunpack.c.h.b16 %v1175
    %v1380 = vunpack.c.l.b16 %v1176
    %v1381 = vunpack.c.h.b16 %v1176
    %v1382 = vunpack.c.l.b16 %v1177
    %v1383 = vunpack.c.h.b16 %v1177
    %v1384 = vunpack.c.l.b16 %v1178
    %v1385 = vunpack.c.h.b16 %v1178
    %v1386 = vunpack.c.l.b16 %v1179
    %v1387 = vunpack.c.h.b16 %v1179
    %v1388 = vunpack.c.l.b16 %v1180
    %v1389 = vunpack.c.h.b16 %v1180
    %v1390 = vunpack.c.l.b16 %v1181
    %v1391 = vunpack.c.h.b16 %v1181
    %v1392 = vunpack.c.l.b16 %v1182
    %v1393 = vunpack.c.h.b16 %v1182
    %v1394 = vunpack.c.l.b16 %v1183
    %v1395 = vunpack.c.h.b16 %v1183
    %v1396 = vunpack.c.l.b16 %v1184
    %v1397 = vunpack.c.h.b16 %v1184
    %v1398 = vunpack.c.l.b16 %v1185
    %v1399 = vunpack.c.h.b16 %v1185
    %v1400 = vpack.c.b16 %v1276, %v1272
    %v1401 = vpack.c.b16 %v1277, %v1273
    %v1402 = vpack.c.b16 %v1278, %v1274
    %v1403 = vpack.c.b16 %v1279, %v1275
    %v1404 = vpack.c.b16 %v1284, %v1280
    %v1405 = vpack.c.b16 %v1285, %v1281
    %v1406 = vpack.c.b16 %v1286, %v1282
    %v1407 = vpack.c.b16 %v1287, %v1283
    %v1408 = vpack.c.b16 %v1292, %v1288
    %v1409 = vpack.c.b16 %v1293, %v1289
    %v1410 = vpack.c.b16 %v1294, %v1290
    %v1411 = vpack.c.b16 %v1295, %v1291
    %v1412 = vpack.c.b16 %v1300, %v1296
    %v1413 = vpack.c.b16 %v1301, %v1297
    %v1414 = vpack.c.b16 %v1302, %v1298
    %v1415 = vpack.c.b16 %v1303, %v1299
    %v1416 = vpack.c.b16 %v1308, %v1304
    %v1417 = vpack.c.b16 %v1309, %v1305
    %v1418 = vpack.c.b16 %v1310, %v1306
    %v1419 = vpack.c.b16 %v1311, %v1307
    %v1420 = vpack.c.b16 %v1316, %v1312
    %v1421 = vpack.c.b16 %v1317, %v1313
    %v1422 = vpack.c.b16 %v1318, %v1314
    %v1423 = vpack.c.b16 %v1319, %v1315
    %v1424 = vpack.c.b16 %v1324, %v1320
    %v1425 = vpack.c.b16 %v1325, %v1321
    %v1426 = vpack.c.b16 %v1326, %v1322
    %v1427 = vpack.c.b16 %v1327, %v1323
    %v1428 = vpack.c.b16 %v1332, %v1328
    %v1429 = vpack.c.b16 %v1333, %v1329
    %v1430 = vpack.c.b16 %v1334, %v1330
    %v1431 = vpack.c.b16 %v1335, %v1331
    %v1432 = vpack.c.b16 %v1340, %v1336
    %v1433 = vpack.c.b16 %v1341, %v1337
    %v1434 = vpack.c.b16 %v1342, %v1338
    %v1435 = vpack.c.b16 %v1343, %v1339
    %v1436 = vpack.c.b16 %v1348, %v1344
    %v1437 = vpack.c.b16 %v1349, %v1345
    %v1438 = vpack.c.b16 %v1350, %v1346
    %v1439 = vpack.c.b16 %v1351, %v1347
    %v1440 = vpack.c.b16 %v1356, %v1352
    %v1441 = vpack.c.b16 %v1357, %v1353
    %v1442 = vpack.c.b16 %v1358, %v1354
    %v1443 = vpack.c.b16 %v1359, %v1355
    %v1444 = vpack.c.b16 %v1364, %v1360
    %v1445 = vpack.c.b16 %v1365, %v1361
    %v1446 = vpack.c.b16 %v1366, %v1362
    %v1447 = vpack.c.b16 %v1367, %v1363
    %v1448 = vpack.c.b16 %v1372, %v1368
    %v1449 = vpack.c.b16 %v1373, %v1369
    %v1450 = vpack.c.b16 %v1374, %v1370
    %v1451 = vpack.c.b16 %v1375, %v1371
    %v1452 = vpack.c.b16 %v1380, %v1376
    %v1453 = vpack.c.b16 %v1381, %v1377
    %v1454 = vpack.c.b16 %v1382, %v1378
    %v1455 = vpack.c.b16 %v1383, %v1379
    %v1456 = vpack.c.b16 %v1388, %v1384
    %v1457 = vpack.c.b16 %v1389, %v1385
    %v1458 = vpack.c.b16 %v1390, %v1386
    %v1459 = vpack.c.b16 %v1391, %v1387
    %v1460 = vpack.c.b16 %v1396, %v1392
    %v1461 = vpack.c.b16 %v1397, %v1393
    %v1462 = vpack.c.b16 %v1398, %v1394
    %v1463 = vpack.c.b16 %v1399, %v1395
    %1528 = vmatprep.subr.bf16.mxu0 %v1429
    %1529 = vmatpush1.bf16.msra.mxu0 %v1428
    %1530 = vmatprep.subr.bf16.mxu0 %v1425
    %1531 = vmatpush1.bf16.msra.mxu0 %v1424
    %1532 = vmatprep.subr.bf16.mxu0 %v1421
    %1533 = vmatpush1.bf16.msra.mxu0 %v1420
    %1534 = vmatprep.subr.bf16.mxu0 %v1417
    %1535 = vmatpush1.bf16.msra.mxu0 %v1416
    %1536 = vmatprep.subr.bf16.mxu0 %v1413
    %1537 = vmatpush1.bf16.msra.mxu0 %v1412
    %1538 = vmatprep.subr.bf16.mxu0 %v1409
    %1539 = vmatpush1.bf16.msra.mxu0 %v1408
    %1540 = vmatprep.subr.bf16.mxu0 %v1405
    %1541 = vmatpush1.bf16.msra.mxu0 %v1404
    %1542 = vmatprep.subr.bf16.mxu0 %v1401
    %1543 = vmatpush1.bf16.msra.mxu0 %v1400
    %1544 = vmatprep.subr.bf16.mxu0 %v1461
    %1545 = vmatpush2.bf16.msra.mxu0 %v1460
    %1546 = vmatprep.subr.bf16.mxu0 %v1457
    %1547 = vmatpush2.bf16.msra.mxu0 %v1456
    %1548 = vmatprep.subr.bf16.mxu0 %v1453
    %1549 = vmatpush2.bf16.msra.mxu0 %v1452
    %1550 = vmatprep.subr.bf16.mxu0 %v1449
    %1551 = vmatpush2.bf16.msra.mxu0 %v1448
    %1552 = vmatprep.subr.bf16.mxu0 %v1445
    %1553 = vmatpush2.bf16.msra.mxu0 %v1444
    %1554 = vmatprep.subr.bf16.mxu0 %v1441
    %1555 = vmatpush2.bf16.msra.mxu0 %v1440
    %1556 = vmatprep.subr.bf16.mxu0 %v1437
    %1557 = vmatpush2.bf16.msra.mxu0 %v1436
    %1558 = vmatprep.subr.bf16.mxu0 %v1433
    %1559 = vmatpush2.bf16.msra.mxu0 %v1432
    %1560 = vmatprep.mubr.bf16.mxu0 %v1115
    %1561 = vmatmul.mubr.bf16.gmra.mxu0 %v1114
    %v1562 = vpop.f32.mrf.mxu0
    %v1563 = vadd.f32 %v1191, %v1562
    %v1564 = vpop.f32.mrf.mxu0
    %v1565 = vadd.f32 %v1195, %v1564
    %v1566 = vpop.f32.mrf.mxu0
    %v1567 = vadd.f32 %v1191, %v1566
    %v1568 = vpop.f32.mrf.mxu0
    %v1569 = vadd.f32 %v1195, %v1568
    %1570 = vmatprep.mubr.bf16.mxu0 %v1117
    %1571 = vmatmul.mubr.bf16.gmra.mxu0 %v1116
    %v1572 = vpop.f32.mrf.mxu0
    %v1573 = vadd.f32 %v1191, %v1572
    %v1574 = vpop.f32.mrf.mxu0
    %v1575 = vadd.f32 %v1195, %v1574
    %v1576 = vpop.f32.mrf.mxu0
    %v1577 = vadd.f32 %v1191, %v1576
    %v1578 = vpop.f32.mrf.mxu0
    %v1579 = vadd.f32 %v1195, %v1578
    %1580 = vmatprep.mubr.bf16.mxu0 %v1119
    %1581 = vmatmul.mubr.bf16.gmra.mxu0 %v1118
    %v1582 = vpop.f32.mrf.mxu0
    %v1583 = vadd.f32 %v1191, %v1582
    %v1584 = vpop.f32.mrf.mxu0
    %v1585 = vadd.f32 %v1195, %v1584
    %v1586 = vpop.f32.mrf.mxu0
    %v1587 = vadd.f32 %v1191, %v1586
    %v1588 = vpop.f32.mrf.mxu0
    %v1589 = vadd.f32 %v1195, %v1588
    %1590 = vmatprep.mubr.bf16.mxu0 %v1121
    %1591 = vmatmul.mubr.bf16.gmra.mxu0 %v1120
    %v1592 = vpop.f32.mrf.mxu0
    %v1593 = vadd.f32 %v1191, %v1592
    %v1594 = vpop.f32.mrf.mxu0
    %v1595 = vadd.f32 %v1195, %v1594
    %v1596 = vpop.f32.mrf.mxu0
    %v1597 = vadd.f32 %v1191, %v1596
    %v1598 = vpop.f32.mrf.mxu0
    %v1599 = vadd.f32 %v1195, %v1598
    %1600 = vdwg.mxu0
    %1601 = vmatprep.subr.bf16.mxu0 %v1431
    %1602 = vmatpush1.bf16.msra.mxu0 %v1430
    %1603 = vmatprep.subr.bf16.mxu0 %v1427
    %1604 = vmatpush1.bf16.msra.mxu0 %v1426
    %1605 = vmatprep.subr.bf16.mxu0 %v1423
    %1606 = vmatpush1.bf16.msra.mxu0 %v1422
    %1607 = vmatprep.subr.bf16.mxu0 %v1419
    %1608 = vmatpush1.bf16.msra.mxu0 %v1418
    %1609 = vmatprep.subr.bf16.mxu0 %v1415
    %1610 = vmatpush1.bf16.msra.mxu0 %v1414
    %1611 = vmatprep.subr.bf16.mxu0 %v1411
    %1612 = vmatpush1.bf16.msra.mxu0 %v1410
    %1613 = vmatprep.subr.bf16.mxu0 %v1407
    %1614 = vmatpush1.bf16.msra.mxu0 %v1406
    %1615 = vmatprep.subr.bf16.mxu0 %v1403
    %1616 = vmatpush1.bf16.msra.mxu0 %v1402
    %1617 = vmatprep.subr.bf16.mxu0 %v1463
    %1618 = vmatpush2.bf16.msra.mxu0 %v1462
    %1619 = vmatprep.subr.bf16.mxu0 %v1459
    %1620 = vmatpush2.bf16.msra.mxu0 %v1458
    %1621 = vmatprep.subr.bf16.mxu0 %v1455
    %1622 = vmatpush2.bf16.msra.mxu0 %v1454
    %1623 = vmatprep.subr.bf16.mxu0 %v1451
    %1624 = vmatpush2.bf16.msra.mxu0 %v1450
    %1625 = vmatprep.subr.bf16.mxu0 %v1447
    %1626 = vmatpush2.bf16.msra.mxu0 %v1446
    %1627 = vmatprep.subr.bf16.mxu0 %v1443
    %1628 = vmatpush2.bf16.msra.mxu0 %v1442
    %1629 = vmatprep.subr.bf16.mxu0 %v1439
    %1630 = vmatpush2.bf16.msra.mxu0 %v1438
    %1631 = vmatprep.subr.bf16.mxu0 %v1435
    %1632 = vmatpush2.bf16.msra.mxu0 %v1434
    %1633 = vmatprep.mubr.bf16.mxu0 %v1115
    %1634 = vmatmul.mubr.bf16.gmra.mxu0 %v1114
    %v1635 = vpop.f32.mrf.mxu0
    %v1636 = vadd.f32 %v1199, %v1635
    %v1637 = vpop.f32.mrf.mxu0
    %v1638 = vadd.f32 %v1203, %v1637
    %v1639 = vpop.f32.mrf.mxu0
    %v1640 = vadd.f32 %v1199, %v1639
    %v1641 = vpop.f32.mrf.mxu0
    %v1642 = vadd.f32 %v1203, %v1641
    %1643 = vmatprep.mubr.bf16.mxu0 %v1117
    %1644 = vmatmul.mubr.bf16.gmra.mxu0 %v1116
    %v1645 = vpop.f32.mrf.mxu0
    %v1646 = vadd.f32 %v1199, %v1645
    %v1647 = vpop.f32.mrf.mxu0
    %v1648 = vadd.f32 %v1203, %v1647
    %v1649 = vpop.f32.mrf.mxu0
    %v1650 = vadd.f32 %v1199, %v1649
    %v1651 = vpop.f32.mrf.mxu0
    %v1652 = vadd.f32 %v1203, %v1651
    %1653 = vmatprep.mubr.bf16.mxu0 %v1119
    %1654 = vmatmul.mubr.bf16.gmra.mxu0 %v1118
    %v1655 = vpop.f32.mrf.mxu0
    %v1656 = vadd.f32 %v1199, %v1655
    %v1657 = vpop.f32.mrf.mxu0
    %v1658 = vadd.f32 %v1203, %v1657
    %v1659 = vpop.f32.mrf.mxu0
    %v1660 = vadd.f32 %v1199, %v1659
    %v1661 = vpop.f32.mrf.mxu0
    %v1662 = vadd.f32 %v1203, %v1661
    %1663 = vmatprep.mubr.bf16.mxu0 %v1121
    %1664 = vmatmul.mubr.bf16.gmra.mxu0 %v1120
    %v1665 = vpop.f32.mrf.mxu0
    %v1666 = vadd.f32 %v1199, %v1665
    %v1667 = vpop.f32.mrf.mxu0
    %v1668 = vadd.f32 %v1203, %v1667
    %v1669 = vpop.f32.mrf.mxu0
    %v1670 = vadd.f32 %v1199, %v1669
    %v1671 = vpop.f32.mrf.mxu0
    %v1672 = vadd.f32 %v1203, %v1671
    %1673 = vdwg.mxu0
    %v1678 = vcombine.low %v1067, %v1069
    %v1679 = vcombine.high %v1067, %v1069
    %v1680 = vcombine.low %v1108, %v1110
    %v1681 = vcombine.high %v1108, %v1110
    %v1683 = vunpack.c.l.s4 1966171168
    %v1684 = vunpack.c.0.s8 %v1683
    %v1685 = vlaneseq
    %v1686 = vshrl.u32 %v1685, 7
    %v1687 = vsub.s32 %v1684, %v1686
    %v1688 = vrot.slane %v1678, %v1687
    %v1690 = vunpack.c.l.s4 1966171168
    %v1691 = vunpack.c.0.s8 %v1690
    %v1692 = vlaneseq
    %v1693 = vshrl.u32 %v1692, 7
    %v1694 = vsub.s32 %v1691, %v1693
    %v1695 = vrot.slane %v1679, %v1694
    %v1697 = vunpack.c.l.s4 1966171168
    %v1698 = vunpack.c.0.s8 %v1697
    %v1699 = vlaneseq
    %v1700 = vshrl.u32 %v1699, 7
    %v1701 = vsub.s32 %v1698, %v1700
    %v1702 = vrot.slane %v1680, %v1701
    %v1704 = vunpack.c.l.s4 1966171168
    %v1705 = vunpack.c.0.s8 %v1704
    %v1706 = vlaneseq
    %v1707 = vshrl.u32 %v1706, 7
    %v1708 = vsub.s32 %v1705, %v1707
    %v1709 = vrot.slane %v1681, %v1708
    %v1710 = vcombine.low %v1688, %v1702
    %v1711 = vcombine.high %v1688, %v1702
    %v1712 = vcombine.low %v1695, %v1709
    %v1713 = vcombine.high %v1695, %v1709
    %v1715 = vunpack.c.l.s4 1966171168
    %v1716 = vunpack.c.0.s8 %v1715
    %v1717 = vlaneseq
    %v1718 = vshrl.u32 %v1717, 7
    %v1719 = vsub.s32 %v1716, %v1718
    %v1720 = vrot.slane %v1710, %v1719
    %v1722 = vunpack.c.l.s4 1966171168
    %v1723 = vunpack.c.0.s8 %v1722
    %v1724 = vlaneseq
    %v1725 = vshrl.u32 %v1724, 7
    %v1726 = vsub.s32 %v1723, %v1725
    %v1727 = vrot.slane %v1712, %v1726
    %v1729 = vunpack.c.l.s4 1966171168
    %v1730 = vunpack.c.0.s8 %v1729
    %v1731 = vlaneseq
    %v1732 = vshrl.u32 %v1731, 7
    %v1733 = vsub.s32 %v1730, %v1732
    %v1734 = vrot.slane %v1711, %v1733
    %v1736 = vunpack.c.l.s4 1966171168
    %v1737 = vunpack.c.0.s8 %v1736
    %v1738 = vlaneseq
    %v1739 = vshrl.u32 %v1738, 7
    %v1740 = vsub.s32 %v1737, %v1739
    %v1741 = vrot.slane %v1713, %v1740
    %v1742 = vcombine.high %v1720, %v1720
    %v1743 = vcombine.high %v1727, %v1727
    %v1744 = vcombine.high %v1734, %v1734
    %v1745 = vcombine.high %v1741, %v1741
    %v1746 = vlaneseq
    %v1747 = vshrl.u32 %v1746, 7
    %v1748 = vsub.s32 0, %v1747
    %v1749 = vrot.slane %v1720, %v1748
    %v1750 = vlaneseq
    %v1751 = vshrl.u32 %v1750, 7
    %v1752 = vsub.s32 1, %v1751
    %v1753 = vrot.slane %v1720, %v1752
    %v1754 = vlaneseq
    %v1755 = vshrl.u32 %v1754, 7
    %v1756 = vsub.s32 2, %v1755
    %v1757 = vrot.slane %v1720, %v1756
    %v1758 = vlaneseq
    %v1759 = vshrl.u32 %v1758, 7
    %v1760 = vsub.s32 3, %v1759
    %v1761 = vrot.slane %v1720, %v1760
    %v1762 = vlaneseq
    %v1763 = vshrl.u32 %v1762, 7
    %v1764 = vsub.s32 0, %v1763
    %v1765 = vrot.slane %v1734, %v1764
    %v1766 = vlaneseq
    %v1767 = vshrl.u32 %v1766, 7
    %v1768 = vsub.s32 1, %v1767
    %v1769 = vrot.slane %v1734, %v1768
    %v1770 = vlaneseq
    %v1771 = vshrl.u32 %v1770, 7
    %v1772 = vsub.s32 2, %v1771
    %v1773 = vrot.slane %v1734, %v1772
    %v1774 = vlaneseq
    %v1775 = vshrl.u32 %v1774, 7
    %v1776 = vsub.s32 3, %v1775
    %v1777 = vrot.slane %v1734, %v1776
    %v1778 = vlaneseq
    %v1779 = vshrl.u32 %v1778, 7
    %v1780 = vsub.s32 0, %v1779
    %v1781 = vrot.slane %v1742, %v1780
    %v1782 = vlaneseq
    %v1783 = vshrl.u32 %v1782, 7
    %v1784 = vsub.s32 1, %v1783
    %v1785 = vrot.slane %v1742, %v1784
    %v1786 = vlaneseq
    %v1787 = vshrl.u32 %v1786, 7
    %v1788 = vsub.s32 2, %v1787
    %v1789 = vrot.slane %v1742, %v1788
    %v1790 = vlaneseq
    %v1791 = vshrl.u32 %v1790, 7
    %v1792 = vsub.s32 3, %v1791
    %v1793 = vrot.slane %v1742, %v1792
    %v1794 = vlaneseq
    %v1795 = vshrl.u32 %v1794, 7
    %v1796 = vsub.s32 0, %v1795
    %v1797 = vrot.slane %v1744, %v1796
    %v1798 = vlaneseq
    %v1799 = vshrl.u32 %v1798, 7
    %v1800 = vsub.s32 1, %v1799
    %v1801 = vrot.slane %v1744, %v1800
    %v1802 = vlaneseq
    %v1803 = vshrl.u32 %v1802, 7
    %v1804 = vsub.s32 2, %v1803
    %v1805 = vrot.slane %v1744, %v1804
    %v1806 = vlaneseq
    %v1807 = vshrl.u32 %v1806, 7
    %v1808 = vsub.s32 3, %v1807
    %v1809 = vrot.slane %v1744, %v1808
    %v1810 = vlaneseq
    %v1811 = vshrl.u32 %v1810, 7
    %v1812 = vsub.s32 0, %v1811
    %v1813 = vrot.slane %v1727, %v1812
    %v1814 = vlaneseq
    %v1815 = vshrl.u32 %v1814, 7
    %v1816 = vsub.s32 1, %v1815
    %v1817 = vrot.slane %v1727, %v1816
    %v1818 = vlaneseq
    %v1819 = vshrl.u32 %v1818, 7
    %v1820 = vsub.s32 2, %v1819
    %v1821 = vrot.slane %v1727, %v1820
    %v1822 = vlaneseq
    %v1823 = vshrl.u32 %v1822, 7
    %v1824 = vsub.s32 3, %v1823
    %v1825 = vrot.slane %v1727, %v1824
    %v1826 = vlaneseq
    %v1827 = vshrl.u32 %v1826, 7
    %v1828 = vsub.s32 0, %v1827
    %v1829 = vrot.slane %v1741, %v1828
    %v1830 = vlaneseq
    %v1831 = vshrl.u32 %v1830, 7
    %v1832 = vsub.s32 1, %v1831
    %v1833 = vrot.slane %v1741, %v1832
    %v1834 = vlaneseq
    %v1835 = vshrl.u32 %v1834, 7
    %v1836 = vsub.s32 2, %v1835
    %v1837 = vrot.slane %v1741, %v1836
    %v1838 = vlaneseq
    %v1839 = vshrl.u32 %v1838, 7
    %v1840 = vsub.s32 3, %v1839
    %v1841 = vrot.slane %v1741, %v1840
    %v1842 = vlaneseq
    %v1843 = vshrl.u32 %v1842, 7
    %v1844 = vsub.s32 0, %v1843
    %v1845 = vrot.slane %v1743, %v1844
    %v1846 = vlaneseq
    %v1847 = vshrl.u32 %v1846, 7
    %v1848 = vsub.s32 1, %v1847
    %v1849 = vrot.slane %v1743, %v1848
    %v1850 = vlaneseq
    %v1851 = vshrl.u32 %v1850, 7
    %v1852 = vsub.s32 2, %v1851
    %v1853 = vrot.slane %v1743, %v1852
    %v1854 = vlaneseq
    %v1855 = vshrl.u32 %v1854, 7
    %v1856 = vsub.s32 3, %v1855
    %v1857 = vrot.slane %v1743, %v1856
    %v1858 = vlaneseq
    %v1859 = vshrl.u32 %v1858, 7
    %v1860 = vsub.s32 0, %v1859
    %v1861 = vrot.slane %v1745, %v1860
    %v1862 = vlaneseq
    %v1863 = vshrl.u32 %v1862, 7
    %v1864 = vsub.s32 1, %v1863
    %v1865 = vrot.slane %v1745, %v1864
    %v1866 = vlaneseq
    %v1867 = vshrl.u32 %v1866, 7
    %v1868 = vsub.s32 2, %v1867
    %v1869 = vrot.slane %v1745, %v1868
    %v1870 = vlaneseq
    %v1871 = vshrl.u32 %v1870, 7
    %v1872 = vsub.s32 3, %v1871
    %v1873 = vrot.slane %v1745, %v1872
    %v1906 = vadd.f32 %v1563, %v1749
    %v1907 = vadd.f32 %v1565, %v1753
    %v1908 = vadd.f32 %v1636, %v1757
    %v1909 = vadd.f32 %v1638, %v1761
    %v1910 = vadd.f32 %v1567, %v1765
    %v1911 = vadd.f32 %v1569, %v1769
    %v1912 = vadd.f32 %v1640, %v1773
    %v1913 = vadd.f32 %v1642, %v1777
    %v1914 = vadd.f32 %v1573, %v1781
    %v1915 = vadd.f32 %v1575, %v1785
    %v1916 = vadd.f32 %v1646, %v1789
    %v1917 = vadd.f32 %v1648, %v1793
    %v1918 = vadd.f32 %v1577, %v1797
    %v1919 = vadd.f32 %v1579, %v1801
    %v1920 = vadd.f32 %v1650, %v1805
    %v1921 = vadd.f32 %v1652, %v1809
    %v1922 = vadd.f32 %v1583, %v1813
    %v1923 = vadd.f32 %v1585, %v1817
    %v1924 = vadd.f32 %v1656, %v1821
    %v1925 = vadd.f32 %v1658, %v1825
    %v1926 = vadd.f32 %v1587, %v1829
    %v1927 = vadd.f32 %v1589, %v1833
    %v1928 = vadd.f32 %v1660, %v1837
    %v1929 = vadd.f32 %v1662, %v1841
    %v1930 = vadd.f32 %v1593, %v1845
    %v1931 = vadd.f32 %v1595, %v1849
    %v1932 = vadd.f32 %v1666, %v1853
    %v1933 = vadd.f32 %v1668, %v1857
    %v1934 = vadd.f32 %v1597, %v1861
    %v1935 = vadd.f32 %v1599, %v1865
    %v1936 = vadd.f32 %v1670, %v1869
    %v1937 = vadd.f32 %v1672, %v1873
    %v1938 = vmax.f32 %v1906, 0.0
    %v1939 = vmax.f32 %v1907, 0.0
    %v1940 = vmax.f32 %v1908, 0.0
    %v1941 = vmax.f32 %v1909, 0.0
    %v1942 = vmax.f32 %v1910, 0.0
    %v1943 = vmax.f32 %v1911, 0.0
    %v1944 = vmax.f32 %v1912, 0.0
    %v1945 = vmax.f32 %v1913, 0.0
    %v1946 = vmax.f32 %v1914, 0.0
    %v1947 = vmax.f32 %v1915, 0.0
    %v1948 = vmax.f32 %v1916, 0.0
    %v1949 = vmax.f32 %v1917, 0.0
    %v1950 = vmax.f32 %v1918, 0.0
    %v1951 = vmax.f32 %v1919, 0.0
    %v1952 = vmax.f32 %v1920, 0.0
    %v1953 = vmax.f32 %v1921, 0.0
    %v1954 = vmax.f32 %v1922, 0.0
    %v1955 = vmax.f32 %v1923, 0.0
    %v1956 = vmax.f32 %v1924, 0.0
    %v1957 = vmax.f32 %v1925, 0.0
    %v1958 = vmax.f32 %v1926, 0.0
    %v1959 = vmax.f32 %v1927, 0.0
    %v1960 = vmax.f32 %v1928, 0.0
    %v1961 = vmax.f32 %v1929, 0.0
    %v1962 = vmax.f32 %v1930, 0.0
    %v1963 = vmax.f32 %v1931, 0.0
    %v1964 = vmax.f32 %v1932, 0.0
    %v1965 = vmax.f32 %v1933, 0.0
    %v1966 = vmax.f32 %v1934, 0.0
    %v1967 = vmax.f32 %v1935, 0.0
    %v1968 = vmax.f32 %v1936, 0.0
    %v1969 = vmax.f32 %v1937, 0.0
    %v1970 = vpack.c.bf16 %v1942, %v1938
    %v1971 = vpack.c.bf16 %v1943, %v1939
    %v1972 = vpack.c.bf16 %v1944, %v1940
    %v1973 = vpack.c.bf16 %v1945, %v1941
    %v1974 = vpack.c.bf16 %v1950, %v1946
    %v1975 = vpack.c.bf16 %v1951, %v1947
    %v1976 = vpack.c.bf16 %v1952, %v1948
    %v1977 = vpack.c.bf16 %v1953, %v1949
    %v1978 = vpack.c.bf16 %v1958, %v1954
    %v1979 = vpack.c.bf16 %v1959, %v1955
    %v1980 = vpack.c.bf16 %v1960, %v1956
    %v1981 = vpack.c.bf16 %v1961, %v1957
    %v1982 = vpack.c.bf16 %v1966, %v1962
    %v1983 = vpack.c.bf16 %v1967, %v1963
    %v1984 = vpack.c.bf16 %v1968, %v1964
    %v1985 = vpack.c.bf16 %v1969, %v1965
    %v1986 = vld [vmem:[#allocation8] sm:$0xff]
    %v1987 = vld [vmem:[#allocation8 + $0x8] sm:$0xff]
    %v1988 = vld [vmem:[#allocation8 + $0x10] sm:$0xff]
    %v1989 = vld [vmem:[#allocation8 + $0x18] sm:$0xff]
    %v1990 = vld [vmem:[#allocation8 + $0x20] sm:$0xff]
    %v1991 = vld [vmem:[#allocation8 + $0x28] sm:$0xff]
    %v1992 = vld [vmem:[#allocation8 + $0x30] sm:$0xff]
    %v1993 = vld [vmem:[#allocation8 + $0x38] sm:$0xff]
    %v1994 = vld [vmem:[#allocation8 + $0x40] sm:$0xff]
    %v1995 = vld [vmem:[#allocation8 + $0x48] sm:$0xff]
    %v1996 = vld [vmem:[#allocation8 + $0x50] sm:$0xff]
    %v1997 = vld [vmem:[#allocation8 + $0x58] sm:$0xff]
    %v1998 = vld [vmem:[#allocation8 + $0x60] sm:$0xff]
    %v1999 = vld [vmem:[#allocation8 + $0x68] sm:$0xff]
    %v2000 = vld [vmem:[#allocation8 + $0x70] sm:$0xff]
    %v2001 = vld [vmem:[#allocation8 + $0x78] sm:$0xff]
    %v2002 = vld [vmem:[#allocation8 + $0x80] sm:$0xff]
    %v2003 = vld [vmem:[#allocation8 + $0x88] sm:$0xff]
    %v2004 = vld [vmem:[#allocation8 + $0x90] sm:$0xff]
    %v2005 = vld [vmem:[#allocation8 + $0x98] sm:$0xff]
    %v2006 = vld [vmem:[#allocation8 + $0xa0] sm:$0xff]
    %v2007 = vld [vmem:[#allocation8 + $0xa8] sm:$0xff]
    %v2008 = vld [vmem:[#allocation8 + $0xb0] sm:$0xff]
    %v2009 = vld [vmem:[#allocation8 + $0xb8] sm:$0xff]
    %v2010 = vld [vmem:[#allocation8 + $0xc0] sm:$0xff]
    %v2011 = vld [vmem:[#allocation8 + $0xc8] sm:$0xff]
    %v2012 = vld [vmem:[#allocation8 + $0xd0] sm:$0xff]
    %v2013 = vld [vmem:[#allocation8 + $0xd8] sm:$0xff]
    %v2014 = vld [vmem:[#allocation8 + $0xe0] sm:$0xff]
    %v2015 = vld [vmem:[#allocation8 + $0xe8] sm:$0xff]
    %v2016 = vld [vmem:[#allocation8 + $0xf0] sm:$0xff]
    %v2017 = vld [vmem:[#allocation8 + $0xf8] sm:$0xff]
    %v2018 = vld [vmem:[#allocation8 + $0x100] sm:$0xff]
    %v2019 = vld [vmem:[#allocation8 + $0x108] sm:$0xff]
    %v2020 = vld [vmem:[#allocation8 + $0x110] sm:$0xff]
    %v2021 = vld [vmem:[#allocation8 + $0x118] sm:$0xff]
    %v2022 = vld [vmem:[#allocation8 + $0x120] sm:$0xff]
    %v2023 = vld [vmem:[#allocation8 + $0x128] sm:$0xff]
    %v2024 = vld [vmem:[#allocation8 + $0x130] sm:$0xff]
    %v2025 = vld [vmem:[#allocation8 + $0x138] sm:$0xff]
    %v2026 = vld [vmem:[#allocation8 + $0x140] sm:$0xff]
    %v2027 = vld [vmem:[#allocation8 + $0x148] sm:$0xff]
    %v2028 = vld [vmem:[#allocation8 + $0x150] sm:$0xff]
    %v2029 = vld [vmem:[#allocation8 + $0x158] sm:$0xff]
    %v2030 = vld [vmem:[#allocation8 + $0x160] sm:$0xff]
    %v2031 = vld [vmem:[#allocation8 + $0x168] sm:$0xff]
    %v2032 = vld [vmem:[#allocation8 + $0x170] sm:$0xff]
    %v2033 = vld [vmem:[#allocation8 + $0x178] sm:$0xff]
    %v2034 = vld [vmem:[#allocation8 + $0x180] sm:$0xff]
    %v2035 = vld [vmem:[#allocation8 + $0x188] sm:$0xff]
    %v2036 = vld [vmem:[#allocation8 + $0x190] sm:$0xff]
    %v2037 = vld [vmem:[#allocation8 + $0x198] sm:$0xff]
    %v2038 = vld [vmem:[#allocation8 + $0x1a0] sm:$0xff]
    %v2039 = vld [vmem:[#allocation8 + $0x1a8] sm:$0xff]
    %v2040 = vld [vmem:[#allocation8 + $0x1b0] sm:$0xff]
    %v2041 = vld [vmem:[#allocation8 + $0x1b8] sm:$0xff]
    %v2042 = vld [vmem:[#allocation8 + $0x1c0] sm:$0xff]
    %v2043 = vld [vmem:[#allocation8 + $0x1c8] sm:$0xff]
    %v2044 = vld [vmem:[#allocation8 + $0x1d0] sm:$0xff]
    %v2045 = vld [vmem:[#allocation8 + $0x1d8] sm:$0xff]
    %v2046 = vld [vmem:[#allocation8 + $0x1e0] sm:$0xff]
    %v2047 = vld [vmem:[#allocation8 + $0x1e8] sm:$0xff]
    %v2048 = vld [vmem:[#allocation8 + $0x1f0] sm:$0xff]
    %v2049 = vld [vmem:[#allocation8 + $0x1f8] sm:$0xff]
    %v2050 = vld [vmem:[%s11] sm:$0x3]
    %v2052 = vlaneseq
    %v2053 = vshrl.u32 %v2052, 7
    %v2054 = vsub.s32 0, %v2053
    %v2055 = vrot.slane %v2050, %v2054
    %v2056 = vlaneseq
    %v2057 = vshrl.u32 %v2056, 7
    %v2058 = vsub.s32 1, %v2057
    %v2059 = vrot.slane %v2050, %v2058
    %v2126 = vunpack.c.l.b16 %v1986
    %v2127 = vunpack.c.h.b16 %v1986
    %v2128 = vunpack.c.l.b16 %v1987
    %v2129 = vunpack.c.h.b16 %v1987
    %v2130 = vunpack.c.l.b16 %v1988
    %v2131 = vunpack.c.h.b16 %v1988
    %v2132 = vunpack.c.l.b16 %v1989
    %v2133 = vunpack.c.h.b16 %v1989
    %v2134 = vunpack.c.l.b16 %v1990
    %v2135 = vunpack.c.h.b16 %v1990
    %v2136 = vunpack.c.l.b16 %v1991
    %v2137 = vunpack.c.h.b16 %v1991
    %v2138 = vunpack.c.l.b16 %v1992
    %v2139 = vunpack.c.h.b16 %v1992
    %v2140 = vunpack.c.l.b16 %v1993
    %v2141 = vunpack.c.h.b16 %v1993
    %v2142 = vunpack.c.l.b16 %v1994
    %v2143 = vunpack.c.h.b16 %v1994
    %v2144 = vunpack.c.l.b16 %v1995
    %v2145 = vunpack.c.h.b16 %v1995
    %v2146 = vunpack.c.l.b16 %v1996
    %v2147 = vunpack.c.h.b16 %v1996
    %v2148 = vunpack.c.l.b16 %v1997
    %v2149 = vunpack.c.h.b16 %v1997
    %v2150 = vunpack.c.l.b16 %v1998
    %v2151 = vunpack.c.h.b16 %v1998
    %v2152 = vunpack.c.l.b16 %v1999
    %v2153 = vunpack.c.h.b16 %v1999
    %v2154 = vunpack.c.l.b16 %v2000
    %v2155 = vunpack.c.h.b16 %v2000
    %v2156 = vunpack.c.l.b16 %v2001
    %v2157 = vunpack.c.h.b16 %v2001
    %v2158 = vunpack.c.l.b16 %v2002
    %v2159 = vunpack.c.h.b16 %v2002
    %v2160 = vunpack.c.l.b16 %v2003
    %v2161 = vunpack.c.h.b16 %v2003
    %v2162 = vunpack.c.l.b16 %v2004
    %v2163 = vunpack.c.h.b16 %v2004
    %v2164 = vunpack.c.l.b16 %v2005
    %v2165 = vunpack.c.h.b16 %v2005
    %v2166 = vunpack.c.l.b16 %v2006
    %v2167 = vunpack.c.h.b16 %v2006
    %v2168 = vunpack.c.l.b16 %v2007
    %v2169 = vunpack.c.h.b16 %v2007
    %v2170 = vunpack.c.l.b16 %v2008
    %v2171 = vunpack.c.h.b16 %v2008
    %v2172 = vunpack.c.l.b16 %v2009
    %v2173 = vunpack.c.h.b16 %v2009
    %v2174 = vunpack.c.l.b16 %v2010
    %v2175 = vunpack.c.h.b16 %v2010
    %v2176 = vunpack.c.l.b16 %v2011
    %v2177 = vunpack.c.h.b16 %v2011
    %v2178 = vunpack.c.l.b16 %v2012
    %v2179 = vunpack.c.h.b16 %v2012
    %v2180 = vunpack.c.l.b16 %v2013
    %v2181 = vunpack.c.h.b16 %v2013
    %v2182 = vunpack.c.l.b16 %v2014
    %v2183 = vunpack.c.h.b16 %v2014
    %v2184 = vunpack.c.l.b16 %v2015
    %v2185 = vunpack.c.h.b16 %v2015
    %v2186 = vunpack.c.l.b16 %v2016
    %v2187 = vunpack.c.h.b16 %v2016
    %v2188 = vunpack.c.l.b16 %v2017
    %v2189 = vunpack.c.h.b16 %v2017
    %v2190 = vunpack.c.l.b16 %v2018
    %v2191 = vunpack.c.h.b16 %v2018
    %v2192 = vunpack.c.l.b16 %v2019
    %v2193 = vunpack.c.h.b16 %v2019
    %v2194 = vunpack.c.l.b16 %v2020
    %v2195 = vunpack.c.h.b16 %v2020
    %v2196 = vunpack.c.l.b16 %v2021
    %v2197 = vunpack.c.h.b16 %v2021
    %v2198 = vunpack.c.l.b16 %v2022
    %v2199 = vunpack.c.h.b16 %v2022
    %v2200 = vunpack.c.l.b16 %v2023
    %v2201 = vunpack.c.h.b16 %v2023
    %v2202 = vunpack.c.l.b16 %v2024
    %v2203 = vunpack.c.h.b16 %v2024
    %v2204 = vunpack.c.l.b16 %v2025
    %v2205 = vunpack.c.h.b16 %v2025
    %v2206 = vunpack.c.l.b16 %v2026
    %v2207 = vunpack.c.h.b16 %v2026
    %v2208 = vunpack.c.l.b16 %v2027
    %v2209 = vunpack.c.h.b16 %v2027
    %v2210 = vunpack.c.l.b16 %v2028
    %v2211 = vunpack.c.h.b16 %v2028
    %v2212 = vunpack.c.l.b16 %v2029
    %v2213 = vunpack.c.h.b16 %v2029
    %v2214 = vunpack.c.l.b16 %v2030
    %v2215 = vunpack.c.h.b16 %v2030
    %v2216 = vunpack.c.l.b16 %v2031
    %v2217 = vunpack.c.h.b16 %v2031
    %v2218 = vunpack.c.l.b16 %v2032
    %v2219 = vunpack.c.h.b16 %v2032
    %v2220 = vunpack.c.l.b16 %v2033
    %v2221 = vunpack.c.h.b16 %v2033
    %v2222 = vunpack.c.l.b16 %v2034
    %v2223 = vunpack.c.h.b16 %v2034
    %v2224 = vunpack.c.l.b16 %v2035
    %v2225 = vunpack.c.h.b16 %v2035
    %v2226 = vunpack.c.l.b16 %v2036
    %v2227 = vunpack.c.h.b16 %v2036
    %v2228 = vunpack.c.l.b16 %v2037
    %v2229 = vunpack.c.h.b16 %v2037
    %v2230 = vunpack.c.l.b16 %v2038
    %v2231 = vunpack.c.h.b16 %v2038
    %v2232 = vunpack.c.l.b16 %v2039
    %v2233 = vunpack.c.h.b16 %v2039
    %v2234 = vunpack.c.l.b16 %v2040
    %v2235 = vunpack.c.h.b16 %v2040
    %v2236 = vunpack.c.l.b16 %v2041
    %v2237 = vunpack.c.h.b16 %v2041
    %v2238 = vunpack.c.l.b16 %v2042
    %v2239 = vunpack.c.h.b16 %v2042
    %v2240 = vunpack.c.l.b16 %v2043
    %v2241 = vunpack.c.h.b16 %v2043
    %v2242 = vunpack.c.l.b16 %v2044
    %v2243 = vunpack.c.h.b16 %v2044
    %v2244 = vunpack.c.l.b16 %v2045
    %v2245 = vunpack.c.h.b16 %v2045
    %v2246 = vunpack.c.l.b16 %v2046
    %v2247 = vunpack.c.h.b16 %v2046
    %v2248 = vunpack.c.l.b16 %v2047
    %v2249 = vunpack.c.h.b16 %v2047
    %v2250 = vunpack.c.l.b16 %v2048
    %v2251 = vunpack.c.h.b16 %v2048
    %v2252 = vunpack.c.l.b16 %v2049
    %v2253 = vunpack.c.h.b16 %v2049
    %v2254 = vpack.c.b16 %v2128, %v2126
    %v2255 = vpack.c.b16 %v2129, %v2127
    %v2256 = vpack.c.b16 %v2132, %v2130
    %v2257 = vpack.c.b16 %v2133, %v2131
    %v2258 = vpack.c.b16 %v2136, %v2134
    %v2259 = vpack.c.b16 %v2137, %v2135
    %v2260 = vpack.c.b16 %v2140, %v2138
    %v2261 = vpack.c.b16 %v2141, %v2139
    %v2262 = vpack.c.b16 %v2144, %v2142
    %v2263 = vpack.c.b16 %v2145, %v2143
    %v2264 = vpack.c.b16 %v2148, %v2146
    %v2265 = vpack.c.b16 %v2149, %v2147
    %v2266 = vpack.c.b16 %v2152, %v2150
    %v2267 = vpack.c.b16 %v2153, %v2151
    %v2268 = vpack.c.b16 %v2156, %v2154
    %v2269 = vpack.c.b16 %v2157, %v2155
    %v2270 = vpack.c.b16 %v2160, %v2158
    %v2271 = vpack.c.b16 %v2161, %v2159
    %v2272 = vpack.c.b16 %v2164, %v2162
    %v2273 = vpack.c.b16 %v2165, %v2163
    %v2274 = vpack.c.b16 %v2168, %v2166
    %v2275 = vpack.c.b16 %v2169, %v2167
    %v2276 = vpack.c.b16 %v2172, %v2170
    %v2277 = vpack.c.b16 %v2173, %v2171
    %v2278 = vpack.c.b16 %v2176, %v2174
    %v2279 = vpack.c.b16 %v2177, %v2175
    %v2280 = vpack.c.b16 %v2180, %v2178
    %v2281 = vpack.c.b16 %v2181, %v2179
    %v2282 = vpack.c.b16 %v2184, %v2182
    %v2283 = vpack.c.b16 %v2185, %v2183
    %v2284 = vpack.c.b16 %v2188, %v2186
    %v2285 = vpack.c.b16 %v2189, %v2187
    %v2286 = vpack.c.b16 %v2192, %v2190
    %v2287 = vpack.c.b16 %v2193, %v2191
    %v2288 = vpack.c.b16 %v2196, %v2194
    %v2289 = vpack.c.b16 %v2197, %v2195
    %v2290 = vpack.c.b16 %v2200, %v2198
    %v2291 = vpack.c.b16 %v2201, %v2199
    %v2292 = vpack.c.b16 %v2204, %v2202
    %v2293 = vpack.c.b16 %v2205, %v2203
    %v2294 = vpack.c.b16 %v2208, %v2206
    %v2295 = vpack.c.b16 %v2209, %v2207
    %v2296 = vpack.c.b16 %v2212, %v2210
    %v2297 = vpack.c.b16 %v2213, %v2211
    %v2298 = vpack.c.b16 %v2216, %v2214
    %v2299 = vpack.c.b16 %v2217, %v2215
    %v2300 = vpack.c.b16 %v2220, %v2218
    %v2301 = vpack.c.b16 %v2221, %v2219
    %v2302 = vpack.c.b16 %v2224, %v2222
    %v2303 = vpack.c.b16 %v2225, %v2223
    %v2304 = vpack.c.b16 %v2228, %v2226
    %v2305 = vpack.c.b16 %v2229, %v2227
    %v2306 = vpack.c.b16 %v2232, %v2230
    %v2307 = vpack.c.b16 %v2233, %v2231
    %v2308 = vpack.c.b16 %v2236, %v2234
    %v2309 = vpack.c.b16 %v2237, %v2235
    %v2310 = vpack.c.b16 %v2240, %v2238
    %v2311 = vpack.c.b16 %v2241, %v2239
    %v2312 = vpack.c.b16 %v2244, %v2242
    %v2313 = vpack.c.b16 %v2245, %v2243
    %v2314 = vpack.c.b16 %v2248, %v2246
    %v2315 = vpack.c.b16 %v2249, %v2247
    %v2316 = vpack.c.b16 %v2252, %v2250
    %v2317 = vpack.c.b16 %v2253, %v2251
    %2382 = vmatprep.subr.bf16.mxu0 %v2269
    %2383 = vmatpush1.bf16.msra.mxu0 %v2268
    %2384 = vmatprep.subr.bf16.mxu0 %v2267
    %2385 = vmatpush1.bf16.msra.mxu0 %v2266
    %2386 = vmatprep.subr.bf16.mxu0 %v2265
    %2387 = vmatpush1.bf16.msra.mxu0 %v2264
    %2388 = vmatprep.subr.bf16.mxu0 %v2263
    %2389 = vmatpush1.bf16.msra.mxu0 %v2262
    %2390 = vmatprep.subr.bf16.mxu0 %v2261
    %2391 = vmatpush1.bf16.msra.mxu0 %v2260
    %2392 = vmatprep.subr.bf16.mxu0 %v2259
    %2393 = vmatpush1.bf16.msra.mxu0 %v2258
    %2394 = vmatprep.subr.bf16.mxu0 %v2257
    %2395 = vmatpush1.bf16.msra.mxu0 %v2256
    %2396 = vmatprep.subr.bf16.mxu0 %v2255
    %2397 = vmatpush1.bf16.msra.mxu0 %v2254
    %2398 = vmatprep.subr.bf16.mxu0 %v2285
    %2399 = vmatpush2.bf16.msra.mxu0 %v2284
    %2400 = vmatprep.subr.bf16.mxu0 %v2283
    %2401 = vmatpush2.bf16.msra.mxu0 %v2282
    %2402 = vmatprep.subr.bf16.mxu0 %v2281
    %2403 = vmatpush2.bf16.msra.mxu0 %v2280
    %2404 = vmatprep.subr.bf16.mxu0 %v2279
    %2405 = vmatpush2.bf16.msra.mxu0 %v2278
    %2406 = vmatprep.subr.bf16.mxu0 %v2277
    %2407 = vmatpush2.bf16.msra.mxu0 %v2276
    %2408 = vmatprep.subr.bf16.mxu0 %v2275
    %2409 = vmatpush2.bf16.msra.mxu0 %v2274
    %2410 = vmatprep.subr.bf16.mxu0 %v2273
    %2411 = vmatpush2.bf16.msra.mxu0 %v2272
    %2412 = vmatprep.subr.bf16.mxu0 %v2271
    %2413 = vmatpush2.bf16.msra.mxu0 %v2270
    %2414 = vmatprep.mubr.bf16.mxu0 %v1971
    %2415 = vmatmul.mubr.bf16.gmra.mxu0 %v1970
    %v2416 = vpop.f32.mrf.mxu0
    %v2417 = vadd.f32 %v2055, %v2416
    %v2418 = vpop.f32.mrf.mxu0
    %v2419 = vadd.f32 %v2059, %v2418
    %v2420 = vpop.f32.mrf.mxu0
    %v2421 = vadd.f32 %v2055, %v2420
    %v2422 = vpop.f32.mrf.mxu0
    %v2423 = vadd.f32 %v2059, %v2422
    %2424 = vmatprep.mubr.bf16.mxu0 %v1975
    %2425 = vmatmul.mubr.bf16.gmra.mxu0 %v1974
    %v2426 = vpop.f32.mrf.mxu0
    %v2427 = vadd.f32 %v2055, %v2426
    %v2428 = vpop.f32.mrf.mxu0
    %v2429 = vadd.f32 %v2059, %v2428
    %v2430 = vpop.f32.mrf.mxu0
    %v2431 = vadd.f32 %v2055, %v2430
    %v2432 = vpop.f32.mrf.mxu0
    %v2433 = vadd.f32 %v2059, %v2432
    %2434 = vmatprep.mubr.bf16.mxu0 %v1979
    %2435 = vmatmul.mubr.bf16.gmra.mxu0 %v1978
    %v2436 = vpop.f32.mrf.mxu0
    %v2437 = vadd.f32 %v2055, %v2436
    %v2438 = vpop.f32.mrf.mxu0
    %v2439 = vadd.f32 %v2059, %v2438
    %v2440 = vpop.f32.mrf.mxu0
    %v2441 = vadd.f32 %v2055, %v2440
    %v2442 = vpop.f32.mrf.mxu0
    %v2443 = vadd.f32 %v2059, %v2442
    %2444 = vmatprep.mubr.bf16.mxu0 %v1983
    %2445 = vmatmul.mubr.bf16.gmra.mxu0 %v1982
    %v2446 = vpop.f32.mrf.mxu0
    %v2447 = vadd.f32 %v2055, %v2446
    %v2448 = vpop.f32.mrf.mxu0
    %v2449 = vadd.f32 %v2059, %v2448
    %v2450 = vpop.f32.mrf.mxu0
    %v2451 = vadd.f32 %v2055, %v2450
    %v2452 = vpop.f32.mrf.mxu0
    %v2453 = vadd.f32 %v2059, %v2452
    %2454 = vdwg.mxu0
    %2455 = vmatprep.subr.bf16.mxu0 %v2301
    %2456 = vmatpush1.bf16.msra.mxu0 %v2300
    %2457 = vmatprep.subr.bf16.mxu0 %v2299
    %2458 = vmatpush1.bf16.msra.mxu0 %v2298
    %2459 = vmatprep.subr.bf16.mxu0 %v2297
    %2460 = vmatpush1.bf16.msra.mxu0 %v2296
    %2461 = vmatprep.subr.bf16.mxu0 %v2295
    %2462 = vmatpush1.bf16.msra.mxu0 %v2294
    %2463 = vmatprep.subr.bf16.mxu0 %v2293
    %2464 = vmatpush1.bf16.msra.mxu0 %v2292
    %2465 = vmatprep.subr.bf16.mxu0 %v2291
    %2466 = vmatpush1.bf16.msra.mxu0 %v2290
    %2467 = vmatprep.subr.bf16.mxu0 %v2289
    %2468 = vmatpush1.bf16.msra.mxu0 %v2288
    %2469 = vmatprep.subr.bf16.mxu0 %v2287
    %2470 = vmatpush1.bf16.msra.mxu0 %v2286
    %2471 = vmatprep.subr.bf16.mxu0 %v2317
    %2472 = vmatpush2.bf16.msra.mxu0 %v2316
    %2473 = vmatprep.subr.bf16.mxu0 %v2315
    %2474 = vmatpush2.bf16.msra.mxu0 %v2314
    %2475 = vmatprep.subr.bf16.mxu0 %v2313
    %2476 = vmatpush2.bf16.msra.mxu0 %v2312
    %2477 = vmatprep.subr.bf16.mxu0 %v2311
    %2478 = vmatpush2.bf16.msra.mxu0 %v2310
    %2479 = vmatprep.subr.bf16.mxu0 %v2309
    %2480 = vmatpush2.bf16.msra.mxu0 %v2308
    %2481 = vmatprep.subr.bf16.mxu0 %v2307
    %2482 = vmatpush2.bf16.msra.mxu0 %v2306
    %2483 = vmatprep.subr.bf16.mxu0 %v2305
    %2484 = vmatpush2.bf16.msra.mxu0 %v2304
    %2485 = vmatprep.subr.bf16.mxu0 %v2303
    %2486 = vmatpush2.bf16.msra.mxu0 %v2302
    %2487 = vmatprep.mubr.bf16.mxu0 %v1973
    %2488 = vmatmul.mubr.bf16.gmra.mxu0 %v1972
    %v2489 = vpop.f32.mrf.mxu0
    %v2490 = vadd.f32 %v2417, %v2489
    %v2491 = vpop.f32.mrf.mxu0
    %v2492 = vadd.f32 %v2419, %v2491
    %v2493 = vpop.f32.mrf.mxu0
    %v2494 = vadd.f32 %v2421, %v2493
    %v2495 = vpop.f32.mrf.mxu0
    %v2496 = vadd.f32 %v2423, %v2495
    %2497 = vmatprep.mubr.bf16.mxu0 %v1977
    %2498 = vmatmul.mubr.bf16.gmra.mxu0 %v1976
    %v2499 = vpop.f32.mrf.mxu0
    %v2500 = vadd.f32 %v2427, %v2499
    %v2501 = vpop.f32.mrf.mxu0
    %v2502 = vadd.f32 %v2429, %v2501
    %v2503 = vpop.f32.mrf.mxu0
    %v2504 = vadd.f32 %v2431, %v2503
    %v2505 = vpop.f32.mrf.mxu0
    %v2506 = vadd.f32 %v2433, %v2505
    %2507 = vmatprep.mubr.bf16.mxu0 %v1981
    %2508 = vmatmul.mubr.bf16.gmra.mxu0 %v1980
    %v2509 = vpop.f32.mrf.mxu0
    %v2510 = vadd.f32 %v2437, %v2509
    %v2511 = vpop.f32.mrf.mxu0
    %v2512 = vadd.f32 %v2439, %v2511
    %v2513 = vpop.f32.mrf.mxu0
    %v2514 = vadd.f32 %v2441, %v2513
    %v2515 = vpop.f32.mrf.mxu0
    %v2516 = vadd.f32 %v2443, %v2515
    %2517 = vmatprep.mubr.bf16.mxu0 %v1985
    %2518 = vmatmul.mubr.bf16.gmra.mxu0 %v1984
    %v2519 = vpop.f32.mrf.mxu0
    %v2520 = vadd.f32 %v2447, %v2519
    %v2521 = vpop.f32.mrf.mxu0
    %v2522 = vadd.f32 %v2449, %v2521
    %v2523 = vpop.f32.mrf.mxu0
    %v2524 = vadd.f32 %v2451, %v2523
    %v2525 = vpop.f32.mrf.mxu0
    %v2526 = vadd.f32 %v2453, %v2525
    %2527 = vdwg.mxu0
    %v2528 = vrot.slane %v2490, 4
    %v2529 = vmax.f32 %v2490, %v2528
    %v2530 = vrot.slane %v2529, 2
    %v2531 = vmax.f32 %v2529, %v2530
    %v2532 = vrot.slane %v2531, 1
    %v2533 = vmax.f32 %v2531, %v2532
    %v2534 = vrot.slane %v2492, 4
    %v2535 = vmax.f32 %v2492, %v2534
    %v2536 = vrot.slane %v2535, 2
    %v2537 = vmax.f32 %v2535, %v2536
    %v2538 = vrot.slane %v2537, 1
    %v2539 = vmax.f32 %v2537, %v2538
    %v2540 = vrot.slane %v2494, 4
    %v2541 = vmax.f32 %v2494, %v2540
    %v2542 = vrot.slane %v2541, 2
    %v2543 = vmax.f32 %v2541, %v2542
    %v2544 = vrot.slane %v2543, 1
    %v2545 = vmax.f32 %v2543, %v2544
    %v2546 = vrot.slane %v2496, 4
    %v2547 = vmax.f32 %v2496, %v2546
    %v2548 = vrot.slane %v2547, 2
    %v2549 = vmax.f32 %v2547, %v2548
    %v2550 = vrot.slane %v2549, 1
    %v2551 = vmax.f32 %v2549, %v2550
    %v2552 = vrot.slane %v2500, 4
    %v2553 = vmax.f32 %v2500, %v2552
    %v2554 = vrot.slane %v2553, 2
    %v2555 = vmax.f32 %v2553, %v2554
    %v2556 = vrot.slane %v2555, 1
    %v2557 = vmax.f32 %v2555, %v2556
    %v2558 = vrot.slane %v2502, 4
    %v2559 = vmax.f32 %v2502, %v2558
    %v2560 = vrot.slane %v2559, 2
    %v2561 = vmax.f32 %v2559, %v2560
    %v2562 = vrot.slane %v2561, 1
    %v2563 = vmax.f32 %v2561, %v2562
    %v2564 = vrot.slane %v2504, 4
    %v2565 = vmax.f32 %v2504, %v2564
    %v2566 = vrot.slane %v2565, 2
    %v2567 = vmax.f32 %v2565, %v2566
    %v2568 = vrot.slane %v2567, 1
    %v2569 = vmax.f32 %v2567, %v2568
    %v2570 = vrot.slane %v2506, 4
    %v2571 = vmax.f32 %v2506, %v2570
    %v2572 = vrot.slane %v2571, 2
    %v2573 = vmax.f32 %v2571, %v2572
    %v2574 = vrot.slane %v2573, 1
    %v2575 = vmax.f32 %v2573, %v2574
    %v2576 = vrot.slane %v2510, 4
    %v2577 = vmax.f32 %v2510, %v2576
    %v2578 = vrot.slane %v2577, 2
    %v2579 = vmax.f32 %v2577, %v2578
    %v2580 = vrot.slane %v2579, 1
    %v2581 = vmax.f32 %v2579, %v2580
    %v2582 = vrot.slane %v2512, 4
    %v2583 = vmax.f32 %v2512, %v2582
    %v2584 = vrot.slane %v2583, 2
    %v2585 = vmax.f32 %v2583, %v2584
    %v2586 = vrot.slane %v2585, 1
    %v2587 = vmax.f32 %v2585, %v2586
    %v2588 = vrot.slane %v2514, 4
    %v2589 = vmax.f32 %v2514, %v2588
    %v2590 = vrot.slane %v2589, 2
    %v2591 = vmax.f32 %v2589, %v2590
    %v2592 = vrot.slane %v2591, 1
    %v2593 = vmax.f32 %v2591, %v2592
    %v2594 = vrot.slane %v2516, 4
    %v2595 = vmax.f32 %v2516, %v2594
    %v2596 = vrot.slane %v2595, 2
    %v2597 = vmax.f32 %v2595, %v2596
    %v2598 = vrot.slane %v2597, 1
    %v2599 = vmax.f32 %v2597, %v2598
    %v2600 = vrot.slane %v2520, 4
    %v2601 = vmax.f32 %v2520, %v2600
    %v2602 = vrot.slane %v2601, 2
    %v2603 = vmax.f32 %v2601, %v2602
    %v2604 = vrot.slane %v2603, 1
    %v2605 = vmax.f32 %v2603, %v2604
    %v2606 = vrot.slane %v2522, 4
    %v2607 = vmax.f32 %v2522, %v2606
    %v2608 = vrot.slane %v2607, 2
    %v2609 = vmax.f32 %v2607, %v2608
    %v2610 = vrot.slane %v2609, 1
    %v2611 = vmax.f32 %v2609, %v2610
    %v2612 = vrot.slane %v2524, 4
    %v2613 = vmax.f32 %v2524, %v2612
    %v2614 = vrot.slane %v2613, 2
    %v2615 = vmax.f32 %v2613, %v2614
    %v2616 = vrot.slane %v2615, 1
    %v2617 = vmax.f32 %v2615, %v2616
    %v2618 = vrot.slane %v2526, 4
    %v2619 = vmax.f32 %v2526, %v2618
    %v2620 = vrot.slane %v2619, 2
    %v2621 = vmax.f32 %v2619, %v2620
    %v2622 = vrot.slane %v2621, 1
    %v2623 = vmax.f32 %v2621, %v2622
    %v2640 = vsel %vm687, %v2545, %v2533
    %v2641 = vsel %vm689, %v2557, %v2640
    %v2642 = vsel %vm691, %v2569, %v2641
    %v2643 = vsel %vm693, %v2581, %v2642
    %v2644 = vsel %vm695, %v2593, %v2643
    %v2645 = vsel %vm697, %v2605, %v2644
    %v2646 = vsel %vm699, %v2617, %v2645
    %v2647 = vsel %vm687, %v2551, %v2539
    %v2648 = vsel %vm689, %v2563, %v2647
    %v2649 = vsel %vm691, %v2575, %v2648
    %v2650 = vsel %vm693, %v2587, %v2649
    %v2651 = vsel %vm695, %v2599, %v2650
    %v2652 = vsel %vm697, %v2611, %v2651
    %v2653 = vsel %vm699, %v2623, %v2652
    %2656 = vst [vmem:[#allocation10] sm:$0xff] %v2646
    %2657 = vst [vmem:[#allocation10 + $0x8] sm:$0xff] %v2653
    // Predicated region
    $region66: #{tpu_custom_call.1} parent=1 // pred_check
      _
    $region67: #{tpu_custom_call.1} parent=1 // pred_check_branch
      %2659 = sbr.rel (0) target = $region69
    $region68: #{tpu_custom_call.1} parent=1 // pred_region
      %s2661 = ssub.s32 256, 256
      %2662 = vsyncadd [#allocation4], %s2661
      %s2664 = sshll.u32 [#allocation10], 4
      %s2665 = int_to_ptr.vmem [resolvable:$true] %s2664
      %2667 = dma.vmem_to_hbm [thread:$0]  %s2665, 256, %s12, [#allocation4]
    $region69: #{tpu_custom_call.1} parent=1 // pred_fallthru
      _
    // Predicated region
    $region70: #{tpu_custom_call.1} parent=1 // pred_check
      _
    $region71: #{tpu_custom_call.1} parent=1 // pred_check_branch
      %2669 = sbr.rel (0) target = $region73
    $region72: #{tpu_custom_call.1} parent=1 // pred_region
      %2670 = dma.done [#allocation4], 256
    $region73: #{tpu_custom_call.1} parent=1 // pred_fallthru
      _
    %2671 = vsyncpa [#allocation3], 1
    %2672 = vsyncpa [#allocation6], 1
    %2673 = vsyncpa [#allocation9], 1
    %2674 = vsyncpa [#allocation4], 1

</llo_original>
